<compile_context>
chip_gen: v5e
topology: v5e:2x2
jax: 0.10.0
libtpu: 0.0.40
codegen_flags: <defaults>
</compile_context>

<pallas_src>
import functools

import numpy as np
import jax
import jax.numpy as jnp
from jax import lax
from jax.experimental import pallas as pl
from jax.experimental.pallas import tpu as pltpu


# ----------------------------------------------------------------------------- #
# In-kernel helper: zero-padded row shift (out[h] = x[h + delta], 0 outside)
# ----------------------------------------------------------------------------- #
def _shift_rows(x, delta):
    """x: (H, W*C).  Returns y with y[h] = x[h+delta] if 0 <= h+delta < H else 0."""
    if delta == 0:
        return x
    H = x.shape[0]
    shift = (-delta) % H                      # non-negative static shift
    rolled = pltpu.roll(x, shift=shift, axis=0)          # rolled[h] = x[(h+delta) % H]
    rows = lax.broadcasted_iota(jnp.int32, x.shape, 0) + delta
    return jnp.where((rows >= 0) & (rows < H), rolled, 0.0)


# ----------------------------------------------------------------------------- #
# Fully-fused ResidualBlock kernel (one image per grid step)
# ----------------------------------------------------------------------------- #
def _residual_block_kernel(x_ref, *rest, H, W, C, has_down):
    """Refs per grid step:
         x_ref : (H, W*Cin) f32  input image (lane layout: [w*Cin + ci])
         per conv layer: bband (3, W*Cin_l, W*C) bf16, scale_t/shift_t (1, W*C) f32
         o_ref : (H, W*C) f32 output image (lane dense)
    """
    if has_down:
        (bd_ref, sd_ref, td_ref,
         b1_ref, s1_ref, t1_ref,
         b2_ref, s2_ref, t2_ref, o_ref) = rest
    else:
        (b1_ref, s1_ref, t1_ref,
         b2_ref, s2_ref, t2_ref, o_ref) = rest

    def conv3x3_bn(x_f32, b_ref, s_ref, t_ref, relu):
        # 3 banded MXU matmuls (one per vertical tap); kx + W-padding live in the band.
        acc = None
        for ky in range(3):
            lhs = _shift_rows(x_f32, ky - 1).astype(jnp.bfloat16)
            p = jnp.dot(lhs, b_ref[ky], preferred_element_type=jnp.float32)
            acc = p if acc is None else acc + p
        y = acc * s_ref[...] + t_ref[...]                 # folded conv-bias + BN affine
        return jnp.maximum(y, 0.0) if relu else y

    x = x_ref[...].astype(jnp.float32)                    # (H, W*Cin)
    if has_down:
        x = conv3x3_bn(x, bd_ref, sd_ref, td_ref, relu=False)   # x' = downSample(x)
    h = conv3x3_bn(x, b1_ref, s1_ref, t1_ref, relu=True)        # relu(conv1(x'))
    r = conv3x3_bn(h, b2_ref, s2_ref, t2_ref, relu=False)       # conv2(h)
    o_ref[...] = (x + r).astype(o_ref.dtype)                    # fused skip add


# ----------------------------------------------------------------------------- #
# ResidualBlock forward (matches the PyTorch module semantics, inference BN)
# ----------------------------------------------------------------------------- #
def residual_block_forward(x_nchw, params):
    """out = x' + conv2(relu(conv1(x'))),  x' = downSample(x) if present else x."""
    N, Cin, H, W = x_nchw.shape
    x = jnp.transpose(x_nchw, (0, 2, 3, 1)).reshape(N, H, W * Cin)   # NCHW -> (N,H,W*C)

    has_down = params["down"] is not None
    assert params["res1"]["bband"].shape[2] % W == 0
    C = params["res1"]["bband"].shape[2] // W                        # out channels
    if has_down:
        assert params["down"]["bband"].shape[1] == W * Cin
    else:
        assert Cin == C

    kern = functools.partial(_residual_block_kernel, H=H, W=W, C=C, has_down=has_down)

    args = [x]
    in_specs = [pl.BlockSpec((None, H, W * Cin), lambda n: (n, 0, 0))]
    layer_names = (["down"] if has_down else []) + ["res1", "res2"]
    for name in layer_names:
        p = params[name]
        args += [p["bband"], p["scale_t"], p["shift_t"]]
        in_specs += [pl.BlockSpec(p["bband"].shape, lambda n: (0, 0, 0)),    # banded W (bf16)
                     pl.BlockSpec(p["scale_t"].shape, lambda n: (0, 0)),     # tiled BN scale
                     pl.BlockSpec(p["shift_t"].shape, lambda n: (0, 0))]     # tiled BN shift

    out = pl.pallas_call(
        kern,
        out_shape=jax.ShapeDtypeStruct((N, H, W * C), jnp.float32),
        grid=(N,),
        in_specs=in_specs,
        out_specs=pl.BlockSpec((None, H, W * C), lambda n: (n, 0, 0)),
        compiler_params=pltpu.CompilerParams(dimension_semantics=("parallel",)),
    )(*args)
    return jnp.transpose(out.reshape(N, H, W, C), (0, 3, 1, 2))      # -> NCHW


# ----------------------------------------------------------------------------- #
# Wrapper-side weight prep: banded conv-as-matmul matrices + folded BN affine
# ----------------------------------------------------------------------------- #
def _banded_weights(w_hwio, Wd):
    """HWIO (3,3,Cin,Cout) -> (3, Wd*Cin, Wd*Cout) banded B_ky so that for each row h:
         conv_out[h, :] = sum_ky  x_rowshift(ky-1)[h, :] @ B_ky
       with the kx taps and the W-border zero padding folded into the band structure."""
    kh, kw, cin, cout = w_hwio.shape
    b = jnp.zeros((kh, Wd, cin, Wd, cout), w_hwio.dtype)
    for wo in range(Wd):
        for kx in range(kw):
            wi = wo + kx - 1
            if 0 <= wi < Wd:
                b = b.at[:, wi, :, wo, :].set(w_hwio[:, kx, :, :])
    return b.reshape(kh, Wd * cin, Wd * cout)


def _init_conv_bn_params(key, cin, cout, Wd):
    kw_, kb, kg, kbe, km, kv = jax.random.split(key, 6)
    w = jax.random.normal(kw_, (3, 3, cin, cout), jnp.float32) / np.sqrt(9 * cin)
    bias = 0.1 * jax.random.normal(kb, (cout,), jnp.float32)
    gamma = 1.0 + 0.1 * jax.random.normal(kg, (cout,), jnp.float32)
    beta = 0.1 * jax.random.normal(kbe, (cout,), jnp.float32)
    mean = 0.1 * jax.random.normal(km, (cout,), jnp.float32)
    var = 0.5 + jax.random.uniform(kv, (cout,), dtype=jnp.float32)
    scale = gamma / jnp.sqrt(var + 1e-5)                       # folded inference-mode BN
    shift = beta + (bias - mean) * scale
    return dict(
        w=w,                                                   # HWIO f32 (reference path)
        bband=_banded_weights(w, Wd).astype(jnp.bfloat16),     # kernel matmul operand
        scale_t=jnp.tile(scale.reshape(1, cout), (1, Wd)),     # (1, W*Cout) lane-dense
        shift_t=jnp.tile(shift.reshape(1, cout), (1, Wd)),
        scale=scale, shift=shift)


def init_residual_block_params(key, in_c, out_c, Wd):
    k0, k1, k2 = jax.random.split(key, 3)
    down = _init_conv_bn_params(k0, in_c, out_c, Wd) if in_c != out_c else None
    return dict(down=down,
                res1=_init_conv_bn_params(k1, out_c, out_c, Wd),
                res2=_init_conv_bn_params(k2, out_c, out_c, Wd))


# ----------------------------------------------------------------------------- #
# Pure-JAX reference (same folded-BN math, lax conv) for validation
# ----------------------------------------------------------------------------- #
def _ref_forward(x_nchw, params):
    dn = ("NHWC", "HWIO", "NHWC")

    def block(x, p, relu):
        y = lax.conv_general_dilated(x, p["w"], (1, 1), ((1, 1), (1, 1)),
                                     dimension_numbers=dn)
        y = y * p["scale"].reshape(1, 1, 1, -1) + p["shift"].reshape(1, 1, 1, -1)
        return jnp.maximum(y, 0.0) if relu else y

    x = jnp.transpose(x_nchw, (0, 2, 3, 1))
    if params["down"] is not None:
        x = block(x, params["down"], False)
    r = block(x, params["res1"], True)
    r = block(r, params["res2"], False)
    return jnp.transpose(x + r, (0, 3, 1, 2))


# ----------------------------------------------------------------------------- #
if __name__ == "__main__":
    key = jax.random.PRNGKey(0)
    k_x, k_p = jax.random.split(key)

    # small shapes: batch=2, in_c=4, out_c=32 (hidden), spatial 16x16 (downSample path)
    N, in_c, H, W = 2, 4, 16, 16
    out_c = 32

    x = jax.random.normal(k_x, (N, in_c, H, W), jnp.float32)         # NCHW like PyTorch
    params = init_residual_block_params(k_p, in_c, out_c, W)

    out = jax.block_until_ready(jax.jit(residual_block_forward)(x, params))
    assert out.shape == (N, out_c, H, W), out.shape

    ref = jax.block_until_ready(jax.jit(_ref_forward)(x, params))
    np.testing.assert_allclose(np.asarray(out), np.asarray(ref), rtol=5e-2, atol=5e-2)

    # identity-skip variant (in_c == out_c -> no downSample) exercised as well
    x2 = jax.random.normal(jax.random.PRNGKey(1), (N, out_c, H, W), jnp.float32)
    params2 = init_residual_block_params(jax.random.PRNGKey(2), out_c, out_c, W)
    out2 = jax.block_until_ready(jax.jit(residual_block_forward)(x2, params2))
    ref2 = jax.block_until_ready(jax.jit(_ref_forward)(x2, params2))
    np.testing.assert_allclose(np.asarray(out2), np.asarray(ref2), rtol=5e-2, atol=5e-2)

    print("KERNEL_OK")
</pallas_src>

<mosaic_0001>
module attributes {stable_mosaic.version = 11 : i64} {
  func.func @_residual_block_kernel(%arg0: i32, %arg1: memref<1x16x64xf32, #tpu.memory_space<vmem>>, %arg2: memref<3x64x512xbf16, #tpu.memory_space<vmem>>, %arg3: memref<1x512xf32, #tpu.memory_space<vmem>>, %arg4: memref<1x512xf32, #tpu.memory_space<vmem>>, %arg5: memref<3x512x512xbf16, #tpu.memory_space<vmem>>, %arg6: memref<1x512xf32, #tpu.memory_space<vmem>>, %arg7: memref<1x512xf32, #tpu.memory_space<vmem>>, %arg8: memref<3x512x512xbf16, #tpu.memory_space<vmem>>, %arg9: memref<1x512xf32, #tpu.memory_space<vmem>>, %arg10: memref<1x512xf32, #tpu.memory_space<vmem>>, %arg11: memref<1x16x512xf32, #tpu.memory_space<vmem>>) attributes {dimension_semantics = [#tpu.dimension_semantics<parallel>], iteration_bounds = array<i64: 2>, scalar_prefetch = 0 : i64, scratch_operands = 0 : i64, tpu.core_type = #tpu.core_type<tc>, window_params = [{transform_indices = @transform_0, window_bounds = array<i64: 1, 16, 64>}, {pipeline_mode = #tpu.pipeline_mode<synchronous>, transform_indices = @transform_1, window_bounds = array<i64: 3, 64, 512>}, {pipeline_mode = #tpu.pipeline_mode<synchronous>, transform_indices = @transform_2, window_bounds = array<i64: 1, 512>}, {pipeline_mode = #tpu.pipeline_mode<synchronous>, transform_indices = @transform_3, window_bounds = array<i64: 1, 512>}, {pipeline_mode = #tpu.pipeline_mode<synchronous>, transform_indices = @transform_4, window_bounds = array<i64: 3, 512, 512>}, {pipeline_mode = #tpu.pipeline_mode<synchronous>, transform_indices = @transform_5, window_bounds = array<i64: 1, 512>}, {pipeline_mode = #tpu.pipeline_mode<synchronous>, transform_indices = @transform_6, window_bounds = array<i64: 1, 512>}, {pipeline_mode = #tpu.pipeline_mode<synchronous>, transform_indices = @transform_7, window_bounds = array<i64: 3, 512, 512>}, {pipeline_mode = #tpu.pipeline_mode<synchronous>, transform_indices = @transform_8, window_bounds = array<i64: 1, 512>}, {pipeline_mode = #tpu.pipeline_mode<synchronous>, transform_indices = @transform_9, window_bounds = array<i64: 1, 512>}, {transform_indices = @transform_10, window_bounds = array<i64: 1, 16, 512>}]} {
    %c0 = arith.constant 0 : index
    %c0_0 = arith.constant 0 : index
    %c0_1 = arith.constant 0 : index
    %0 = vector.load %arg1[%c0, %c0_0, %c0_1] : memref<1x16x64xf32, #tpu.memory_space<vmem>>, vector<1x16x64xf32>
    %1 = vector.shape_cast %0 : vector<1x16x64xf32> to vector<16x64xf32>
    %c1_i32 = arith.constant 1 : i32
    %2 = tpu.dynamic_rotate %1 by %c1_i32 dim 0 : vector<16x64xf32>, i32 -> vector<16x64xf32>
    %3 = tpu.iota {dimensions = array<i32: 0>} : vector<16x64xi32>
    %c-1_i32 = arith.constant -1 : i32
    %4 = vector.broadcast %c-1_i32 : i32 to vector<16x64xi32>
    %5 = arith.addi %3, %4 : vector<16x64xi32>
    %c0_i32 = arith.constant 0 : i32
    %6 = vector.broadcast %c0_i32 : i32 to vector<16x64xi32>
    %7 = arith.cmpi sge, %5, %6 : vector<16x64xi32>
    %c16_i32 = arith.constant 16 : i32
    %8 = vector.broadcast %c16_i32 : i32 to vector<16x64xi32>
    %9 = arith.cmpi slt, %5, %8 : vector<16x64xi32>
    %10 = arith.andi %7, %9 : vector<16x64xi1>
    %cst = arith.constant 0.000000e+00 : f32
    %11 = vector.broadcast %cst : f32 to vector<16x64xf32>
    %12 = arith.select %10, %2, %11 : vector<16x64xi1>, vector<16x64xf32>
    %13 = arith.truncf %12 : vector<16x64xf32> to vector<16x64xbf16>
    %c0_2 = arith.constant 0 : index
    %c0_3 = arith.constant 0 : index
    %c0_4 = arith.constant 0 : index
    %14 = vector.load %arg2[%c0_2, %c0_3, %c0_4] : memref<3x64x512xbf16, #tpu.memory_space<vmem>>, vector<1x64x512xbf16>
    %15 = vector.shape_cast %14 : vector<1x64x512xbf16> to vector<64x512xbf16>
    %cst_5 = arith.constant dense<0.000000e+00> : vector<16x512xf32>
    %16 = tpu.matmul %13, %15, %cst_5 {dimension_numbers = #tpu.dot_dimension_numbers<[1], [0], [0], [1], [0, 0, 1, 1], [], []>} : vector<16x64xbf16>, vector<64x512xbf16>, vector<16x512xf32> -> vector<16x512xf32>
    %17 = arith.truncf %1 : vector<16x64xf32> to vector<16x64xbf16>
    %c1 = arith.constant 1 : index
    %c0_6 = arith.constant 0 : index
    %c0_7 = arith.constant 0 : index
    %18 = vector.load %arg2[%c1, %c0_6, %c0_7] : memref<3x64x512xbf16, #tpu.memory_space<vmem>>, vector<1x64x512xbf16>
    %19 = vector.shape_cast %18 : vector<1x64x512xbf16> to vector<64x512xbf16>
    %cst_8 = arith.constant dense<0.000000e+00> : vector<16x512xf32>
    %20 = tpu.matmul %17, %19, %cst_8 {dimension_numbers = #tpu.dot_dimension_numbers<[1], [0], [0], [1], [0, 0, 1, 1], [], []>} : vector<16x64xbf16>, vector<64x512xbf16>, vector<16x512xf32> -> vector<16x512xf32>
    %21 = arith.addf %16, %20 : vector<16x512xf32>
    %c15_i32 = arith.constant 15 : i32
    %22 = tpu.dynamic_rotate %1 by %c15_i32 dim 0 : vector<16x64xf32>, i32 -> vector<16x64xf32>
    %23 = tpu.iota {dimensions = array<i32: 0>} : vector<16x64xi32>
    %c1_i32_9 = arith.constant 1 : i32
    %24 = vector.broadcast %c1_i32_9 : i32 to vector<16x64xi32>
    %25 = arith.addi %23, %24 : vector<16x64xi32>
    %c0_i32_10 = arith.constant 0 : i32
    %26 = vector.broadcast %c0_i32_10 : i32 to vector<16x64xi32>
    %27 = arith.cmpi sge, %25, %26 : vector<16x64xi32>
    %c16_i32_11 = arith.constant 16 : i32
    %28 = vector.broadcast %c16_i32_11 : i32 to vector<16x64xi32>
    %29 = arith.cmpi slt, %25, %28 : vector<16x64xi32>
    %30 = arith.andi %27, %29 : vector<16x64xi1>
    %cst_12 = arith.constant 0.000000e+00 : f32
    %31 = vector.broadcast %cst_12 : f32 to vector<16x64xf32>
    %32 = arith.select %30, %22, %31 : vector<16x64xi1>, vector<16x64xf32>
    %33 = arith.truncf %32 : vector<16x64xf32> to vector<16x64xbf16>
    %c2 = arith.constant 2 : index
    %c0_13 = arith.constant 0 : index
    %c0_14 = arith.constant 0 : index
    %34 = vector.load %arg2[%c2, %c0_13, %c0_14] : memref<3x64x512xbf16, #tpu.memory_space<vmem>>, vector<1x64x512xbf16>
    %35 = vector.shape_cast %34 : vector<1x64x512xbf16> to vector<64x512xbf16>
    %cst_15 = arith.constant dense<0.000000e+00> : vector<16x512xf32>
    %36 = tpu.matmul %33, %35, %cst_15 {dimension_numbers = #tpu.dot_dimension_numbers<[1], [0], [0], [1], [0, 0, 1, 1], [], []>} : vector<16x64xbf16>, vector<64x512xbf16>, vector<16x512xf32> -> vector<16x512xf32>
    %37 = arith.addf %21, %36 : vector<16x512xf32>
    %c0_16 = arith.constant 0 : index
    %c0_17 = arith.constant 0 : index
    %38 = vector.load %arg3[%c0_16, %c0_17] : memref<1x512xf32, #tpu.memory_space<vmem>>, vector<1x512xf32>
    %39 = vector.broadcast %38 : vector<1x512xf32> to vector<16x512xf32>
    %40 = arith.mulf %37, %39 : vector<16x512xf32>
    %c0_18 = arith.constant 0 : index
    %c0_19 = arith.constant 0 : index
    %41 = vector.load %arg4[%c0_18, %c0_19] : memref<1x512xf32, #tpu.memory_space<vmem>>, vector<1x512xf32>
    %42 = vector.broadcast %41 : vector<1x512xf32> to vector<16x512xf32>
    %43 = arith.addf %40, %42 : vector<16x512xf32>
    %c1_i32_20 = arith.constant 1 : i32
    %44 = tpu.dynamic_rotate %43 by %c1_i32_20 dim 0 : vector<16x512xf32>, i32 -> vector<16x512xf32>
    %45 = tpu.iota {dimensions = array<i32: 0>} : vector<16x512xi32>
    %c-1_i32_21 = arith.constant -1 : i32
    %46 = vector.broadcast %c-1_i32_21 : i32 to vector<16x512xi32>
    %47 = arith.addi %45, %46 : vector<16x512xi32>
    %c0_i32_22 = arith.constant 0 : i32
    %48 = vector.broadcast %c0_i32_22 : i32 to vector<16x512xi32>
    %49 = arith.cmpi sge, %47, %48 : vector<16x512xi32>
    %c16_i32_23 = arith.constant 16 : i32
    %50 = vector.broadcast %c16_i32_23 : i32 to vector<16x512xi32>
    %51 = arith.cmpi slt, %47, %50 : vector<16x512xi32>
    %52 = arith.andi %49, %51 : vector<16x512xi1>
    %cst_24 = arith.constant 0.000000e+00 : f32
    %53 = vector.broadcast %cst_24 : f32 to vector<16x512xf32>
    %54 = arith.select %52, %44, %53 : vector<16x512xi1>, vector<16x512xf32>
    %55 = arith.truncf %54 : vector<16x512xf32> to vector<16x512xbf16>
    %c0_25 = arith.constant 0 : index
    %c0_26 = arith.constant 0 : index
    %c0_27 = arith.constant 0 : index
    %56 = vector.load %arg5[%c0_25, %c0_26, %c0_27] : memref<3x512x512xbf16, #tpu.memory_space<vmem>>, vector<1x512x512xbf16>
    %57 = vector.shape_cast %56 : vector<1x512x512xbf16> to vector<512x512xbf16>
    %cst_28 = arith.constant dense<0.000000e+00> : vector<16x512xf32>
    %58 = tpu.matmul %55, %57, %cst_28 {dimension_numbers = #tpu.dot_dimension_numbers<[1], [0], [0], [1], [0, 0, 1, 1], [], []>} : vector<16x512xbf16>, vector<512x512xbf16>, vector<16x512xf32> -> vector<16x512xf32>
    %59 = arith.truncf %43 : vector<16x512xf32> to vector<16x512xbf16>
    %c1_29 = arith.constant 1 : index
    %c0_30 = arith.constant 0 : index
    %c0_31 = arith.constant 0 : index
    %60 = vector.load %arg5[%c1_29, %c0_30, %c0_31] : memref<3x512x512xbf16, #tpu.memory_space<vmem>>, vector<1x512x512xbf16>
    %61 = vector.shape_cast %60 : vector<1x512x512xbf16> to vector<512x512xbf16>
    %cst_32 = arith.constant dense<0.000000e+00> : vector<16x512xf32>
    %62 = tpu.matmul %59, %61, %cst_32 {dimension_numbers = #tpu.dot_dimension_numbers<[1], [0], [0], [1], [0, 0, 1, 1], [], []>} : vector<16x512xbf16>, vector<512x512xbf16>, vector<16x512xf32> -> vector<16x512xf32>
    %63 = arith.addf %58, %62 : vector<16x512xf32>
    %c15_i32_33 = arith.constant 15 : i32
    %64 = tpu.dynamic_rotate %43 by %c15_i32_33 dim 0 : vector<16x512xf32>, i32 -> vector<16x512xf32>
    %65 = tpu.iota {dimensions = array<i32: 0>} : vector<16x512xi32>
    %c1_i32_34 = arith.constant 1 : i32
    %66 = vector.broadcast %c1_i32_34 : i32 to vector<16x512xi32>
    %67 = arith.addi %65, %66 : vector<16x512xi32>
    %c0_i32_35 = arith.constant 0 : i32
    %68 = vector.broadcast %c0_i32_35 : i32 to vector<16x512xi32>
    %69 = arith.cmpi sge, %67, %68 : vector<16x512xi32>
    %c16_i32_36 = arith.constant 16 : i32
    %70 = vector.broadcast %c16_i32_36 : i32 to vector<16x512xi32>
    %71 = arith.cmpi slt, %67, %70 : vector<16x512xi32>
    %72 = arith.andi %69, %71 : vector<16x512xi1>
    %cst_37 = arith.constant 0.000000e+00 : f32
    %73 = vector.broadcast %cst_37 : f32 to vector<16x512xf32>
    %74 = arith.select %72, %64, %73 : vector<16x512xi1>, vector<16x512xf32>
    %75 = arith.truncf %74 : vector<16x512xf32> to vector<16x512xbf16>
    %c2_38 = arith.constant 2 : index
    %c0_39 = arith.constant 0 : index
    %c0_40 = arith.constant 0 : index
    %76 = vector.load %arg5[%c2_38, %c0_39, %c0_40] : memref<3x512x512xbf16, #tpu.memory_space<vmem>>, vector<1x512x512xbf16>
    %77 = vector.shape_cast %76 : vector<1x512x512xbf16> to vector<512x512xbf16>
    %cst_41 = arith.constant dense<0.000000e+00> : vector<16x512xf32>
    %78 = tpu.matmul %75, %77, %cst_41 {dimension_numbers = #tpu.dot_dimension_numbers<[1], [0], [0], [1], [0, 0, 1, 1], [], []>} : vector<16x512xbf16>, vector<512x512xbf16>, vector<16x512xf32> -> vector<16x512xf32>
    %79 = arith.addf %63, %78 : vector<16x512xf32>
    %c0_42 = arith.constant 0 : index
    %c0_43 = arith.constant 0 : index
    %80 = vector.load %arg6[%c0_42, %c0_43] : memref<1x512xf32, #tpu.memory_space<vmem>>, vector<1x512xf32>
    %81 = vector.broadcast %80 : vector<1x512xf32> to vector<16x512xf32>
    %82 = arith.mulf %79, %81 : vector<16x512xf32>
    %c0_44 = arith.constant 0 : index
    %c0_45 = arith.constant 0 : index
    %83 = vector.load %arg7[%c0_44, %c0_45] : memref<1x512xf32, #tpu.memory_space<vmem>>, vector<1x512xf32>
    %84 = vector.broadcast %83 : vector<1x512xf32> to vector<16x512xf32>
    %85 = arith.addf %82, %84 : vector<16x512xf32>
    %cst_46 = arith.constant 0.000000e+00 : f32
    %86 = vector.broadcast %cst_46 : f32 to vector<16x512xf32>
    %87 = arith.maximumf %85, %86 : vector<16x512xf32>
    %c1_i32_47 = arith.constant 1 : i32
    %88 = tpu.dynamic_rotate %87 by %c1_i32_47 dim 0 : vector<16x512xf32>, i32 -> vector<16x512xf32>
    %89 = tpu.iota {dimensions = array<i32: 0>} : vector<16x512xi32>
    %c-1_i32_48 = arith.constant -1 : i32
    %90 = vector.broadcast %c-1_i32_48 : i32 to vector<16x512xi32>
    %91 = arith.addi %89, %90 : vector<16x512xi32>
    %c0_i32_49 = arith.constant 0 : i32
    %92 = vector.broadcast %c0_i32_49 : i32 to vector<16x512xi32>
    %93 = arith.cmpi sge, %91, %92 : vector<16x512xi32>
    %c16_i32_50 = arith.constant 16 : i32
    %94 = vector.broadcast %c16_i32_50 : i32 to vector<16x512xi32>
    %95 = arith.cmpi slt, %91, %94 : vector<16x512xi32>
    %96 = arith.andi %93, %95 : vector<16x512xi1>
    %cst_51 = arith.constant 0.000000e+00 : f32
    %97 = vector.broadcast %cst_51 : f32 to vector<16x512xf32>
    %98 = arith.select %96, %88, %97 : vector<16x512xi1>, vector<16x512xf32>
    %99 = arith.truncf %98 : vector<16x512xf32> to vector<16x512xbf16>
    %c0_52 = arith.constant 0 : index
    %c0_53 = arith.constant 0 : index
    %c0_54 = arith.constant 0 : index
    %100 = vector.load %arg8[%c0_52, %c0_53, %c0_54] : memref<3x512x512xbf16, #tpu.memory_space<vmem>>, vector<1x512x512xbf16>
    %101 = vector.shape_cast %100 : vector<1x512x512xbf16> to vector<512x512xbf16>
    %cst_55 = arith.constant dense<0.000000e+00> : vector<16x512xf32>
    %102 = tpu.matmul %99, %101, %cst_55 {dimension_numbers = #tpu.dot_dimension_numbers<[1], [0], [0], [1], [0, 0, 1, 1], [], []>} : vector<16x512xbf16>, vector<512x512xbf16>, vector<16x512xf32> -> vector<16x512xf32>
    %103 = arith.truncf %87 : vector<16x512xf32> to vector<16x512xbf16>
    %c1_56 = arith.constant 1 : index
    %c0_57 = arith.constant 0 : index
    %c0_58 = arith.constant 0 : index
    %104 = vector.load %arg8[%c1_56, %c0_57, %c0_58] : memref<3x512x512xbf16, #tpu.memory_space<vmem>>, vector<1x512x512xbf16>
    %105 = vector.shape_cast %104 : vector<1x512x512xbf16> to vector<512x512xbf16>
    %cst_59 = arith.constant dense<0.000000e+00> : vector<16x512xf32>
    %106 = tpu.matmul %103, %105, %cst_59 {dimension_numbers = #tpu.dot_dimension_numbers<[1], [0], [0], [1], [0, 0, 1, 1], [], []>} : vector<16x512xbf16>, vector<512x512xbf16>, vector<16x512xf32> -> vector<16x512xf32>
    %107 = arith.addf %102, %106 : vector<16x512xf32>
    %c15_i32_60 = arith.constant 15 : i32
    %108 = tpu.dynamic_rotate %87 by %c15_i32_60 dim 0 : vector<16x512xf32>, i32 -> vector<16x512xf32>
    %109 = tpu.iota {dimensions = array<i32: 0>} : vector<16x512xi32>
    %c1_i32_61 = arith.constant 1 : i32
    %110 = vector.broadcast %c1_i32_61 : i32 to vector<16x512xi32>
    %111 = arith.addi %109, %110 : vector<16x512xi32>
    %c0_i32_62 = arith.constant 0 : i32
    %112 = vector.broadcast %c0_i32_62 : i32 to vector<16x512xi32>
    %113 = arith.cmpi sge, %111, %112 : vector<16x512xi32>
    %c16_i32_63 = arith.constant 16 : i32
    %114 = vector.broadcast %c16_i32_63 : i32 to vector<16x512xi32>
    %115 = arith.cmpi slt, %111, %114 : vector<16x512xi32>
    %116 = arith.andi %113, %115 : vector<16x512xi1>
    %cst_64 = arith.constant 0.000000e+00 : f32
    %117 = vector.broadcast %cst_64 : f32 to vector<16x512xf32>
    %118 = arith.select %116, %108, %117 : vector<16x512xi1>, vector<16x512xf32>
    %119 = arith.truncf %118 : vector<16x512xf32> to vector<16x512xbf16>
    %c2_65 = arith.constant 2 : index
    %c0_66 = arith.constant 0 : index
    %c0_67 = arith.constant 0 : index
    %120 = vector.load %arg8[%c2_65, %c0_66, %c0_67] : memref<3x512x512xbf16, #tpu.memory_space<vmem>>, vector<1x512x512xbf16>
    %121 = vector.shape_cast %120 : vector<1x512x512xbf16> to vector<512x512xbf16>
    %cst_68 = arith.constant dense<0.000000e+00> : vector<16x512xf32>
    %122 = tpu.matmul %119, %121, %cst_68 {dimension_numbers = #tpu.dot_dimension_numbers<[1], [0], [0], [1], [0, 0, 1, 1], [], []>} : vector<16x512xbf16>, vector<512x512xbf16>, vector<16x512xf32> -> vector<16x512xf32>
    %123 = arith.addf %107, %122 : vector<16x512xf32>
    %c0_69 = arith.constant 0 : index
    %c0_70 = arith.constant 0 : index
    %124 = vector.load %arg9[%c0_69, %c0_70] : memref<1x512xf32, #tpu.memory_space<vmem>>, vector<1x512xf32>
    %125 = vector.broadcast %124 : vector<1x512xf32> to vector<16x512xf32>
    %126 = arith.mulf %123, %125 : vector<16x512xf32>
    %c0_71 = arith.constant 0 : index
    %c0_72 = arith.constant 0 : index
    %127 = vector.load %arg10[%c0_71, %c0_72] : memref<1x512xf32, #tpu.memory_space<vmem>>, vector<1x512xf32>
    %128 = vector.broadcast %127 : vector<1x512xf32> to vector<16x512xf32>
    %129 = arith.addf %126, %128 : vector<16x512xf32>
    %130 = arith.addf %43, %129 : vector<16x512xf32>
    %c0_73 = arith.constant 0 : index
    %c0_74 = arith.constant 0 : index
    %c0_75 = arith.constant 0 : index
    %131 = vector.load %arg11[%c0_73, %c0_74, %c0_75] : memref<1x16x512xf32, #tpu.memory_space<vmem>>, vector<1x16x512xf32>
    %132 = vector.shape_cast %131 : vector<1x16x512xf32> to vector<16x512xf32>
    %133 = vector.shape_cast %130 : vector<16x512xf32> to vector<1x16x512xf32>
    tpu.vector_store %arg11[%c0_73, %c0_74, %c0_75], %133 {strides = array<i32>} : memref<1x16x512xf32, #tpu.memory_space<vmem>>, vector<1x16x512xf32>,
    return
  }
  func.func @transform_0(%arg0: i32) -> (i32, i32, i32) {
    %c0_i32 = arith.constant 0 : i32
    %c0_i32_0 = arith.constant 0 : i32
    %c0_i32_1 = arith.constant 0 : i32
    return %arg0, %c0_i32, %c0_i32_0 : i32, i32, i32
  }
  func.func @transform_1(%arg0: i32) -> (i32, i32, i32) {
    %c0_i32 = arith.constant 0 : i32
    %c0_i32_0 = arith.constant 0 : i32
    %c0_i32_1 = arith.constant 0 : i32
    %c0_i32_2 = arith.constant 0 : i32
    return %c0_i32, %c0_i32_0, %c0_i32_1 : i32, i32, i32
  }
  func.func @transform_2(%arg0: i32) -> (i32, i32) {
    %c0_i32 = arith.constant 0 : i32
    %c0_i32_0 = arith.constant 0 : i32
    %c0_i32_1 = arith.constant 0 : i32
    return %c0_i32, %c0_i32_0 : i32, i32
  }
  func.func @transform_3(%arg0: i32) -> (i32, i32) {
    %c0_i32 = arith.constant 0 : i32
    %c0_i32_0 = arith.constant 0 : i32
    %c0_i32_1 = arith.constant 0 : i32
    return %c0_i32, %c0_i32_0 : i32, i32
  }
  func.func @transform_4(%arg0: i32) -> (i32, i32, i32) {
    %c0_i32 = arith.constant 0 : i32
    %c0_i32_0 = arith.constant 0 : i32
    %c0_i32_1 = arith.constant 0 : i32
    %c0_i32_2 = arith.constant 0 : i32
    return %c0_i32, %c0_i32_0, %c0_i32_1 : i32, i32, i32
  }
  func.func @transform_5(%arg0: i32) -> (i32, i32) {
    %c0_i32 = arith.constant 0 : i32
    %c0_i32_0 = arith.constant 0 : i32
    %c0_i32_1 = arith.constant 0 : i32
    return %c0_i32, %c0_i32_0 : i32, i32
  }
  func.func @transform_6(%arg0: i32) -> (i32, i32) {
    %c0_i32 = arith.constant 0 : i32
    %c0_i32_0 = arith.constant 0 : i32
    %c0_i32_1 = arith.constant 0 : i32
    return %c0_i32, %c0_i32_0 : i32, i32
  }
  func.func @transform_7(%arg0: i32) -> (i32, i32, i32) {
    %c0_i32 = arith.constant 0 : i32
    %c0_i32_0 = arith.constant 0 : i32
    %c0_i32_1 = arith.constant 0 : i32
    %c0_i32_2 = arith.constant 0 : i32
    return %c0_i32, %c0_i32_0, %c0_i32_1 : i32, i32, i32
  }
  func.func @transform_8(%arg0: i32) -> (i32, i32) {
    %c0_i32 = arith.constant 0 : i32
    %c0_i32_0 = arith.constant 0 : i32
    %c0_i32_1 = arith.constant 0 : i32
    return %c0_i32, %c0_i32_0 : i32, i32
  }
  func.func @transform_9(%arg0: i32) -> (i32, i32) {
    %c0_i32 = arith.constant 0 : i32
    %c0_i32_0 = arith.constant 0 : i32
    %c0_i32_1 = arith.constant 0 : i32
    return %c0_i32, %c0_i32_0 : i32, i32
  }
  func.func @transform_10(%arg0: i32) -> (i32, i32, i32) {
    %c0_i32 = arith.constant 0 : i32
    %c0_i32_0 = arith.constant 0 : i32
    %c0_i32_1 = arith.constant 0 : i32
    return %arg0, %c0_i32, %c0_i32_0 : i32, i32, i32
  }
}

</mosaic_0001>

<llo_original>
// kernel: residual_block_forward.1
$region0: #{residual_block_forward.1}
  #allocation0 [shape = 'u32[]', space=smem, size = 0x4, offset = 0x4, fixed_abs, tag = 'smem constant byte address 0x4 - core index']
  #allocation1 [shape = 'u32[72,128]{1,0:T(1,128)}', space=vmem, size = 0x9000, scoped, tag = 'internal scratch']
  %s0 = inlined_call_operand.vmem [shape: f32[2,16,64], index: 0, kind: input, shape index: {}]
  %s1 = inlined_call_operand.hbm [shape: bf16[3,64,512], index: 1, kind: input, shape index: {}]
  %s2 = inlined_call_operand.hbm [shape: f32[1,512], index: 2, kind: input, shape index: {}]
  %s3 = inlined_call_operand.hbm [shape: f32[1,512], index: 3, kind: input, shape index: {}]
  %s4 = inlined_call_operand.hbm [shape: bf16[3,512,512], index: 4, kind: input, shape index: {}]
  %s5 = inlined_call_operand.hbm [shape: f32[1,512], index: 5, kind: input, shape index: {}]
  %s6 = inlined_call_operand.hbm [shape: f32[1,512], index: 6, kind: input, shape index: {}]
  %s7 = inlined_call_operand.hbm [shape: bf16[3,512,512], index: 7, kind: input, shape index: {}]
  %s8 = inlined_call_operand.hbm [shape: f32[1,512], index: 8, kind: input, shape index: {}]
  %s9 = inlined_call_operand.hbm [shape: f32[1,512], index: 9, kind: input, shape index: {}]
  %s10 = inlined_call_operand.vmem [shape: f32[2,16,512], index: 10, kind: output, shape index: {}]
  %s11 = sld [smem:[#allocation0]]
  $region109: #{residual_block_forward.1} parent=0
    _
  %s13 = ssub.s32 1, %s11
  %s14 = scalar_select 0, %s13, %s11
  $region1: #{residual_block_forward.1} parent=0
    #allocation2 [shape = 'u8[196608]{0}', space=vmem, size = 0x30000, scoped, tag = 'input window, operand 1, single buffered']
    #allocation3 [shape = 's32[2]{0}', space=sflag, size = 0x8, scoped, tag = 'scoped memory for residual_block_forward.1']
    #allocation4 [shape = 'u8[2048]{0}', space=vmem, size = 0x800, scoped, tag = 'input window, operand 2, single buffered']
    #allocation5 [shape = 's32[1]{0}', space=sflag, size = 0x4, scoped, tag = 'scoped memory for residual_block_forward.1']
    #allocation6 [shape = 'u8[2048]{0}', space=vmem, size = 0x800, scoped, tag = 'input window, operand 3, single buffered']
    #allocation7 [shape = 'u8[1572864]{0}', space=vmem, size = 0x180000, scoped, tag = 'input window, operand 4, single buffered']
    #allocation8 [shape = 's32[1]{0}', space=sflag, size = 0x4, scoped, tag = 'scoped memory for residual_block_forward.1']
    #allocation9 [shape = 'u8[2048]{0}', space=vmem, size = 0x800, scoped, tag = 'input window, operand 5, single buffered']
    #allocation10 [shape = 'u8[2048]{0}', space=vmem, size = 0x800, scoped, tag = 'input window, operand 6, single buffered']
    #allocation11 [shape = 's32[1]{0}', space=sflag, size = 0x4, scoped, tag = 'scoped memory for residual_block_forward.1']
    #allocation12 [shape = 'u8[1572864]{0}', space=vmem, size = 0x180000, scoped, tag = 'input window, operand 7, single buffered']
    #allocation13 [shape = 'u8[2048]{0}', space=vmem, size = 0x800, scoped, tag = 'input window, operand 8, single buffered']
    #allocation14 [shape = 's32[1]{0}', space=sflag, size = 0x4, scoped, tag = 'scoped memory for residual_block_forward.1']
    #allocation15 [shape = 'u8[2048]{0}', space=vmem, size = 0x800, scoped, tag = 'input window, operand 9, single buffered']
    %15 = vsyncpa [#allocation3], 0
    %16 = vsyncpa [#allocation5], 0
    %17 = vsyncpa [#allocation8], 0
    %18 = vsyncpa [#allocation11], 0
    %19 = vsyncpa [#allocation14], 0
    loop: start=0, step=1, limit=4
    $region2: #{residual_block_forward.1} parent=1 // loop_pre_header
      _
    $region3: #{residual_block_forward.1} parent=1 // loop_header
      %s21 = sphi 0, %s25
      %p22 = scmp.ge.s32.totalorder %s21, 4
      %s31 = sphi 0, %s33
      %s34 = sphi 0, %s31
      %s35 = sphi 0, %s34
      %s51 = sphi 0, %s35
      %s55 = sphi 0, %s55
      %s57 = sphi 0, %s55
      %s58 = sphi 0, %s57
      %s72 = sphi 0, %s58
      %s76 = sphi 0, %s76
      %s78 = sphi 0, %s76
      %s79 = sphi 0, %s78
      %s93 = sphi 0, %s79
      %s97 = sphi 0, %s97
      %s99 = sphi 0, %s97
      %s100 = sphi 0, %s99
      %s114 = sphi 0, %s100
      %s118 = sphi 0, %s118
      %s120 = sphi 0, %s118
      %s121 = sphi 0, %s120
      %s135 = sphi 0, %s121
      %s139 = sphi 0, %s139
      %s141 = sphi 0, %s139
      %s142 = sphi 0, %s141
      %s156 = sphi 0, %s142
      %s160 = sphi 0, %s160
      %s162 = sphi 0, %s160
      %s163 = sphi 0, %s162
      %s177 = sphi 0, %s163
      %s181 = sphi 0, %s181
      %s183 = sphi 0, %s181
      %s184 = sphi 0, %s183
      %s198 = sphi 0, %s184
      %s202 = sphi 0, %s202
      %s204 = sphi 0, %s202
      %s205 = sphi 0, %s204
      %s219 = sphi 0, %s205
      %s223 = sphi 0, %s223
      %s225 = sphi 0, %s223
      %s226 = sphi 0, %s225
      %s240 = sphi 0, %s226
      %s246 = sphi 0, %s248
      %s249 = sphi 0, %s246
      %s250 = sphi 0, %s249
      %s266 = sphi 0, %s250
    $region4: #{residual_block_forward.1} parent=1 // loop_header_branch
      %24 = sbr.rel (%p22) target = $region8
    $region5: #{residual_block_forward.1} parent=1 // loop_body
      %s26 = ssub.s32 %s21, 1
      %s27 = ssub.s32 %s21, 2
      %s28 = sadd.s32 %s21, 1
      %s29 = ssub.s32 %s21, %s28
      %p30 = scmp.eq.s32.totalorder %s29, 0
      %s32 = sadd.s32 %s31, 1
      %s33 = scalar_select %p30, %s31, %s32
      %p36 = pneg %p30
      %p37 = scmp.eq.s32.totalorder %s21, 1
      %p38 = por %p36, %p37
      %p39 = scmp.ne.s32.totalorder %s31, %s34
      %p40 = scmp.eq.s32.totalorder %s21, 0
      %p41 = por %p39, %p40
      %p42 = scmp.ne.s32.totalorder %s31, %s34
      %p43 = scmp.eq.s32.totalorder %s26, 1
      %p44 = por %p42, %p43
      %p45 = scmp.ne.s32.totalorder %s34, %s35
      %p46 = scmp.eq.s32.totalorder %s26, 0
      %p47 = por %p45, %p46
      %p48 = scmp.ne.s32.totalorder %s34, %s35
      %p49 = scmp.eq.s32.totalorder %s27, 1
      %p50 = por %p48, %p49
      %p52 = scmp.ne.s32.totalorder %s35, %s51
      %p53 = scmp.eq.s32.totalorder %s27, 0
      %p54 = por %p52, %p53
      %s56 = sadd.s32 %s55, 1
      %p59 = scmp.eq.s32.totalorder %s21, 1
      %p60 = scmp.ne.s32.totalorder %s55, %s57
      %p61 = scmp.eq.s32.totalorder %s21, 0
      %p62 = por %p60, %p61
      %p63 = scmp.ne.s32.totalorder %s55, %s57
      %p64 = scmp.eq.s32.totalorder %s26, 1
      %p65 = por %p63, %p64
      %p66 = scmp.ne.s32.totalorder %s57, %s58
      %p67 = scmp.eq.s32.totalorder %s26, 0
      %p68 = por %p66, %p67
      %p69 = scmp.ne.s32.totalorder %s57, %s58
      %p70 = scmp.eq.s32.totalorder %s27, 1
      %p71 = por %p69, %p70
      %p73 = scmp.ne.s32.totalorder %s58, %s72
      %p74 = scmp.eq.s32.totalorder %s27, 0
      %p75 = por %p73, %p74
      %s77 = sadd.s32 %s76, 1
      %p80 = scmp.eq.s32.totalorder %s21, 1
      %p81 = scmp.ne.s32.totalorder %s76, %s78
      %p82 = scmp.eq.s32.totalorder %s21, 0
      %p83 = por %p81, %p82
      %p84 = scmp.ne.s32.totalorder %s76, %s78
      %p85 = scmp.eq.s32.totalorder %s26, 1
      %p86 = por %p84, %p85
      %p87 = scmp.ne.s32.totalorder %s78, %s79
      %p88 = scmp.eq.s32.totalorder %s26, 0
      %p89 = por %p87, %p88
      %p90 = scmp.ne.s32.totalorder %s78, %s79
      %p91 = scmp.eq.s32.totalorder %s27, 1
      %p92 = por %p90, %p91
      %p94 = scmp.ne.s32.totalorder %s79, %s93
      %p95 = scmp.eq.s32.totalorder %s27, 0
      %p96 = por %p94, %p95
      %s98 = sadd.s32 %s97, 1
      %p101 = scmp.eq.s32.totalorder %s21, 1
      %p102 = scmp.ne.s32.totalorder %s97, %s99
      %p103 = scmp.eq.s32.totalorder %s21, 0
      %p104 = por %p102, %p103
      %p105 = scmp.ne.s32.totalorder %s97, %s99
      %p106 = scmp.eq.s32.totalorder %s26, 1
      %p107 = por %p105, %p106
      %p108 = scmp.ne.s32.totalorder %s99, %s100
      %p109 = scmp.eq.s32.totalorder %s26, 0
      %p110 = por %p108, %p109
      %p111 = scmp.ne.s32.totalorder %s99, %s100
      %p112 = scmp.eq.s32.totalorder %s27, 1
      %p113 = por %p111, %p112
      %p115 = scmp.ne.s32.totalorder %s100, %s114
      %p116 = scmp.eq.s32.totalorder %s27, 0
      %p117 = por %p115, %p116
      %s119 = sadd.s32 %s118, 1
      %p122 = scmp.eq.s32.totalorder %s21, 1
      %p123 = scmp.ne.s32.totalorder %s118, %s120
      %p124 = scmp.eq.s32.totalorder %s21, 0
      %p125 = por %p123, %p124
      %p126 = scmp.ne.s32.totalorder %s118, %s120
      %p127 = scmp.eq.s32.totalorder %s26, 1
      %p128 = por %p126, %p127
      %p129 = scmp.ne.s32.totalorder %s120, %s121
      %p130 = scmp.eq.s32.totalorder %s26, 0
      %p131 = por %p129, %p130
      %p132 = scmp.ne.s32.totalorder %s120, %s121
      %p133 = scmp.eq.s32.totalorder %s27, 1
      %p134 = por %p132, %p133
      %p136 = scmp.ne.s32.totalorder %s121, %s135
      %p137 = scmp.eq.s32.totalorder %s27, 0
      %p138 = por %p136, %p137
      %s140 = sadd.s32 %s139, 1
      %p143 = scmp.eq.s32.totalorder %s21, 1
      %p144 = scmp.ne.s32.totalorder %s139, %s141
      %p145 = scmp.eq.s32.totalorder %s21, 0
      %p146 = por %p144, %p145
      %p147 = scmp.ne.s32.totalorder %s139, %s141
      %p148 = scmp.eq.s32.totalorder %s26, 1
      %p149 = por %p147, %p148
      %p150 = scmp.ne.s32.totalorder %s141, %s142
      %p151 = scmp.eq.s32.totalorder %s26, 0
      %p152 = por %p150, %p151
      %p153 = scmp.ne.s32.totalorder %s141, %s142
      %p154 = scmp.eq.s32.totalorder %s27, 1
      %p155 = por %p153, %p154
      %p157 = scmp.ne.s32.totalorder %s142, %s156
      %p158 = scmp.eq.s32.totalorder %s27, 0
      %p159 = por %p157, %p158
      %s161 = sadd.s32 %s160, 1
      %p164 = scmp.eq.s32.totalorder %s21, 1
      %p165 = scmp.ne.s32.totalorder %s160, %s162
      %p166 = scmp.eq.s32.totalorder %s21, 0
      %p167 = por %p165, %p166
      %p168 = scmp.ne.s32.totalorder %s160, %s162
      %p169 = scmp.eq.s32.totalorder %s26, 1
      %p170 = por %p168, %p169
      %p171 = scmp.ne.s32.totalorder %s162, %s163
      %p172 = scmp.eq.s32.totalorder %s26, 0
      %p173 = por %p171, %p172
      %p174 = scmp.ne.s32.totalorder %s162, %s163
      %p175 = scmp.eq.s32.totalorder %s27, 1
      %p176 = por %p174, %p175
      %p178 = scmp.ne.s32.totalorder %s163, %s177
      %p179 = scmp.eq.s32.totalorder %s27, 0
      %p180 = por %p178, %p179
      %s182 = sadd.s32 %s181, 1
      %p185 = scmp.eq.s32.totalorder %s21, 1
      %p186 = scmp.ne.s32.totalorder %s181, %s183
      %p187 = scmp.eq.s32.totalorder %s21, 0
      %p188 = por %p186, %p187
      %p189 = scmp.ne.s32.totalorder %s181, %s183
      %p190 = scmp.eq.s32.totalorder %s26, 1
      %p191 = por %p189, %p190
      %p192 = scmp.ne.s32.totalorder %s183, %s184
      %p193 = scmp.eq.s32.totalorder %s26, 0
      %p194 = por %p192, %p193
      %p195 = scmp.ne.s32.totalorder %s183, %s184
      %p196 = scmp.eq.s32.totalorder %s27, 1
      %p197 = por %p195, %p196
      %p199 = scmp.ne.s32.totalorder %s184, %s198
      %p200 = scmp.eq.s32.totalorder %s27, 0
      %p201 = por %p199, %p200
      %s203 = sadd.s32 %s202, 1
      %p206 = scmp.eq.s32.totalorder %s21, 1
      %p207 = scmp.ne.s32.totalorder %s202, %s204
      %p208 = scmp.eq.s32.totalorder %s21, 0
      %p209 = por %p207, %p208
      %p210 = scmp.ne.s32.totalorder %s202, %s204
      %p211 = scmp.eq.s32.totalorder %s26, 1
      %p212 = por %p210, %p211
      %p213 = scmp.ne.s32.totalorder %s204, %s205
      %p214 = scmp.eq.s32.totalorder %s26, 0
      %p215 = por %p213, %p214
      %p216 = scmp.ne.s32.totalorder %s204, %s205
      %p217 = scmp.eq.s32.totalorder %s27, 1
      %p218 = por %p216, %p217
      %p220 = scmp.ne.s32.totalorder %s205, %s219
      %p221 = scmp.eq.s32.totalorder %s27, 0
      %p222 = por %p220, %p221
      %s224 = sadd.s32 %s223, 1
      %p227 = scmp.eq.s32.totalorder %s21, 1
      %p228 = scmp.ne.s32.totalorder %s223, %s225
      %p229 = scmp.eq.s32.totalorder %s21, 0
      %p230 = por %p228, %p229
      %p231 = scmp.ne.s32.totalorder %s223, %s225
      %p232 = scmp.eq.s32.totalorder %s26, 1
      %p233 = por %p231, %p232
      %p234 = scmp.ne.s32.totalorder %s225, %s226
      %p235 = scmp.eq.s32.totalorder %s26, 0
      %p236 = por %p234, %p235
      %p237 = scmp.ne.s32.totalorder %s225, %s226
      %p238 = scmp.eq.s32.totalorder %s27, 1
      %p239 = por %p237, %p238
      %p241 = scmp.ne.s32.totalorder %s226, %s240
      %p242 = scmp.eq.s32.totalorder %s27, 0
      %p243 = por %p241, %p242
      %s244 = ssub.s32 %s21, %s28
      %p245 = scmp.eq.s32.totalorder %s244, 0
      %s247 = sadd.s32 %s246, 1
      %s248 = scalar_select %p245, %s246, %s247
      %p251 = pneg %p245
      %p252 = scmp.eq.s32.totalorder %s21, 1
      %p253 = por %p251, %p252
      %p254 = scmp.ne.s32.totalorder %s246, %s249
      %p255 = scmp.eq.s32.totalorder %s21, 0
      %p256 = por %p254, %p255
      %p257 = scmp.ne.s32.totalorder %s246, %s249
      %p258 = scmp.eq.s32.totalorder %s26, 1
      %p259 = por %p257, %p258
      %p260 = scmp.ne.s32.totalorder %s249, %s250
      %p261 = scmp.eq.s32.totalorder %s26, 0
      %p262 = por %p260, %p261
      %p263 = scmp.ne.s32.totalorder %s249, %s250
      %p264 = scmp.eq.s32.totalorder %s27, 1
      %p265 = por %p263, %p264
      %p267 = scmp.ne.s32.totalorder %s250, %s266
      %p268 = scmp.eq.s32.totalorder %s27, 0
      %p269 = por %p267, %p268
      %p270 = scmp.le.s32.totalorder 1, %s21
      %p271 = scmp.lt.s32.totalorder %s21, 3
      %p272 = pnand %p270, %p271
      %p273 = pneg %p272
      // Predicated region
      $region9: #{residual_block_forward.1} parent=5 // pred_check
        _
      $region10: #{residual_block_forward.1} parent=5 // pred_check_branch
        %275 = sbr.rel (%p272) target = $region12
      $region11: #{residual_block_forward.1} parent=5 // pred_region
        %s276 = ssub.s32 %s21, 1
        // Predicated region
        $region13: #{residual_block_forward.1} parent=11 // pred_check
          %p277 = pneg %p68
        $region14: #{residual_block_forward.1} parent=11 // pred_check_branch
          %279 = sbr.rel (%p277) target = $region16
        $region15: #{residual_block_forward.1} parent=11 // pred_region
          %281 = vsyncadd [#allocation3], 0
          %s282 = sshll.u32 %s1, 4
          %s283 = int_to_ptr.hbm [resolvable:$true] %s282
          %s284 = sshll.u32 [#allocation2], 4
          %s285 = int_to_ptr.vmem [resolvable:$true] %s284
          %290 = dma.hbm_to_vmem [thread:$0]  %s283, 6144, %s285, [#allocation3], 256, 256, 16
        $region16: #{residual_block_forward.1} parent=11 // pred_fallthru
          _
        // Predicated region
        $region17: #{residual_block_forward.1} parent=11 // pred_check
          %p291 = pneg %p89
        $region18: #{residual_block_forward.1} parent=11 // pred_check_branch
          %293 = sbr.rel (%p291) target = $region20
        $region19: #{residual_block_forward.1} parent=11 // pred_region
          %295 = vsyncadd [#allocation5], 0
          %s297 = sshll.u32 %s2, 4
          %s298 = int_to_ptr.hbm [resolvable:$true] %s297
          %s299 = sshll.u32 [#allocation4], 4
          %s300 = int_to_ptr.vmem [resolvable:$true] %s299
          %302 = dma.hbm_to_vmem [thread:$0]  %s298, 64, %s300, [#allocation5]
        $region20: #{residual_block_forward.1} parent=11 // pred_fallthru
          _
        // Predicated region
        $region21: #{residual_block_forward.1} parent=11 // pred_check
          %p303 = pneg %p110
        $region22: #{residual_block_forward.1} parent=11 // pred_check_branch
          %305 = sbr.rel (%p303) target = $region24
        $region23: #{residual_block_forward.1} parent=11 // pred_region
          %307 = vsyncadd [#allocation5], 0
          %s309 = sshll.u32 %s3, 4
          %s310 = int_to_ptr.hbm [resolvable:$true] %s309
          %s311 = sshll.u32 [#allocation6], 4
          %s312 = int_to_ptr.vmem [resolvable:$true] %s311
          %314 = dma.hbm_to_vmem [thread:$0]  %s310, 64, %s312, [#allocation5]
        $region24: #{residual_block_forward.1} parent=11 // pred_fallthru
          _
        // Predicated region
        $region25: #{residual_block_forward.1} parent=11 // pred_check
          %p315 = pneg %p131
        $region26: #{residual_block_forward.1} parent=11 // pred_check_branch
          %317 = sbr.rel (%p315) target = $region28
        $region27: #{residual_block_forward.1} parent=11 // pred_region
          %319 = vsyncadd [#allocation8], 0
          %s320 = sshll.u32 %s4, 4
          %s321 = int_to_ptr.hbm [resolvable:$true] %s320
          %s322 = sshll.u32 [#allocation7], 4
          %s323 = int_to_ptr.vmem [resolvable:$true] %s322
          %328 = dma.hbm_to_vmem [thread:$0]  %s321, 49152, %s323, [#allocation8], 256, 256, 16
        $region28: #{residual_block_forward.1} parent=11 // pred_fallthru
          _
        // Predicated region
        $region29: #{residual_block_forward.1} parent=11 // pred_check
          %p329 = pneg %p152
        $region30: #{residual_block_forward.1} parent=11 // pred_check_branch
          %331 = sbr.rel (%p329) target = $region32
        $region31: #{residual_block_forward.1} parent=11 // pred_region
          %333 = vsyncadd [#allocation8], 0
          %s335 = sshll.u32 %s5, 4
          %s336 = int_to_ptr.hbm [resolvable:$true] %s335
          %s337 = sshll.u32 [#allocation9], 4
          %s338 = int_to_ptr.vmem [resolvable:$true] %s337
          %340 = dma.hbm_to_vmem [thread:$0]  %s336, 64, %s338, [#allocation8]
        $region32: #{residual_block_forward.1} parent=11 // pred_fallthru
          _
        // Predicated region
        $region33: #{residual_block_forward.1} parent=11 // pred_check
          %p341 = pneg %p173
        $region34: #{residual_block_forward.1} parent=11 // pred_check_branch
          %343 = sbr.rel (%p341) target = $region36
        $region35: #{residual_block_forward.1} parent=11 // pred_region
          %345 = vsyncadd [#allocation11], 0
          %s347 = sshll.u32 %s6, 4
          %s348 = int_to_ptr.hbm [resolvable:$true] %s347
          %s349 = sshll.u32 [#allocation10], 4
          %s350 = int_to_ptr.vmem [resolvable:$true] %s349
          %352 = dma.hbm_to_vmem [thread:$0]  %s348, 64, %s350, [#allocation11]
        $region36: #{residual_block_forward.1} parent=11 // pred_fallthru
          _
        // Predicated region
        $region37: #{residual_block_forward.1} parent=11 // pred_check
          %p353 = pneg %p194
        $region38: #{residual_block_forward.1} parent=11 // pred_check_branch
          %355 = sbr.rel (%p353) target = $region40
        $region39: #{residual_block_forward.1} parent=11 // pred_region
          %357 = vsyncadd [#allocation11], 0
          %s358 = sshll.u32 %s7, 4
          %s359 = int_to_ptr.hbm [resolvable:$true] %s358
          %s360 = sshll.u32 [#allocation12], 4
          %s361 = int_to_ptr.vmem [resolvable:$true] %s360
          %366 = dma.hbm_to_vmem [thread:$0]  %s359, 49152, %s361, [#allocation11], 256, 256, 16
        $region40: #{residual_block_forward.1} parent=11 // pred_fallthru
          _
        // Predicated region
        $region41: #{residual_block_forward.1} parent=11 // pred_check
          %p367 = pneg %p215
        $region42: #{residual_block_forward.1} parent=11 // pred_check_branch
          %369 = sbr.rel (%p367) target = $region44
        $region43: #{residual_block_forward.1} parent=11 // pred_region
          %371 = vsyncadd [#allocation14], 0
          %s373 = sshll.u32 %s8, 4
          %s374 = int_to_ptr.hbm [resolvable:$true] %s373
          %s375 = sshll.u32 [#allocation13], 4
          %s376 = int_to_ptr.vmem [resolvable:$true] %s375
          %378 = dma.hbm_to_vmem [thread:$0]  %s374, 64, %s376, [#allocation14]
        $region44: #{residual_block_forward.1} parent=11 // pred_fallthru
          _
        // Predicated region
        $region45: #{residual_block_forward.1} parent=11 // pred_check
          %p379 = pneg %p236
        $region46: #{residual_block_forward.1} parent=11 // pred_check_branch
          %381 = sbr.rel (%p379) target = $region48
        $region47: #{residual_block_forward.1} parent=11 // pred_region
          %383 = vsyncadd [#allocation14], 0
          %s385 = sshll.u32 %s9, 4
          %s386 = int_to_ptr.hbm [resolvable:$true] %s385
          %s387 = sshll.u32 [#allocation15], 4
          %s388 = int_to_ptr.vmem [resolvable:$true] %s387
          %390 = dma.hbm_to_vmem [thread:$0]  %s386, 64, %s388, [#allocation14]
        $region48: #{residual_block_forward.1} parent=11 // pred_fallthru
          _
      $region12: #{residual_block_forward.1} parent=5 // pred_fallthru
        _
      %p391 = scmp.lt.s32.totalorder %s21, 2
      // Predicated region
      $region49: #{residual_block_forward.1} parent=5 // pred_check
        %p392 = pneg %p391
      $region50: #{residual_block_forward.1} parent=5 // pred_check_branch
        %394 = sbr.rel (%p392) target = $region52
      $region51: #{residual_block_forward.1} parent=5 // pred_region
        // Predicated region
        $region53: #{residual_block_forward.1} parent=51 // pred_check
          %p395 = pneg %p41
        $region54: #{residual_block_forward.1} parent=51 // pred_check_branch
          %397 = sbr.rel (%p395) target = $region56
        $region55: #{residual_block_forward.1} parent=51 // pred_region
          %p398 = scmp.lt.s32.totalorder %s21, 1
          %s399 = scalar_select %p398, %s21, 1
          %s400 = smul.addr %s399, 2
          %s401 = smul.addr %s400, 8
          %s402 = scalar_lea.vmem %s0, %s401
        $region56: #{residual_block_forward.1} parent=51 // pred_fallthru
          _
      $region52: #{residual_block_forward.1} parent=5 // pred_fallthru
        _
      %p403 = scmp.le.s32.totalorder 1, %s21
      %p404 = scmp.lt.s32.totalorder %s21, 3
      %p405 = pnand %p403, %p404
      %p406 = pneg %p405
      // Predicated region
      $region57: #{residual_block_forward.1} parent=5 // pred_check
        _
      $region58: #{residual_block_forward.1} parent=5 // pred_check_branch
        %408 = sbr.rel (%p405) target = $region60
      $region59: #{residual_block_forward.1} parent=5 // pred_region
        %s409 = ssub.s32 %s21, 1
        // Predicated region
        $region61: #{residual_block_forward.1} parent=59 // pred_check
          %p410 = pneg %p68
        $region62: #{residual_block_forward.1} parent=59 // pred_check_branch
          %412 = sbr.rel (%p410) target = $region64
        $region63: #{residual_block_forward.1} parent=59 // pred_region
          %414 = dma.done [#allocation3], 6144
        $region64: #{residual_block_forward.1} parent=59 // pred_fallthru
          _
        // Predicated region
        $region65: #{residual_block_forward.1} parent=59 // pred_check
          %p415 = pneg %p89
        $region66: #{residual_block_forward.1} parent=59 // pred_check_branch
          %417 = sbr.rel (%p415) target = $region68
        $region67: #{residual_block_forward.1} parent=59 // pred_region
          %419 = dma.done [#allocation5], 64
        $region68: #{residual_block_forward.1} parent=59 // pred_fallthru
          _
        // Predicated region
        $region69: #{residual_block_forward.1} parent=59 // pred_check
          %p420 = pneg %p110
        $region70: #{residual_block_forward.1} parent=59 // pred_check_branch
          %422 = sbr.rel (%p420) target = $region72
        $region71: #{residual_block_forward.1} parent=59 // pred_region
          %424 = dma.done [#allocation5], 64
        $region72: #{residual_block_forward.1} parent=59 // pred_fallthru
          _
        // Predicated region
        $region73: #{residual_block_forward.1} parent=59 // pred_check
          %p425 = pneg %p131
        $region74: #{residual_block_forward.1} parent=59 // pred_check_branch
          %427 = sbr.rel (%p425) target = $region76
        $region75: #{residual_block_forward.1} parent=59 // pred_region
          %429 = dma.done [#allocation8], 49152
        $region76: #{residual_block_forward.1} parent=59 // pred_fallthru
          _
        // Predicated region
        $region77: #{residual_block_forward.1} parent=59 // pred_check
          %p430 = pneg %p152
        $region78: #{residual_block_forward.1} parent=59 // pred_check_branch
          %432 = sbr.rel (%p430) target = $region80
        $region79: #{residual_block_forward.1} parent=59 // pred_region
          %434 = dma.done [#allocation8], 64
        $region80: #{residual_block_forward.1} parent=59 // pred_fallthru
          _
        // Predicated region
        $region81: #{residual_block_forward.1} parent=59 // pred_check
          %p435 = pneg %p173
        $region82: #{residual_block_forward.1} parent=59 // pred_check_branch
          %437 = sbr.rel (%p435) target = $region84
        $region83: #{residual_block_forward.1} parent=59 // pred_region
          %439 = dma.done [#allocation11], 64
        $region84: #{residual_block_forward.1} parent=59 // pred_fallthru
          _
        // Predicated region
        $region85: #{residual_block_forward.1} parent=59 // pred_check
          %p440 = pneg %p194
        $region86: #{residual_block_forward.1} parent=59 // pred_check_branch
          %442 = sbr.rel (%p440) target = $region88
        $region87: #{residual_block_forward.1} parent=59 // pred_region
          %444 = dma.done [#allocation11], 49152
        $region88: #{residual_block_forward.1} parent=59 // pred_fallthru
          _
        // Predicated region
        $region89: #{residual_block_forward.1} parent=59 // pred_check
          %p445 = pneg %p215
        $region90: #{residual_block_forward.1} parent=59 // pred_check_branch
          %447 = sbr.rel (%p445) target = $region92
        $region91: #{residual_block_forward.1} parent=59 // pred_region
          %449 = dma.done [#allocation14], 64
        $region92: #{residual_block_forward.1} parent=59 // pred_fallthru
          _
        // Predicated region
        $region93: #{residual_block_forward.1} parent=59 // pred_check
          %p450 = pneg %p236
        $region94: #{residual_block_forward.1} parent=59 // pred_check_branch
          %452 = sbr.rel (%p450) target = $region96
        $region95: #{residual_block_forward.1} parent=59 // pred_region
          %454 = dma.done [#allocation14], 64
        $region96: #{residual_block_forward.1} parent=59 // pred_fallthru
          _
        %p455 = scmp.lt.s32.totalorder %s26, 1
        %s456 = scalar_select %p455, %s26, 1
        %s457 = smul.addr %s456, 2
        %s458 = smul.addr %s457, 8
        %s459 = scalar_lea.vmem %s0, %s458
        %p460 = pneg %p47
        %p461 = pneg %p44
        %p462 = pneg %p68
        %p463 = pneg %p65
        %p464 = pneg %p89
        %p465 = pneg %p86
        %p466 = pneg %p110
        %p467 = pneg %p107
        %p468 = pneg %p131
        %p469 = pneg %p128
        %p470 = pneg %p152
        %p471 = pneg %p149
        %p472 = pneg %p173
        %p473 = pneg %p170
        %p474 = pneg %p194
        %p475 = pneg %p191
        %p476 = pneg %p215
        %p477 = pneg %p212
        %p478 = pneg %p236
        %p479 = pneg %p233
        %p480 = pneg %p262
        %p481 = pneg %p259
        %p482 = scmp.lt.s32.totalorder %s26, 1
        %s483 = scalar_select %p482, %s26, 1
        %s484 = smul.addr %s483, 8
        %s485 = smul.addr %s484, 8
        %s486 = scalar_lea.vmem %s10, %s485
        %p487 = scmp.lt.s32.totalorder %s26, 1
        %s488 = scalar_select %p487, %s26, 1
        %s489 = smul.addr %s488, 2
        %s490 = smul.addr %s489, 8
        %s491 = scalar_lea.vmem %s0, %s490
        %p492 = scmp.lt.s32.totalorder %s26, 1
        %s493 = scalar_select %p492, %s26, 1
        %s494 = smul.addr %s493, 8
        %s495 = smul.addr %s494, 8
        %s496 = scalar_lea.vmem %s10, %s495
        %v498 = vld [vmem:[%s491] sm:$0xff]
        %v499 = vld [vmem:[%s491 + $0x8] sm:$0xff]
        %v500 = vrot.slane %v498, 7
        %v501 = vrot.slane %v499, 7
        %v502 = vlaneseq
        %v503 = vshrl.u32 %v502, 7
        %vm504 = vcmp.lt.s32.totalorder %v503, 1
        %v505 = vsel %vm504, %v500, %v501
        %v506 = vsel %vm504, %v501, %v500
        %v507 = vadd.s32 %v503, 8
        %v508 = vadd.s32 %v503, 4294967295
        %v509 = vadd.s32 %v507, 4294967295
        %vm510 = vcmp.ge.s32.totalorder %v508, 0
        %vm511 = vcmp.ge.s32.totalorder %v509, 0
        %vm512 = vcmp.lt.s32.totalorder %v508, 16
        %vm513 = vcmp.lt.s32.totalorder %v509, 16
        %vm514 = vmand %vm510, %vm512
        %vm515 = vmand %vm511, %vm513
        %v516 = vsel %vm514, %v506, 0.0
        %v517 = vsel %vm515, %v505, 0.0
        %v518 = vpack.c.bf16 %v517, %v516
        %v519 = vld [vmem:[#allocation2] sm:$0xff]
        %v520 = vld [vmem:[#allocation2 + $0x8] sm:$0xff]
        %v521 = vld [vmem:[#allocation2 + $0x10] sm:$0xff]
        %v522 = vld [vmem:[#allocation2 + $0x18] sm:$0xff]
        %v523 = vld [vmem:[#allocation2 + $0x20] sm:$0xff]
        %v524 = vld [vmem:[#allocation2 + $0x28] sm:$0xff]
        %v525 = vld [vmem:[#allocation2 + $0x30] sm:$0xff]
        %v526 = vld [vmem:[#allocation2 + $0x38] sm:$0xff]
        %v527 = vld [vmem:[#allocation2 + $0x40] sm:$0xff]
        %v528 = vld [vmem:[#allocation2 + $0x48] sm:$0xff]
        %v529 = vld [vmem:[#allocation2 + $0x50] sm:$0xff]
        %v530 = vld [vmem:[#allocation2 + $0x58] sm:$0xff]
        %v531 = vld [vmem:[#allocation2 + $0x60] sm:$0xff]
        %v532 = vld [vmem:[#allocation2 + $0x68] sm:$0xff]
        %v533 = vld [vmem:[#allocation2 + $0x70] sm:$0xff]
        %v534 = vld [vmem:[#allocation2 + $0x78] sm:$0xff]
        %v535 = vpack.c.bf16 %v499, %v498
        %s536 = scalar_lea.vmem [#allocation2], 128
        %v537 = vld [vmem:[%s536] sm:$0xff]
        %v538 = vld [vmem:[%s536 + $0x8] sm:$0xff]
        %v539 = vld [vmem:[%s536 + $0x10] sm:$0xff]
        %v540 = vld [vmem:[%s536 + $0x18] sm:$0xff]
        %v541 = vld [vmem:[%s536 + $0x20] sm:$0xff]
        %v542 = vld [vmem:[%s536 + $0x28] sm:$0xff]
        %v543 = vld [vmem:[%s536 + $0x30] sm:$0xff]
        %v544 = vld [vmem:[%s536 + $0x38] sm:$0xff]
        %v545 = vld [vmem:[%s536 + $0x40] sm:$0xff]
        %v546 = vld [vmem:[%s536 + $0x48] sm:$0xff]
        %v547 = vld [vmem:[%s536 + $0x50] sm:$0xff]
        %v548 = vld [vmem:[%s536 + $0x58] sm:$0xff]
        %v549 = vld [vmem:[%s536 + $0x60] sm:$0xff]
        %v550 = vld [vmem:[%s536 + $0x68] sm:$0xff]
        %v551 = vld [vmem:[%s536 + $0x70] sm:$0xff]
        %v552 = vld [vmem:[%s536 + $0x78] sm:$0xff]
        %v569 = vunpack.c.l.b16 %v537
        %v570 = vunpack.c.h.b16 %v537
        %v571 = vunpack.c.l.b16 %v538
        %v572 = vunpack.c.h.b16 %v538
        %v573 = vunpack.c.l.b16 %v539
        %v574 = vunpack.c.h.b16 %v539
        %v575 = vunpack.c.l.b16 %v540
        %v576 = vunpack.c.h.b16 %v540
        %v577 = vunpack.c.l.b16 %v541
        %v578 = vunpack.c.h.b16 %v541
        %v579 = vunpack.c.l.b16 %v542
        %v580 = vunpack.c.h.b16 %v542
        %v581 = vunpack.c.l.b16 %v543
        %v582 = vunpack.c.h.b16 %v543
        %v583 = vunpack.c.l.b16 %v544
        %v584 = vunpack.c.h.b16 %v544
        %v585 = vunpack.c.l.b16 %v545
        %v586 = vunpack.c.h.b16 %v545
        %v587 = vunpack.c.l.b16 %v546
        %v588 = vunpack.c.h.b16 %v546
        %v589 = vunpack.c.l.b16 %v547
        %v590 = vunpack.c.h.b16 %v547
        %v591 = vunpack.c.l.b16 %v548
        %v592 = vunpack.c.h.b16 %v548
        %v593 = vunpack.c.l.b16 %v549
        %v594 = vunpack.c.h.b16 %v549
        %v595 = vunpack.c.l.b16 %v550
        %v596 = vunpack.c.h.b16 %v550
        %v597 = vunpack.c.l.b16 %v551
        %v598 = vunpack.c.h.b16 %v551
        %v599 = vunpack.c.l.b16 %v552
        %v600 = vunpack.c.h.b16 %v552
        %v601 = vpack.c.b16 %v573, %v569
        %v602 = vpack.c.b16 %v574, %v570
        %v603 = vpack.c.b16 %v575, %v571
        %v604 = vpack.c.b16 %v576, %v572
        %v605 = vpack.c.b16 %v581, %v577
        %v606 = vpack.c.b16 %v582, %v578
        %v607 = vpack.c.b16 %v583, %v579
        %v608 = vpack.c.b16 %v584, %v580
        %v609 = vpack.c.b16 %v589, %v585
        %v610 = vpack.c.b16 %v590, %v586
        %v611 = vpack.c.b16 %v591, %v587
        %v612 = vpack.c.b16 %v592, %v588
        %v613 = vpack.c.b16 %v597, %v593
        %v614 = vpack.c.b16 %v598, %v594
        %v615 = vpack.c.b16 %v599, %v595
        %v616 = vpack.c.b16 %v600, %v596
        %vm633 = vcmask 523264
        %v635 = vsel %vm633, %v535, 0
        %637 = vmatpush.bf16.msra.mxu0 0
        %638 = vmatpush.bf16.msra.mxu0 0
        %639 = vmatpush.bf16.msra.mxu0 0
        %640 = vmatpush.bf16.msra.mxu0 0
        %641 = vmatpush.bf16.msra.mxu0 %v613
        %642 = vmatpush.bf16.msra.mxu0 %v609
        %643 = vmatpush.bf16.msra.mxu0 %v605
        %644 = vmatpush.bf16.msra.mxu0 %v601
        %645 = vmatmul.bf16.gmra.mxu0 %v635
        %v646 = vpop.f32.mrf.mxu0
        %v647 = vadd.f32 0.0, %v646
        %v648 = vpop.f32.mrf.mxu0
        %v649 = vadd.f32 0.0, %v648
        %650 = vdwg.mxu0
        %651 = vmatpush.bf16.msra.mxu0 0
        %652 = vmatpush.bf16.msra.mxu0 0
        %653 = vmatpush.bf16.msra.mxu0 0
        %654 = vmatpush.bf16.msra.mxu0 0
        %655 = vmatpush.bf16.msra.mxu0 %v614
        %656 = vmatpush.bf16.msra.mxu0 %v610
        %657 = vmatpush.bf16.msra.mxu0 %v606
        %658 = vmatpush.bf16.msra.mxu0 %v602
        %659 = vmatmul.bf16.gmra.mxu0 %v635
        %v660 = vpop.f32.mrf.mxu0
        %v661 = vadd.f32 0.0, %v660
        %v662 = vpop.f32.mrf.mxu0
        %v663 = vadd.f32 0.0, %v662
        %664 = vdwg.mxu0
        %665 = vmatpush.bf16.msra.mxu0 0
        %666 = vmatpush.bf16.msra.mxu0 0
        %667 = vmatpush.bf16.msra.mxu0 0
        %668 = vmatpush.bf16.msra.mxu0 0
        %669 = vmatpush.bf16.msra.mxu0 %v615
        %670 = vmatpush.bf16.msra.mxu0 %v611
        %671 = vmatpush.bf16.msra.mxu0 %v607
        %672 = vmatpush.bf16.msra.mxu0 %v603
        %673 = vmatmul.bf16.gmra.mxu0 %v635
        %v674 = vpop.f32.mrf.mxu0
        %v675 = vadd.f32 0.0, %v674
        %v676 = vpop.f32.mrf.mxu0
        %v677 = vadd.f32 0.0, %v676
        %678 = vdwg.mxu0
        %679 = vmatpush.bf16.msra.mxu0 0
        %680 = vmatpush.bf16.msra.mxu0 0
        %681 = vmatpush.bf16.msra.mxu0 0
        %682 = vmatpush.bf16.msra.mxu0 0
        %683 = vmatpush.bf16.msra.mxu0 %v616
        %684 = vmatpush.bf16.msra.mxu0 %v612
        %685 = vmatpush.bf16.msra.mxu0 %v608
        %686 = vmatpush.bf16.msra.mxu0 %v604
        %687 = vmatmul.bf16.gmra.mxu0 %v635
        %v688 = vpop.f32.mrf.mxu0
        %v689 = vadd.f32 0.0, %v688
        %v690 = vpop.f32.mrf.mxu0
        %v691 = vadd.f32 0.0, %v690
        %692 = vdwg.mxu0
        %v709 = vunpack.c.l.b16 %v519
        %v710 = vunpack.c.h.b16 %v519
        %v711 = vunpack.c.l.b16 %v520
        %v712 = vunpack.c.h.b16 %v520
        %v713 = vunpack.c.l.b16 %v521
        %v714 = vunpack.c.h.b16 %v521
        %v715 = vunpack.c.l.b16 %v522
        %v716 = vunpack.c.h.b16 %v522
        %v717 = vunpack.c.l.b16 %v523
        %v718 = vunpack.c.h.b16 %v523
        %v719 = vunpack.c.l.b16 %v524
        %v720 = vunpack.c.h.b16 %v524
        %v721 = vunpack.c.l.b16 %v525
        %v722 = vunpack.c.h.b16 %v525
        %v723 = vunpack.c.l.b16 %v526
        %v724 = vunpack.c.h.b16 %v526
        %v725 = vunpack.c.l.b16 %v527
        %v726 = vunpack.c.h.b16 %v527
        %v727 = vunpack.c.l.b16 %v528
        %v728 = vunpack.c.h.b16 %v528
        %v729 = vunpack.c.l.b16 %v529
        %v730 = vunpack.c.h.b16 %v529
        %v731 = vunpack.c.l.b16 %v530
        %v732 = vunpack.c.h.b16 %v530
        %v733 = vunpack.c.l.b16 %v531
        %v734 = vunpack.c.h.b16 %v531
        %v735 = vunpack.c.l.b16 %v532
        %v736 = vunpack.c.h.b16 %v532
        %v737 = vunpack.c.l.b16 %v533
        %v738 = vunpack.c.h.b16 %v533
        %v739 = vunpack.c.l.b16 %v534
        %v740 = vunpack.c.h.b16 %v534
        %v741 = vpack.c.b16 %v713, %v709
        %v742 = vpack.c.b16 %v714, %v710
        %v743 = vpack.c.b16 %v715, %v711
        %v744 = vpack.c.b16 %v716, %v712
        %v745 = vpack.c.b16 %v721, %v717
        %v746 = vpack.c.b16 %v722, %v718
        %v747 = vpack.c.b16 %v723, %v719
        %v748 = vpack.c.b16 %v724, %v720
        %v749 = vpack.c.b16 %v729, %v725
        %v750 = vpack.c.b16 %v730, %v726
        %v751 = vpack.c.b16 %v731, %v727
        %v752 = vpack.c.b16 %v732, %v728
        %v753 = vpack.c.b16 %v737, %v733
        %v754 = vpack.c.b16 %v738, %v734
        %v755 = vpack.c.b16 %v739, %v735
        %v756 = vpack.c.b16 %v740, %v736
        %v774 = vsel %vm633, %v518, 0
        %776 = vmatpush.bf16.msra.mxu0 0
        %777 = vmatpush.bf16.msra.mxu0 0
        %778 = vmatpush.bf16.msra.mxu0 0
        %779 = vmatpush.bf16.msra.mxu0 0
        %780 = vmatpush.bf16.msra.mxu0 %v753
        %781 = vmatpush.bf16.msra.mxu0 %v749
        %782 = vmatpush.bf16.msra.mxu0 %v745
        %783 = vmatpush.bf16.msra.mxu0 %v741
        %784 = vmatmul.bf16.gmra.mxu0 %v774
        %v785 = vpop.f32.mrf.mxu0
        %v786 = vadd.f32 %v647, %v785
        %v787 = vpop.f32.mrf.mxu0
        %v788 = vadd.f32 %v649, %v787
        %789 = vdwg.mxu0
        %790 = vmatpush.bf16.msra.mxu0 0
        %791 = vmatpush.bf16.msra.mxu0 0
        %792 = vmatpush.bf16.msra.mxu0 0
        %793 = vmatpush.bf16.msra.mxu0 0
        %794 = vmatpush.bf16.msra.mxu0 %v754
        %795 = vmatpush.bf16.msra.mxu0 %v750
        %796 = vmatpush.bf16.msra.mxu0 %v746
        %797 = vmatpush.bf16.msra.mxu0 %v742
        %798 = vmatmul.bf16.gmra.mxu0 %v774
        %v799 = vpop.f32.mrf.mxu0
        %v800 = vadd.f32 %v661, %v799
        %v801 = vpop.f32.mrf.mxu0
        %v802 = vadd.f32 %v663, %v801
        %803 = vdwg.mxu0
        %804 = vmatpush.bf16.msra.mxu0 0
        %805 = vmatpush.bf16.msra.mxu0 0
        %806 = vmatpush.bf16.msra.mxu0 0
        %807 = vmatpush.bf16.msra.mxu0 0
        %808 = vmatpush.bf16.msra.mxu0 %v755
        %809 = vmatpush.bf16.msra.mxu0 %v751
        %810 = vmatpush.bf16.msra.mxu0 %v747
        %811 = vmatpush.bf16.msra.mxu0 %v743
        %812 = vmatmul.bf16.gmra.mxu0 %v774
        %v813 = vpop.f32.mrf.mxu0
        %v814 = vadd.f32 %v675, %v813
        %v815 = vpop.f32.mrf.mxu0
        %v816 = vadd.f32 %v677, %v815
        %817 = vdwg.mxu0
        %818 = vmatpush.bf16.msra.mxu0 0
        %819 = vmatpush.bf16.msra.mxu0 0
        %820 = vmatpush.bf16.msra.mxu0 0
        %821 = vmatpush.bf16.msra.mxu0 0
        %822 = vmatpush.bf16.msra.mxu0 %v756
        %823 = vmatpush.bf16.msra.mxu0 %v752
        %824 = vmatpush.bf16.msra.mxu0 %v748
        %825 = vmatpush.bf16.msra.mxu0 %v744
        %826 = vmatmul.bf16.gmra.mxu0 %v774
        %v827 = vpop.f32.mrf.mxu0
        %v828 = vadd.f32 %v689, %v827
        %v829 = vpop.f32.mrf.mxu0
        %v830 = vadd.f32 %v691, %v829
        %831 = vdwg.mxu0
        %v832 = vrot.slane %v498, 1
        %v833 = vrot.slane %v499, 1
        %vm834 = vcmp.lt.s32.totalorder %v503, 7
        %v835 = vsel %vm834, %v832, %v833
        %v836 = vsel %vm834, %v833, %v832
        %v837 = vadd.s32 %v503, 1
        %v838 = vadd.s32 %v507, 1
        %vm839 = vcmp.ge.s32.totalorder %v837, 0
        %vm840 = vcmp.ge.s32.totalorder %v838, 0
        %vm841 = vcmp.lt.s32.totalorder %v837, 16
        %vm842 = vcmp.lt.s32.totalorder %v838, 16
        %vm843 = vmand %vm839, %vm841
        %vm844 = vmand %vm840, %vm842
        %v845 = vsel %vm843, %v835, 0.0
        %v846 = vsel %vm844, %v836, 0.0
        %v847 = vpack.c.bf16 %v846, %v845
        %s848 = scalar_lea.vmem [#allocation2], 256
        %v849 = vld [vmem:[%s848] sm:$0xff]
        %v850 = vld [vmem:[%s848 + $0x8] sm:$0xff]
        %v851 = vld [vmem:[%s848 + $0x10] sm:$0xff]
        %v852 = vld [vmem:[%s848 + $0x18] sm:$0xff]
        %v853 = vld [vmem:[%s848 + $0x20] sm:$0xff]
        %v854 = vld [vmem:[%s848 + $0x28] sm:$0xff]
        %v855 = vld [vmem:[%s848 + $0x30] sm:$0xff]
        %v856 = vld [vmem:[%s848 + $0x38] sm:$0xff]
        %v857 = vld [vmem:[%s848 + $0x40] sm:$0xff]
        %v858 = vld [vmem:[%s848 + $0x48] sm:$0xff]
        %v859 = vld [vmem:[%s848 + $0x50] sm:$0xff]
        %v860 = vld [vmem:[%s848 + $0x58] sm:$0xff]
        %v861 = vld [vmem:[%s848 + $0x60] sm:$0xff]
        %v862 = vld [vmem:[%s848 + $0x68] sm:$0xff]
        %v863 = vld [vmem:[%s848 + $0x70] sm:$0xff]
        %v864 = vld [vmem:[%s848 + $0x78] sm:$0xff]
        %v881 = vunpack.c.l.b16 %v849
        %v882 = vunpack.c.h.b16 %v849
        %v883 = vunpack.c.l.b16 %v850
        %v884 = vunpack.c.h.b16 %v850
        %v885 = vunpack.c.l.b16 %v851
        %v886 = vunpack.c.h.b16 %v851
        %v887 = vunpack.c.l.b16 %v852
        %v888 = vunpack.c.h.b16 %v852
        %v889 = vunpack.c.l.b16 %v853
        %v890 = vunpack.c.h.b16 %v853
        %v891 = vunpack.c.l.b16 %v854
        %v892 = vunpack.c.h.b16 %v854
        %v893 = vunpack.c.l.b16 %v855
        %v894 = vunpack.c.h.b16 %v855
        %v895 = vunpack.c.l.b16 %v856
        %v896 = vunpack.c.h.b16 %v856
        %v897 = vunpack.c.l.b16 %v857
        %v898 = vunpack.c.h.b16 %v857
        %v899 = vunpack.c.l.b16 %v858
        %v900 = vunpack.c.h.b16 %v858
        %v901 = vunpack.c.l.b16 %v859
        %v902 = vunpack.c.h.b16 %v859
        %v903 = vunpack.c.l.b16 %v860
        %v904 = vunpack.c.h.b16 %v860
        %v905 = vunpack.c.l.b16 %v861
        %v906 = vunpack.c.h.b16 %v861
        %v907 = vunpack.c.l.b16 %v862
        %v908 = vunpack.c.h.b16 %v862
        %v909 = vunpack.c.l.b16 %v863
        %v910 = vunpack.c.h.b16 %v863
        %v911 = vunpack.c.l.b16 %v864
        %v912 = vunpack.c.h.b16 %v864
        %v913 = vpack.c.b16 %v885, %v881
        %v914 = vpack.c.b16 %v886, %v882
        %v915 = vpack.c.b16 %v887, %v883
        %v916 = vpack.c.b16 %v888, %v884
        %v917 = vpack.c.b16 %v893, %v889
        %v918 = vpack.c.b16 %v894, %v890
        %v919 = vpack.c.b16 %v895, %v891
        %v920 = vpack.c.b16 %v896, %v892
        %v921 = vpack.c.b16 %v901, %v897
        %v922 = vpack.c.b16 %v902, %v898
        %v923 = vpack.c.b16 %v903, %v899
        %v924 = vpack.c.b16 %v904, %v900
        %v925 = vpack.c.b16 %v909, %v905
        %v926 = vpack.c.b16 %v910, %v906
        %v927 = vpack.c.b16 %v911, %v907
        %v928 = vpack.c.b16 %v912, %v908
        %v946 = vsel %vm633, %v847, 0
        %948 = vmatpush.bf16.msra.mxu0 0
        %949 = vmatpush.bf16.msra.mxu0 0
        %950 = vmatpush.bf16.msra.mxu0 0
        %951 = vmatpush.bf16.msra.mxu0 0
        %952 = vmatpush.bf16.msra.mxu0 %v925
        %953 = vmatpush.bf16.msra.mxu0 %v921
        %954 = vmatpush.bf16.msra.mxu0 %v917
        %955 = vmatpush.bf16.msra.mxu0 %v913
        %956 = vmatmul.bf16.gmra.mxu0 %v946
        %v957 = vpop.f32.mrf.mxu0
        %v958 = vadd.f32 0.0, %v957
        %v959 = vpop.f32.mrf.mxu0
        %v960 = vadd.f32 0.0, %v959
        %961 = vdwg.mxu0
        %962 = vmatpush.bf16.msra.mxu0 0
        %963 = vmatpush.bf16.msra.mxu0 0
        %964 = vmatpush.bf16.msra.mxu0 0
        %965 = vmatpush.bf16.msra.mxu0 0
        %966 = vmatpush.bf16.msra.mxu0 %v926
        %967 = vmatpush.bf16.msra.mxu0 %v922
        %968 = vmatpush.bf16.msra.mxu0 %v918
        %969 = vmatpush.bf16.msra.mxu0 %v914
        %970 = vmatmul.bf16.gmra.mxu0 %v946
        %v971 = vpop.f32.mrf.mxu0
        %v972 = vadd.f32 0.0, %v971
        %v973 = vpop.f32.mrf.mxu0
        %v974 = vadd.f32 0.0, %v973
        %975 = vdwg.mxu0
        %976 = vmatpush.bf16.msra.mxu0 0
        %977 = vmatpush.bf16.msra.mxu0 0
        %978 = vmatpush.bf16.msra.mxu0 0
        %979 = vmatpush.bf16.msra.mxu0 0
        %980 = vmatpush.bf16.msra.mxu0 %v927
        %981 = vmatpush.bf16.msra.mxu0 %v923
        %982 = vmatpush.bf16.msra.mxu0 %v919
        %983 = vmatpush.bf16.msra.mxu0 %v915
        %984 = vmatmul.bf16.gmra.mxu0 %v946
        %v985 = vpop.f32.mrf.mxu0
        %v986 = vadd.f32 0.0, %v985
        %v987 = vpop.f32.mrf.mxu0
        %v988 = vadd.f32 0.0, %v987
        %989 = vdwg.mxu0
        %990 = vmatpush.bf16.msra.mxu0 0
        %991 = vmatpush.bf16.msra.mxu0 0
        %992 = vmatpush.bf16.msra.mxu0 0
        %993 = vmatpush.bf16.msra.mxu0 0
        %994 = vmatpush.bf16.msra.mxu0 %v928
        %995 = vmatpush.bf16.msra.mxu0 %v924
        %996 = vmatpush.bf16.msra.mxu0 %v920
        %997 = vmatpush.bf16.msra.mxu0 %v916
        %998 = vmatmul.bf16.gmra.mxu0 %v946
        %v999 = vpop.f32.mrf.mxu0
        %v1000 = vadd.f32 0.0, %v999
        %v1001 = vpop.f32.mrf.mxu0
        %v1002 = vadd.f32 0.0, %v1001
        %1003 = vdwg.mxu0
        %v1004 = vadd.f32 %v786, %v958
        %v1005 = vadd.f32 %v800, %v972
        %v1006 = vadd.f32 %v814, %v986
        %v1007 = vadd.f32 %v828, %v1000
        %v1008 = vadd.f32 %v788, %v960
        %v1009 = vadd.f32 %v802, %v974
        %v1010 = vadd.f32 %v816, %v988
        %v1011 = vadd.f32 %v830, %v1002
        %v1012 = vld [vmem:[#allocation4] sm:$0xf]
        %v1014 = vperm.slane %v1012, 0
        %v1015 = vperm.slane %v1012, 1
        %v1016 = vperm.slane %v1012, 2
        %v1017 = vperm.slane %v1012, 3
        %v1022 = vmul.f32 %v1004, %v1014
        %v1023 = vmul.f32 %v1005, %v1015
        %v1024 = vmul.f32 %v1006, %v1016
        %v1025 = vmul.f32 %v1007, %v1017
        %v1026 = vmul.f32 %v1008, %v1014
        %v1027 = vmul.f32 %v1009, %v1015
        %v1028 = vmul.f32 %v1010, %v1016
        %v1029 = vmul.f32 %v1011, %v1017
        %v1030 = vld [vmem:[#allocation6] sm:$0xf]
        %v1032 = vperm.slane %v1030, 0
        %v1033 = vperm.slane %v1030, 1
        %v1034 = vperm.slane %v1030, 2
        %v1035 = vperm.slane %v1030, 3
        %v1040 = vadd.f32 %v1022, %v1032
        %v1041 = vadd.f32 %v1023, %v1033
        %v1042 = vadd.f32 %v1024, %v1034
        %v1043 = vadd.f32 %v1025, %v1035
        %v1044 = vadd.f32 %v1026, %v1032
        %v1045 = vadd.f32 %v1027, %v1033
        %v1046 = vadd.f32 %v1028, %v1034
        %v1047 = vadd.f32 %v1029, %v1035
        %v1048 = vrot.slane %v1040, 7
        %v1049 = vrot.slane %v1041, 7
        %v1050 = vrot.slane %v1042, 7
        %v1051 = vrot.slane %v1043, 7
        %v1052 = vrot.slane %v1044, 7
        %v1053 = vrot.slane %v1045, 7
        %v1054 = vrot.slane %v1046, 7
        %v1055 = vrot.slane %v1047, 7
        %v1056 = vsel %vm504, %v1048, %v1052
        %v1057 = vsel %vm504, %v1049, %v1053
        %v1058 = vsel %vm504, %v1050, %v1054
        %v1059 = vsel %vm504, %v1051, %v1055
        %v1060 = vsel %vm504, %v1052, %v1048
        %v1061 = vsel %vm504, %v1053, %v1049
        %v1062 = vsel %vm504, %v1054, %v1050
        %v1063 = vsel %vm504, %v1055, %v1051
        %v1064 = vsel %vm514, %v1060, 0.0
        %v1065 = vsel %vm514, %v1061, 0.0
        %v1066 = vsel %vm514, %v1062, 0.0
        %v1067 = vsel %vm514, %v1063, 0.0
        %v1068 = vsel %vm515, %v1056, 0.0
        %v1069 = vsel %vm515, %v1057, 0.0
        %v1070 = vsel %vm515, %v1058, 0.0
        %v1071 = vsel %vm515, %v1059, 0.0
        %v1072 = vpack.c.bf16 %v1068, %v1064
        %v1073 = vpack.c.bf16 %v1069, %v1065
        %v1074 = vpack.c.bf16 %v1070, %v1066
        %v1075 = vpack.c.bf16 %v1071, %v1067
        %v1076 = vld [vmem:[#allocation7] sm:$0xff]
        %v1077 = vld [vmem:[#allocation7 + $0x8] sm:$0xff]
        %v1078 = vld [vmem:[#allocation7 + $0x10] sm:$0xff]
        %v1079 = vld [vmem:[#allocation7 + $0x18] sm:$0xff]
        %v1080 = vld [vmem:[#allocation7 + $0x20] sm:$0xff]
        %v1081 = vld [vmem:[#allocation7 + $0x28] sm:$0xff]
        %v1082 = vld [vmem:[#allocation7 + $0x30] sm:$0xff]
        %v1083 = vld [vmem:[#allocation7 + $0x38] sm:$0xff]
        %v1084 = vld [vmem:[#allocation7 + $0x40] sm:$0xff]
        %v1085 = vld [vmem:[#allocation7 + $0x48] sm:$0xff]
        %v1086 = vld [vmem:[#allocation7 + $0x50] sm:$0xff]
        %v1087 = vld [vmem:[#allocation7 + $0x58] sm:$0xff]
        %v1088 = vld [vmem:[#allocation7 + $0x60] sm:$0xff]
        %v1089 = vld [vmem:[#allocation7 + $0x68] sm:$0xff]
        %v1090 = vld [vmem:[#allocation7 + $0x70] sm:$0xff]
        %v1091 = vld [vmem:[#allocation7 + $0x78] sm:$0xff]
        %v1092 = vld [vmem:[#allocation7 + $0x80] sm:$0xff]
        %v1093 = vld [vmem:[#allocation7 + $0x88] sm:$0xff]
        %v1094 = vld [vmem:[#allocation7 + $0x90] sm:$0xff]
        %v1095 = vld [vmem:[#allocation7 + $0x98] sm:$0xff]
        %v1096 = vld [vmem:[#allocation7 + $0xa0] sm:$0xff]
        %v1097 = vld [vmem:[#allocation7 + $0xa8] sm:$0xff]
        %v1098 = vld [vmem:[#allocation7 + $0xb0] sm:$0xff]
        %v1099 = vld [vmem:[#allocation7 + $0xb8] sm:$0xff]
        %v1100 = vld [vmem:[#allocation7 + $0xc0] sm:$0xff]
        %v1101 = vld [vmem:[#allocation7 + $0xc8] sm:$0xff]
        %v1102 = vld [vmem:[#allocation7 + $0xd0] sm:$0xff]
        %v1103 = vld [vmem:[#allocation7 + $0xd8] sm:$0xff]
        %v1104 = vld [vmem:[#allocation7 + $0xe0] sm:$0xff]
        %v1105 = vld [vmem:[#allocation7 + $0xe8] sm:$0xff]
        %v1106 = vld [vmem:[#allocation7 + $0xf0] sm:$0xff]
        %v1107 = vld [vmem:[#allocation7 + $0xf8] sm:$0xff]
        %v1108 = vld [vmem:[#allocation7 + $0x100] sm:$0xff]
        %v1109 = vld [vmem:[#allocation7 + $0x108] sm:$0xff]
        %v1110 = vld [vmem:[#allocation7 + $0x110] sm:$0xff]
        %v1111 = vld [vmem:[#allocation7 + $0x118] sm:$0xff]
        %v1112 = vld [vmem:[#allocation7 + $0x120] sm:$0xff]
        %v1113 = vld [vmem:[#allocation7 + $0x128] sm:$0xff]
        %v1114 = vld [vmem:[#allocation7 + $0x130] sm:$0xff]
        %v1115 = vld [vmem:[#allocation7 + $0x138] sm:$0xff]
        %v1116 = vld [vmem:[#allocation7 + $0x140] sm:$0xff]
        %v1117 = vld [vmem:[#allocation7 + $0x148] sm:$0xff]
        %v1118 = vld [vmem:[#allocation7 + $0x150] sm:$0xff]
        %v1119 = vld [vmem:[#allocation7 + $0x158] sm:$0xff]
        %v1120 = vld [vmem:[#allocation7 + $0x160] sm:$0xff]
        %v1121 = vld [vmem:[#allocation7 + $0x168] sm:$0xff]
        %v1122 = vld [vmem:[#allocation7 + $0x170] sm:$0xff]
        %v1123 = vld [vmem:[#allocation7 + $0x178] sm:$0xff]
        %v1124 = vld [vmem:[#allocation7 + $0x180] sm:$0xff]
        %v1125 = vld [vmem:[#allocation7 + $0x188] sm:$0xff]
        %v1126 = vld [vmem:[#allocation7 + $0x190] sm:$0xff]
        %v1127 = vld [vmem:[#allocation7 + $0x198] sm:$0xff]
        %v1128 = vld [vmem:[#allocation7 + $0x1a0] sm:$0xff]
        %v1129 = vld [vmem:[#allocation7 + $0x1a8] sm:$0xff]
        %v1130 = vld [vmem:[#allocation7 + $0x1b0] sm:$0xff]
        %v1131 = vld [vmem:[#allocation7 + $0x1b8] sm:$0xff]
        %v1132 = vld [vmem:[#allocation7 + $0x1c0] sm:$0xff]
        %v1133 = vld [vmem:[#allocation7 + $0x1c8] sm:$0xff]
        %v1134 = vld [vmem:[#allocation7 + $0x1d0] sm:$0xff]
        %v1135 = vld [vmem:[#allocation7 + $0x1d8] sm:$0xff]
        %v1136 = vld [vmem:[#allocation7 + $0x1e0] sm:$0xff]
        %v1137 = vld [vmem:[#allocation7 + $0x1e8] sm:$0xff]
        %v1138 = vld [vmem:[#allocation7 + $0x1f0] sm:$0xff]
        %v1139 = vld [vmem:[#allocation7 + $0x1f8] sm:$0xff]
        %v1140 = vld [vmem:[#allocation7 + $0x200] sm:$0xff]
        %v1141 = vld [vmem:[#allocation7 + $0x208] sm:$0xff]
        %v1142 = vld [vmem:[#allocation7 + $0x210] sm:$0xff]
        %v1143 = vld [vmem:[#allocation7 + $0x218] sm:$0xff]
        %v1144 = vld [vmem:[#allocation7 + $0x220] sm:$0xff]
        %v1145 = vld [vmem:[#allocation7 + $0x228] sm:$0xff]
        %v1146 = vld [vmem:[#allocation7 + $0x230] sm:$0xff]
        %v1147 = vld [vmem:[#allocation7 + $0x238] sm:$0xff]
        %v1148 = vld [vmem:[#allocation7 + $0x240] sm:$0xff]
        %v1149 = vld [vmem:[#allocation7 + $0x248] sm:$0xff]
        %v1150 = vld [vmem:[#allocation7 + $0x250] sm:$0xff]
        %v1151 = vld [vmem:[#allocation7 + $0x258] sm:$0xff]
        %v1152 = vld [vmem:[#allocation7 + $0x260] sm:$0xff]
        %v1153 = vld [vmem:[#allocation7 + $0x268] sm:$0xff]
        %v1154 = vld [vmem:[#allocation7 + $0x270] sm:$0xff]
        %v1155 = vld [vmem:[#allocation7 + $0x278] sm:$0xff]
        %v1156 = vld [vmem:[#allocation7 + $0x280] sm:$0xff]
        %v1157 = vld [vmem:[#allocation7 + $0x288] sm:$0xff]
        %v1158 = vld [vmem:[#allocation7 + $0x290] sm:$0xff]
        %v1159 = vld [vmem:[#allocation7 + $0x298] sm:$0xff]
        %v1160 = vld [vmem:[#allocation7 + $0x2a0] sm:$0xff]
        %v1161 = vld [vmem:[#allocation7 + $0x2a8] sm:$0xff]
        %v1162 = vld [vmem:[#allocation7 + $0x2b0] sm:$0xff]
        %v1163 = vld [vmem:[#allocation7 + $0x2b8] sm:$0xff]
        %v1164 = vld [vmem:[#allocation7 + $0x2c0] sm:$0xff]
        %v1165 = vld [vmem:[#allocation7 + $0x2c8] sm:$0xff]
        %v1166 = vld [vmem:[#allocation7 + $0x2d0] sm:$0xff]
        %v1167 = vld [vmem:[#allocation7 + $0x2d8] sm:$0xff]
        %v1168 = vld [vmem:[#allocation7 + $0x2e0] sm:$0xff]
        %v1169 = vld [vmem:[#allocation7 + $0x2e8] sm:$0xff]
        %v1170 = vld [vmem:[#allocation7 + $0x2f0] sm:$0xff]
        %v1171 = vld [vmem:[#allocation7 + $0x2f8] sm:$0xff]
        %v1172 = vld [vmem:[#allocation7 + $0x300] sm:$0xff]
        %v1173 = vld [vmem:[#allocation7 + $0x308] sm:$0xff]
        %v1174 = vld [vmem:[#allocation7 + $0x310] sm:$0xff]
        %v1175 = vld [vmem:[#allocation7 + $0x318] sm:$0xff]
        %v1176 = vld [vmem:[#allocation7 + $0x320] sm:$0xff]
        %v1177 = vld [vmem:[#allocation7 + $0x328] sm:$0xff]
        %v1178 = vld [vmem:[#allocation7 + $0x330] sm:$0xff]
        %v1179 = vld [vmem:[#allocation7 + $0x338] sm:$0xff]
        %v1180 = vld [vmem:[#allocation7 + $0x340] sm:$0xff]
        %v1181 = vld [vmem:[#allocation7 + $0x348] sm:$0xff]
        %v1182 = vld [vmem:[#allocation7 + $0x350] sm:$0xff]
        %v1183 = vld [vmem:[#allocation7 + $0x358] sm:$0xff]
        %v1184 = vld [vmem:[#allocation7 + $0x360] sm:$0xff]
        %v1185 = vld [vmem:[#allocation7 + $0x368] sm:$0xff]
        %v1186 = vld [vmem:[#allocation7 + $0x370] sm:$0xff]
        %v1187 = vld [vmem:[#allocation7 + $0x378] sm:$0xff]
        %v1188 = vld [vmem:[#allocation7 + $0x380] sm:$0xff]
        %v1189 = vld [vmem:[#allocation7 + $0x388] sm:$0xff]
        %v1190 = vld [vmem:[#allocation7 + $0x390] sm:$0xff]
        %v1191 = vld [vmem:[#allocation7 + $0x398] sm:$0xff]
        %v1192 = vld [vmem:[#allocation7 + $0x3a0] sm:$0xff]
        %v1193 = vld [vmem:[#allocation7 + $0x3a8] sm:$0xff]
        %v1194 = vld [vmem:[#allocation7 + $0x3b0] sm:$0xff]
        %v1195 = vld [vmem:[#allocation7 + $0x3b8] sm:$0xff]
        %v1196 = vld [vmem:[#allocation7 + $0x3c0] sm:$0xff]
        %v1197 = vld [vmem:[#allocation7 + $0x3c8] sm:$0xff]
        %v1198 = vld [vmem:[#allocation7 + $0x3d0] sm:$0xff]
        %v1199 = vld [vmem:[#allocation7 + $0x3d8] sm:$0xff]
        %v1200 = vld [vmem:[#allocation7 + $0x3e0] sm:$0xff]
        %v1201 = vld [vmem:[#allocation7 + $0x3e8] sm:$0xff]
        %v1202 = vld [vmem:[#allocation7 + $0x3f0] sm:$0xff]
        %v1203 = vld [vmem:[#allocation7 + $0x3f8] sm:$0xff]
        %v1204 = vpack.c.bf16 %v1044, %v1040
        %v1205 = vpack.c.bf16 %v1045, %v1041
        %v1206 = vpack.c.bf16 %v1046, %v1042
        %v1207 = vpack.c.bf16 %v1047, %v1043
        %s1208 = scalar_lea.vmem [#allocation7], 1024
        %v1209 = vld [vmem:[%s1208] sm:$0xff]
        %v1210 = vld [vmem:[%s1208 + $0x8] sm:$0xff]
        %v1211 = vld [vmem:[%s1208 + $0x10] sm:$0xff]
        %v1212 = vld [vmem:[%s1208 + $0x18] sm:$0xff]
        %v1213 = vld [vmem:[%s1208 + $0x20] sm:$0xff]
        %v1214 = vld [vmem:[%s1208 + $0x28] sm:$0xff]
        %v1215 = vld [vmem:[%s1208 + $0x30] sm:$0xff]
        %v1216 = vld [vmem:[%s1208 + $0x38] sm:$0xff]
        %v1217 = vld [vmem:[%s1208 + $0x40] sm:$0xff]
        %v1218 = vld [vmem:[%s1208 + $0x48] sm:$0xff]
        %v1219 = vld [vmem:[%s1208 + $0x50] sm:$0xff]
        %v1220 = vld [vmem:[%s1208 + $0x58] sm:$0xff]
        %v1221 = vld [vmem:[%s1208 + $0x60] sm:$0xff]
        %v1222 = vld [vmem:[%s1208 + $0x68] sm:$0xff]
        %v1223 = vld [vmem:[%s1208 + $0x70] sm:$0xff]
        %v1224 = vld [vmem:[%s1208 + $0x78] sm:$0xff]
        %v1225 = vld [vmem:[%s1208 + $0x80] sm:$0xff]
        %v1226 = vld [vmem:[%s1208 + $0x88] sm:$0xff]
        %v1227 = vld [vmem:[%s1208 + $0x90] sm:$0xff]
        %v1228 = vld [vmem:[%s1208 + $0x98] sm:$0xff]
        %v1229 = vld [vmem:[%s1208 + $0xa0] sm:$0xff]
        %v1230 = vld [vmem:[%s1208 + $0xa8] sm:$0xff]
        %v1231 = vld [vmem:[%s1208 + $0xb0] sm:$0xff]
        %v1232 = vld [vmem:[%s1208 + $0xb8] sm:$0xff]
        %v1233 = vld [vmem:[%s1208 + $0xc0] sm:$0xff]
        %v1234 = vld [vmem:[%s1208 + $0xc8] sm:$0xff]
        %v1235 = vld [vmem:[%s1208 + $0xd0] sm:$0xff]
        %v1236 = vld [vmem:[%s1208 + $0xd8] sm:$0xff]
        %v1237 = vld [vmem:[%s1208 + $0xe0] sm:$0xff]
        %v1238 = vld [vmem:[%s1208 + $0xe8] sm:$0xff]
        %v1239 = vld [vmem:[%s1208 + $0xf0] sm:$0xff]
        %v1240 = vld [vmem:[%s1208 + $0xf8] sm:$0xff]
        %v1241 = vld [vmem:[%s1208 + $0x100] sm:$0xff]
        %v1242 = vld [vmem:[%s1208 + $0x108] sm:$0xff]
        %v1243 = vld [vmem:[%s1208 + $0x110] sm:$0xff]
        %v1244 = vld [vmem:[%s1208 + $0x118] sm:$0xff]
        %v1245 = vld [vmem:[%s1208 + $0x120] sm:$0xff]
        %v1246 = vld [vmem:[%s1208 + $0x128] sm:$0xff]
        %v1247 = vld [vmem:[%s1208 + $0x130] sm:$0xff]
        %v1248 = vld [vmem:[%s1208 + $0x138] sm:$0xff]
        %v1249 = vld [vmem:[%s1208 + $0x140] sm:$0xff]
        %v1250 = vld [vmem:[%s1208 + $0x148] sm:$0xff]
        %v1251 = vld [vmem:[%s1208 + $0x150] sm:$0xff]
        %v1252 = vld [vmem:[%s1208 + $0x158] sm:$0xff]
        %v1253 = vld [vmem:[%s1208 + $0x160] sm:$0xff]
        %v1254 = vld [vmem:[%s1208 + $0x168] sm:$0xff]
        %v1255 = vld [vmem:[%s1208 + $0x170] sm:$0xff]
        %v1256 = vld [vmem:[%s1208 + $0x178] sm:$0xff]
        %v1257 = vld [vmem:[%s1208 + $0x180] sm:$0xff]
        %v1258 = vld [vmem:[%s1208 + $0x188] sm:$0xff]
        %v1259 = vld [vmem:[%s1208 + $0x190] sm:$0xff]
        %v1260 = vld [vmem:[%s1208 + $0x198] sm:$0xff]
        %v1261 = vld [vmem:[%s1208 + $0x1a0] sm:$0xff]
        %v1262 = vld [vmem:[%s1208 + $0x1a8] sm:$0xff]
        %v1263 = vld [vmem:[%s1208 + $0x1b0] sm:$0xff]
        %v1264 = vld [vmem:[%s1208 + $0x1b8] sm:$0xff]
        %v1265 = vld [vmem:[%s1208 + $0x1c0] sm:$0xff]
        %v1266 = vld [vmem:[%s1208 + $0x1c8] sm:$0xff]
        %v1267 = vld [vmem:[%s1208 + $0x1d0] sm:$0xff]
        %v1268 = vld [vmem:[%s1208 + $0x1d8] sm:$0xff]
        %v1269 = vld [vmem:[%s1208 + $0x1e0] sm:$0xff]
        %v1270 = vld [vmem:[%s1208 + $0x1e8] sm:$0xff]
        %v1271 = vld [vmem:[%s1208 + $0x1f0] sm:$0xff]
        %v1272 = vld [vmem:[%s1208 + $0x1f8] sm:$0xff]
        %v1273 = vld [vmem:[%s1208 + $0x200] sm:$0xff]
        %v1274 = vld [vmem:[%s1208 + $0x208] sm:$0xff]
        %v1275 = vld [vmem:[%s1208 + $0x210] sm:$0xff]
        %v1276 = vld [vmem:[%s1208 + $0x218] sm:$0xff]
        %v1277 = vld [vmem:[%s1208 + $0x220] sm:$0xff]
        %v1278 = vld [vmem:[%s1208 + $0x228] sm:$0xff]
        %v1279 = vld [vmem:[%s1208 + $0x230] sm:$0xff]
        %v1280 = vld [vmem:[%s1208 + $0x238] sm:$0xff]
        %v1281 = vld [vmem:[%s1208 + $0x240] sm:$0xff]
        %v1282 = vld [vmem:[%s1208 + $0x248] sm:$0xff]
        %v1283 = vld [vmem:[%s1208 + $0x250] sm:$0xff]
        %v1284 = vld [vmem:[%s1208 + $0x258] sm:$0xff]
        %v1285 = vld [vmem:[%s1208 + $0x260] sm:$0xff]
        %v1286 = vld [vmem:[%s1208 + $0x268] sm:$0xff]
        %v1287 = vld [vmem:[%s1208 + $0x270] sm:$0xff]
        %v1288 = vld [vmem:[%s1208 + $0x278] sm:$0xff]
        %v1289 = vld [vmem:[%s1208 + $0x280] sm:$0xff]
        %v1290 = vld [vmem:[%s1208 + $0x288] sm:$0xff]
        %v1291 = vld [vmem:[%s1208 + $0x290] sm:$0xff]
        %v1292 = vld [vmem:[%s1208 + $0x298] sm:$0xff]
        %v1293 = vld [vmem:[%s1208 + $0x2a0] sm:$0xff]
        %v1294 = vld [vmem:[%s1208 + $0x2a8] sm:$0xff]
        %v1295 = vld [vmem:[%s1208 + $0x2b0] sm:$0xff]
        %v1296 = vld [vmem:[%s1208 + $0x2b8] sm:$0xff]
        %v1297 = vld [vmem:[%s1208 + $0x2c0] sm:$0xff]
        %v1298 = vld [vmem:[%s1208 + $0x2c8] sm:$0xff]
        %v1299 = vld [vmem:[%s1208 + $0x2d0] sm:$0xff]
        %v1300 = vld [vmem:[%s1208 + $0x2d8] sm:$0xff]
        %v1301 = vld [vmem:[%s1208 + $0x2e0] sm:$0xff]
        %v1302 = vld [vmem:[%s1208 + $0x2e8] sm:$0xff]
        %v1303 = vld [vmem:[%s1208 + $0x2f0] sm:$0xff]
        %v1304 = vld [vmem:[%s1208 + $0x2f8] sm:$0xff]
        %v1305 = vld [vmem:[%s1208 + $0x300] sm:$0xff]
        %v1306 = vld [vmem:[%s1208 + $0x308] sm:$0xff]
        %v1307 = vld [vmem:[%s1208 + $0x310] sm:$0xff]
        %v1308 = vld [vmem:[%s1208 + $0x318] sm:$0xff]
        %v1309 = vld [vmem:[%s1208 + $0x320] sm:$0xff]
        %v1310 = vld [vmem:[%s1208 + $0x328] sm:$0xff]
        %v1311 = vld [vmem:[%s1208 + $0x330] sm:$0xff]
        %v1312 = vld [vmem:[%s1208 + $0x338] sm:$0xff]
        %v1313 = vld [vmem:[%s1208 + $0x340] sm:$0xff]
        %v1314 = vld [vmem:[%s1208 + $0x348] sm:$0xff]
        %v1315 = vld [vmem:[%s1208 + $0x350] sm:$0xff]
        %v1316 = vld [vmem:[%s1208 + $0x358] sm:$0xff]
        %v1317 = vld [vmem:[%s1208 + $0x360] sm:$0xff]
        %v1318 = vld [vmem:[%s1208 + $0x368] sm:$0xff]
        %v1319 = vld [vmem:[%s1208 + $0x370] sm:$0xff]
        %v1320 = vld [vmem:[%s1208 + $0x378] sm:$0xff]
        %v1321 = vld [vmem:[%s1208 + $0x380] sm:$0xff]
        %v1322 = vld [vmem:[%s1208 + $0x388] sm:$0xff]
        %v1323 = vld [vmem:[%s1208 + $0x390] sm:$0xff]
        %v1324 = vld [vmem:[%s1208 + $0x398] sm:$0xff]
        %v1325 = vld [vmem:[%s1208 + $0x3a0] sm:$0xff]
        %v1326 = vld [vmem:[%s1208 + $0x3a8] sm:$0xff]
        %v1327 = vld [vmem:[%s1208 + $0x3b0] sm:$0xff]
        %v1328 = vld [vmem:[%s1208 + $0x3b8] sm:$0xff]
        %v1329 = vld [vmem:[%s1208 + $0x3c0] sm:$0xff]
        %v1330 = vld [vmem:[%s1208 + $0x3c8] sm:$0xff]
        %v1331 = vld [vmem:[%s1208 + $0x3d0] sm:$0xff]
        %v1332 = vld [vmem:[%s1208 + $0x3d8] sm:$0xff]
        %v1333 = vld [vmem:[%s1208 + $0x3e0] sm:$0xff]
        %v1334 = vld [vmem:[%s1208 + $0x3e8] sm:$0xff]
        %v1335 = vld [vmem:[%s1208 + $0x3f0] sm:$0xff]
        %v1336 = vld [vmem:[%s1208 + $0x3f8] sm:$0xff]
        %v1465 = vunpack.c.l.b16 %v1209
        %v1466 = vunpack.c.h.b16 %v1209
        %v1467 = vunpack.c.l.b16 %v1210
        %v1468 = vunpack.c.h.b16 %v1210
        %v1469 = vunpack.c.l.b16 %v1211
        %v1470 = vunpack.c.h.b16 %v1211
        %v1471 = vunpack.c.l.b16 %v1212
        %v1472 = vunpack.c.h.b16 %v1212
        %v1473 = vunpack.c.l.b16 %v1213
        %v1474 = vunpack.c.h.b16 %v1213
        %v1475 = vunpack.c.l.b16 %v1214
        %v1476 = vunpack.c.h.b16 %v1214
        %v1477 = vunpack.c.l.b16 %v1215
        %v1478 = vunpack.c.h.b16 %v1215
        %v1479 = vunpack.c.l.b16 %v1216
        %v1480 = vunpack.c.h.b16 %v1216
        %v1481 = vunpack.c.l.b16 %v1217
        %v1482 = vunpack.c.h.b16 %v1217
        %v1483 = vunpack.c.l.b16 %v1218
        %v1484 = vunpack.c.h.b16 %v1218
        %v1485 = vunpack.c.l.b16 %v1219
        %v1486 = vunpack.c.h.b16 %v1219
        %v1487 = vunpack.c.l.b16 %v1220
        %v1488 = vunpack.c.h.b16 %v1220
        %v1489 = vunpack.c.l.b16 %v1221
        %v1490 = vunpack.c.h.b16 %v1221
        %v1491 = vunpack.c.l.b16 %v1222
        %v1492 = vunpack.c.h.b16 %v1222
        %v1493 = vunpack.c.l.b16 %v1223
        %v1494 = vunpack.c.h.b16 %v1223
        %v1495 = vunpack.c.l.b16 %v1224
        %v1496 = vunpack.c.h.b16 %v1224
        %v1497 = vunpack.c.l.b16 %v1225
        %v1498 = vunpack.c.h.b16 %v1225
        %v1499 = vunpack.c.l.b16 %v1226
        %v1500 = vunpack.c.h.b16 %v1226
        %v1501 = vunpack.c.l.b16 %v1227
        %v1502 = vunpack.c.h.b16 %v1227
        %v1503 = vunpack.c.l.b16 %v1228
        %v1504 = vunpack.c.h.b16 %v1228
        %v1505 = vunpack.c.l.b16 %v1229
        %v1506 = vunpack.c.h.b16 %v1229
        %v1507 = vunpack.c.l.b16 %v1230
        %v1508 = vunpack.c.h.b16 %v1230
        %v1509 = vunpack.c.l.b16 %v1231
        %v1510 = vunpack.c.h.b16 %v1231
        %v1511 = vunpack.c.l.b16 %v1232
        %v1512 = vunpack.c.h.b16 %v1232
        %v1513 = vunpack.c.l.b16 %v1233
        %v1514 = vunpack.c.h.b16 %v1233
        %v1515 = vunpack.c.l.b16 %v1234
        %v1516 = vunpack.c.h.b16 %v1234
        %v1517 = vunpack.c.l.b16 %v1235
        %v1518 = vunpack.c.h.b16 %v1235
        %v1519 = vunpack.c.l.b16 %v1236
        %v1520 = vunpack.c.h.b16 %v1236
        %v1521 = vunpack.c.l.b16 %v1237
        %v1522 = vunpack.c.h.b16 %v1237
        %v1523 = vunpack.c.l.b16 %v1238
        %v1524 = vunpack.c.h.b16 %v1238
        %v1525 = vunpack.c.l.b16 %v1239
        %v1526 = vunpack.c.h.b16 %v1239
        %v1527 = vunpack.c.l.b16 %v1240
        %v1528 = vunpack.c.h.b16 %v1240
        %v1529 = vunpack.c.l.b16 %v1241
        %v1530 = vunpack.c.h.b16 %v1241
        %v1531 = vunpack.c.l.b16 %v1242
        %v1532 = vunpack.c.h.b16 %v1242
        %v1533 = vunpack.c.l.b16 %v1243
        %v1534 = vunpack.c.h.b16 %v1243
        %v1535 = vunpack.c.l.b16 %v1244
        %v1536 = vunpack.c.h.b16 %v1244
        %v1537 = vunpack.c.l.b16 %v1245
        %v1538 = vunpack.c.h.b16 %v1245
        %v1539 = vunpack.c.l.b16 %v1246
        %v1540 = vunpack.c.h.b16 %v1246
        %v1541 = vunpack.c.l.b16 %v1247
        %v1542 = vunpack.c.h.b16 %v1247
        %v1543 = vunpack.c.l.b16 %v1248
        %v1544 = vunpack.c.h.b16 %v1248
        %v1545 = vunpack.c.l.b16 %v1249
        %v1546 = vunpack.c.h.b16 %v1249
        %v1547 = vunpack.c.l.b16 %v1250
        %v1548 = vunpack.c.h.b16 %v1250
        %v1549 = vunpack.c.l.b16 %v1251
        %v1550 = vunpack.c.h.b16 %v1251
        %v1551 = vunpack.c.l.b16 %v1252
        %v1552 = vunpack.c.h.b16 %v1252
        %v1553 = vunpack.c.l.b16 %v1253
        %v1554 = vunpack.c.h.b16 %v1253
        %v1555 = vunpack.c.l.b16 %v1254
        %v1556 = vunpack.c.h.b16 %v1254
        %v1557 = vunpack.c.l.b16 %v1255
        %v1558 = vunpack.c.h.b16 %v1255
        %v1559 = vunpack.c.l.b16 %v1256
        %v1560 = vunpack.c.h.b16 %v1256
        %v1561 = vunpack.c.l.b16 %v1257
        %v1562 = vunpack.c.h.b16 %v1257
        %v1563 = vunpack.c.l.b16 %v1258
        %v1564 = vunpack.c.h.b16 %v1258
        %v1565 = vunpack.c.l.b16 %v1259
        %v1566 = vunpack.c.h.b16 %v1259
        %v1567 = vunpack.c.l.b16 %v1260
        %v1568 = vunpack.c.h.b16 %v1260
        %v1569 = vunpack.c.l.b16 %v1261
        %v1570 = vunpack.c.h.b16 %v1261
        %v1571 = vunpack.c.l.b16 %v1262
        %v1572 = vunpack.c.h.b16 %v1262
        %v1573 = vunpack.c.l.b16 %v1263
        %v1574 = vunpack.c.h.b16 %v1263
        %v1575 = vunpack.c.l.b16 %v1264
        %v1576 = vunpack.c.h.b16 %v1264
        %v1577 = vunpack.c.l.b16 %v1265
        %v1578 = vunpack.c.h.b16 %v1265
        %v1579 = vunpack.c.l.b16 %v1266
        %v1580 = vunpack.c.h.b16 %v1266
        %v1581 = vunpack.c.l.b16 %v1267
        %v1582 = vunpack.c.h.b16 %v1267
        %v1583 = vunpack.c.l.b16 %v1268
        %v1584 = vunpack.c.h.b16 %v1268
        %v1585 = vunpack.c.l.b16 %v1269
        %v1586 = vunpack.c.h.b16 %v1269
        %v1587 = vunpack.c.l.b16 %v1270
        %v1588 = vunpack.c.h.b16 %v1270
        %v1589 = vunpack.c.l.b16 %v1271
        %v1590 = vunpack.c.h.b16 %v1271
        %v1591 = vunpack.c.l.b16 %v1272
        %v1592 = vunpack.c.h.b16 %v1272
        %v1593 = vunpack.c.l.b16 %v1273
        %v1594 = vunpack.c.h.b16 %v1273
        %v1595 = vunpack.c.l.b16 %v1274
        %v1596 = vunpack.c.h.b16 %v1274
        %v1597 = vunpack.c.l.b16 %v1275
        %v1598 = vunpack.c.h.b16 %v1275
        %v1599 = vunpack.c.l.b16 %v1276
        %v1600 = vunpack.c.h.b16 %v1276
        %v1601 = vunpack.c.l.b16 %v1277
        %v1602 = vunpack.c.h.b16 %v1277
        %v1603 = vunpack.c.l.b16 %v1278
        %v1604 = vunpack.c.h.b16 %v1278
        %v1605 = vunpack.c.l.b16 %v1279
        %v1606 = vunpack.c.h.b16 %v1279
        %v1607 = vunpack.c.l.b16 %v1280
        %v1608 = vunpack.c.h.b16 %v1280
        %v1609 = vunpack.c.l.b16 %v1281
        %v1610 = vunpack.c.h.b16 %v1281
        %v1611 = vunpack.c.l.b16 %v1282
        %v1612 = vunpack.c.h.b16 %v1282
        %v1613 = vunpack.c.l.b16 %v1283
        %v1614 = vunpack.c.h.b16 %v1283
        %v1615 = vunpack.c.l.b16 %v1284
        %v1616 = vunpack.c.h.b16 %v1284
        %v1617 = vunpack.c.l.b16 %v1285
        %v1618 = vunpack.c.h.b16 %v1285
        %v1619 = vunpack.c.l.b16 %v1286
        %v1620 = vunpack.c.h.b16 %v1286
        %v1621 = vunpack.c.l.b16 %v1287
        %v1622 = vunpack.c.h.b16 %v1287
        %v1623 = vunpack.c.l.b16 %v1288
        %v1624 = vunpack.c.h.b16 %v1288
        %v1625 = vunpack.c.l.b16 %v1289
        %v1626 = vunpack.c.h.b16 %v1289
        %v1627 = vunpack.c.l.b16 %v1290
        %v1628 = vunpack.c.h.b16 %v1290
        %v1629 = vunpack.c.l.b16 %v1291
        %v1630 = vunpack.c.h.b16 %v1291
        %v1631 = vunpack.c.l.b16 %v1292
        %v1632 = vunpack.c.h.b16 %v1292
        %v1633 = vunpack.c.l.b16 %v1293
        %v1634 = vunpack.c.h.b16 %v1293
        %v1635 = vunpack.c.l.b16 %v1294
        %v1636 = vunpack.c.h.b16 %v1294
        %v1637 = vunpack.c.l.b16 %v1295
        %v1638 = vunpack.c.h.b16 %v1295
        %v1639 = vunpack.c.l.b16 %v1296
        %v1640 = vunpack.c.h.b16 %v1296
        %v1641 = vunpack.c.l.b16 %v1297
        %v1642 = vunpack.c.h.b16 %v1297
        %v1643 = vunpack.c.l.b16 %v1298
        %v1644 = vunpack.c.h.b16 %v1298
        %v1645 = vunpack.c.l.b16 %v1299
        %v1646 = vunpack.c.h.b16 %v1299
        %v1647 = vunpack.c.l.b16 %v1300
        %v1648 = vunpack.c.h.b16 %v1300
        %v1649 = vunpack.c.l.b16 %v1301
        %v1650 = vunpack.c.h.b16 %v1301
        %v1651 = vunpack.c.l.b16 %v1302
        %v1652 = vunpack.c.h.b16 %v1302
        %v1653 = vunpack.c.l.b16 %v1303
        %v1654 = vunpack.c.h.b16 %v1303
        %v1655 = vunpack.c.l.b16 %v1304
        %v1656 = vunpack.c.h.b16 %v1304
        %v1657 = vunpack.c.l.b16 %v1305
        %v1658 = vunpack.c.h.b16 %v1305
        %v1659 = vunpack.c.l.b16 %v1306
        %v1660 = vunpack.c.h.b16 %v1306
        %v1661 = vunpack.c.l.b16 %v1307
        %v1662 = vunpack.c.h.b16 %v1307
        %v1663 = vunpack.c.l.b16 %v1308
        %v1664 = vunpack.c.h.b16 %v1308
        %v1665 = vunpack.c.l.b16 %v1309
        %v1666 = vunpack.c.h.b16 %v1309
        %v1667 = vunpack.c.l.b16 %v1310
        %v1668 = vunpack.c.h.b16 %v1310
        %v1669 = vunpack.c.l.b16 %v1311
        %v1670 = vunpack.c.h.b16 %v1311
        %v1671 = vunpack.c.l.b16 %v1312
        %v1672 = vunpack.c.h.b16 %v1312
        %v1673 = vunpack.c.l.b16 %v1313
        %v1674 = vunpack.c.h.b16 %v1313
        %v1675 = vunpack.c.l.b16 %v1314
        %v1676 = vunpack.c.h.b16 %v1314
        %v1677 = vunpack.c.l.b16 %v1315
        %v1678 = vunpack.c.h.b16 %v1315
        %v1679 = vunpack.c.l.b16 %v1316
        %v1680 = vunpack.c.h.b16 %v1316
        %v1681 = vunpack.c.l.b16 %v1317
        %v1682 = vunpack.c.h.b16 %v1317
        %v1683 = vunpack.c.l.b16 %v1318
        %v1684 = vunpack.c.h.b16 %v1318
        %v1685 = vunpack.c.l.b16 %v1319
        %v1686 = vunpack.c.h.b16 %v1319
        %v1687 = vunpack.c.l.b16 %v1320
        %v1688 = vunpack.c.h.b16 %v1320
        %v1689 = vunpack.c.l.b16 %v1321
        %v1690 = vunpack.c.h.b16 %v1321
        %v1691 = vunpack.c.l.b16 %v1322
        %v1692 = vunpack.c.h.b16 %v1322
        %v1693 = vunpack.c.l.b16 %v1323
        %v1694 = vunpack.c.h.b16 %v1323
        %v1695 = vunpack.c.l.b16 %v1324
        %v1696 = vunpack.c.h.b16 %v1324
        %v1697 = vunpack.c.l.b16 %v1325
        %v1698 = vunpack.c.h.b16 %v1325
        %v1699 = vunpack.c.l.b16 %v1326
        %v1700 = vunpack.c.h.b16 %v1326
        %v1701 = vunpack.c.l.b16 %v1327
        %v1702 = vunpack.c.h.b16 %v1327
        %v1703 = vunpack.c.l.b16 %v1328
        %v1704 = vunpack.c.h.b16 %v1328
        %v1705 = vunpack.c.l.b16 %v1329
        %v1706 = vunpack.c.h.b16 %v1329
        %v1707 = vunpack.c.l.b16 %v1330
        %v1708 = vunpack.c.h.b16 %v1330
        %v1709 = vunpack.c.l.b16 %v1331
        %v1710 = vunpack.c.h.b16 %v1331
        %v1711 = vunpack.c.l.b16 %v1332
        %v1712 = vunpack.c.h.b16 %v1332
        %v1713 = vunpack.c.l.b16 %v1333
        %v1714 = vunpack.c.h.b16 %v1333
        %v1715 = vunpack.c.l.b16 %v1334
        %v1716 = vunpack.c.h.b16 %v1334
        %v1717 = vunpack.c.l.b16 %v1335
        %v1718 = vunpack.c.h.b16 %v1335
        %v1719 = vunpack.c.l.b16 %v1336
        %v1720 = vunpack.c.h.b16 %v1336
        %v1721 = vpack.c.b16 %v1469, %v1465
        %v1722 = vpack.c.b16 %v1470, %v1466
        %v1723 = vpack.c.b16 %v1471, %v1467
        %v1724 = vpack.c.b16 %v1472, %v1468
        %v1725 = vpack.c.b16 %v1477, %v1473
        %v1726 = vpack.c.b16 %v1478, %v1474
        %v1727 = vpack.c.b16 %v1479, %v1475
        %v1728 = vpack.c.b16 %v1480, %v1476
        %v1729 = vpack.c.b16 %v1485, %v1481
        %v1730 = vpack.c.b16 %v1486, %v1482
        %v1731 = vpack.c.b16 %v1487, %v1483
        %v1732 = vpack.c.b16 %v1488, %v1484
        %v1733 = vpack.c.b16 %v1493, %v1489
        %v1734 = vpack.c.b16 %v1494, %v1490
        %v1735 = vpack.c.b16 %v1495, %v1491
        %v1736 = vpack.c.b16 %v1496, %v1492
        %v1737 = vpack.c.b16 %v1501, %v1497
        %v1738 = vpack.c.b16 %v1502, %v1498
        %v1739 = vpack.c.b16 %v1503, %v1499
        %v1740 = vpack.c.b16 %v1504, %v1500
        %v1741 = vpack.c.b16 %v1509, %v1505
        %v1742 = vpack.c.b16 %v1510, %v1506
        %v1743 = vpack.c.b16 %v1511, %v1507
        %v1744 = vpack.c.b16 %v1512, %v1508
        %v1745 = vpack.c.b16 %v1517, %v1513
        %v1746 = vpack.c.b16 %v1518, %v1514
        %v1747 = vpack.c.b16 %v1519, %v1515
        %v1748 = vpack.c.b16 %v1520, %v1516
        %v1749 = vpack.c.b16 %v1525, %v1521
        %v1750 = vpack.c.b16 %v1526, %v1522
        %v1751 = vpack.c.b16 %v1527, %v1523
        %v1752 = vpack.c.b16 %v1528, %v1524
        %v1753 = vpack.c.b16 %v1533, %v1529
        %v1754 = vpack.c.b16 %v1534, %v1530
        %v1755 = vpack.c.b16 %v1535, %v1531
        %v1756 = vpack.c.b16 %v1536, %v1532
        %v1757 = vpack.c.b16 %v1541, %v1537
        %v1758 = vpack.c.b16 %v1542, %v1538
        %v1759 = vpack.c.b16 %v1543, %v1539
        %v1760 = vpack.c.b16 %v1544, %v1540
        %v1761 = vpack.c.b16 %v1549, %v1545
        %v1762 = vpack.c.b16 %v1550, %v1546
        %v1763 = vpack.c.b16 %v1551, %v1547
        %v1764 = vpack.c.b16 %v1552, %v1548
        %v1765 = vpack.c.b16 %v1557, %v1553
        %v1766 = vpack.c.b16 %v1558, %v1554
        %v1767 = vpack.c.b16 %v1559, %v1555
        %v1768 = vpack.c.b16 %v1560, %v1556
        %v1769 = vpack.c.b16 %v1565, %v1561
        %v1770 = vpack.c.b16 %v1566, %v1562
        %v1771 = vpack.c.b16 %v1567, %v1563
        %v1772 = vpack.c.b16 %v1568, %v1564
        %v1773 = vpack.c.b16 %v1573, %v1569
        %v1774 = vpack.c.b16 %v1574, %v1570
        %v1775 = vpack.c.b16 %v1575, %v1571
        %v1776 = vpack.c.b16 %v1576, %v1572
        %v1777 = vpack.c.b16 %v1581, %v1577
        %v1778 = vpack.c.b16 %v1582, %v1578
        %v1779 = vpack.c.b16 %v1583, %v1579
        %v1780 = vpack.c.b16 %v1584, %v1580
        %v1781 = vpack.c.b16 %v1589, %v1585
        %v1782 = vpack.c.b16 %v1590, %v1586
        %v1783 = vpack.c.b16 %v1591, %v1587
        %v1784 = vpack.c.b16 %v1592, %v1588
        %v1785 = vpack.c.b16 %v1597, %v1593
        %v1786 = vpack.c.b16 %v1598, %v1594
        %v1787 = vpack.c.b16 %v1599, %v1595
        %v1788 = vpack.c.b16 %v1600, %v1596
        %v1789 = vpack.c.b16 %v1605, %v1601
        %v1790 = vpack.c.b16 %v1606, %v1602
        %v1791 = vpack.c.b16 %v1607, %v1603
        %v1792 = vpack.c.b16 %v1608, %v1604
        %v1793 = vpack.c.b16 %v1613, %v1609
        %v1794 = vpack.c.b16 %v1614, %v1610
        %v1795 = vpack.c.b16 %v1615, %v1611
        %v1796 = vpack.c.b16 %v1616, %v1612
        %v1797 = vpack.c.b16 %v1621, %v1617
        %v1798 = vpack.c.b16 %v1622, %v1618
        %v1799 = vpack.c.b16 %v1623, %v1619
        %v1800 = vpack.c.b16 %v1624, %v1620
        %v1801 = vpack.c.b16 %v1629, %v1625
        %v1802 = vpack.c.b16 %v1630, %v1626
        %v1803 = vpack.c.b16 %v1631, %v1627
        %v1804 = vpack.c.b16 %v1632, %v1628
        %v1805 = vpack.c.b16 %v1637, %v1633
        %v1806 = vpack.c.b16 %v1638, %v1634
        %v1807 = vpack.c.b16 %v1639, %v1635
        %v1808 = vpack.c.b16 %v1640, %v1636
        %v1809 = vpack.c.b16 %v1645, %v1641
        %v1810 = vpack.c.b16 %v1646, %v1642
        %v1811 = vpack.c.b16 %v1647, %v1643
        %v1812 = vpack.c.b16 %v1648, %v1644
        %v1813 = vpack.c.b16 %v1653, %v1649
        %v1814 = vpack.c.b16 %v1654, %v1650
        %v1815 = vpack.c.b16 %v1655, %v1651
        %v1816 = vpack.c.b16 %v1656, %v1652
        %v1817 = vpack.c.b16 %v1661, %v1657
        %v1818 = vpack.c.b16 %v1662, %v1658
        %v1819 = vpack.c.b16 %v1663, %v1659
        %v1820 = vpack.c.b16 %v1664, %v1660
        %v1821 = vpack.c.b16 %v1669, %v1665
        %v1822 = vpack.c.b16 %v1670, %v1666
        %v1823 = vpack.c.b16 %v1671, %v1667
        %v1824 = vpack.c.b16 %v1672, %v1668
        %v1825 = vpack.c.b16 %v1677, %v1673
        %v1826 = vpack.c.b16 %v1678, %v1674
        %v1827 = vpack.c.b16 %v1679, %v1675
        %v1828 = vpack.c.b16 %v1680, %v1676
        %v1829 = vpack.c.b16 %v1685, %v1681
        %v1830 = vpack.c.b16 %v1686, %v1682
        %v1831 = vpack.c.b16 %v1687, %v1683
        %v1832 = vpack.c.b16 %v1688, %v1684
        %v1833 = vpack.c.b16 %v1693, %v1689
        %v1834 = vpack.c.b16 %v1694, %v1690
        %v1835 = vpack.c.b16 %v1695, %v1691
        %v1836 = vpack.c.b16 %v1696, %v1692
        %v1837 = vpack.c.b16 %v1701, %v1697
        %v1838 = vpack.c.b16 %v1702, %v1698
        %v1839 = vpack.c.b16 %v1703, %v1699
        %v1840 = vpack.c.b16 %v1704, %v1700
        %v1841 = vpack.c.b16 %v1709, %v1705
        %v1842 = vpack.c.b16 %v1710, %v1706
        %v1843 = vpack.c.b16 %v1711, %v1707
        %v1844 = vpack.c.b16 %v1712, %v1708
        %v1845 = vpack.c.b16 %v1717, %v1713
        %v1846 = vpack.c.b16 %v1718, %v1714
        %v1847 = vpack.c.b16 %v1719, %v1715
        %v1848 = vpack.c.b16 %v1720, %v1716
        %1977 = vmatpush.bf16.msra.mxu0 %v1749
        %1978 = vmatpush.bf16.msra.mxu0 %v1745
        %1979 = vmatpush.bf16.msra.mxu0 %v1741
        %1980 = vmatpush.bf16.msra.mxu0 %v1737
        %1981 = vmatpush.bf16.msra.mxu0 %v1733
        %1982 = vmatpush.bf16.msra.mxu0 %v1729
        %1983 = vmatpush.bf16.msra.mxu0 %v1725
        %1984 = vmatpush.bf16.msra.mxu0 %v1721
        %1985 = vmatmul.bf16.gmra.mxu0 %v1204
        %v1986 = vpop.f32.mrf.mxu0
        %v1987 = vadd.f32 0.0, %v1986
        %v1988 = vpop.f32.mrf.mxu0
        %v1989 = vadd.f32 0.0, %v1988
        %1990 = vdwg.mxu0
        %1991 = vmatpush.bf16.msra.mxu0 %v1781
        %1992 = vmatpush.bf16.msra.mxu0 %v1777
        %1993 = vmatpush.bf16.msra.mxu0 %v1773
        %1994 = vmatpush.bf16.msra.mxu0 %v1769
        %1995 = vmatpush.bf16.msra.mxu0 %v1765
        %1996 = vmatpush.bf16.msra.mxu0 %v1761
        %1997 = vmatpush.bf16.msra.mxu0 %v1757
        %1998 = vmatpush.bf16.msra.mxu0 %v1753
        %1999 = vmatmul.bf16.gmra.mxu0 %v1205
        %v2000 = vpop.f32.mrf.mxu0
        %v2001 = vadd.f32 %v1987, %v2000
        %v2002 = vpop.f32.mrf.mxu0
        %v2003 = vadd.f32 %v1989, %v2002
        %2004 = vdwg.mxu0
        %2005 = vmatpush.bf16.msra.mxu0 %v1813
        %2006 = vmatpush.bf16.msra.mxu0 %v1809
        %2007 = vmatpush.bf16.msra.mxu0 %v1805
        %2008 = vmatpush.bf16.msra.mxu0 %v1801
        %2009 = vmatpush.bf16.msra.mxu0 %v1797
        %2010 = vmatpush.bf16.msra.mxu0 %v1793
        %2011 = vmatpush.bf16.msra.mxu0 %v1789
        %2012 = vmatpush.bf16.msra.mxu0 %v1785
        %2013 = vmatmul.bf16.gmra.mxu0 %v1206
        %v2014 = vpop.f32.mrf.mxu0
        %v2015 = vadd.f32 %v2001, %v2014
        %v2016 = vpop.f32.mrf.mxu0
        %v2017 = vadd.f32 %v2003, %v2016
        %2018 = vdwg.mxu0
        %2019 = vmatpush.bf16.msra.mxu0 %v1845
        %2020 = vmatpush.bf16.msra.mxu0 %v1841
        %2021 = vmatpush.bf16.msra.mxu0 %v1837
        %2022 = vmatpush.bf16.msra.mxu0 %v1833
        %2023 = vmatpush.bf16.msra.mxu0 %v1829
        %2024 = vmatpush.bf16.msra.mxu0 %v1825
        %2025 = vmatpush.bf16.msra.mxu0 %v1821
        %2026 = vmatpush.bf16.msra.mxu0 %v1817
        %2027 = vmatmul.bf16.gmra.mxu0 %v1207
        %v2028 = vpop.f32.mrf.mxu0
        %v2029 = vadd.f32 %v2015, %v2028
        %v2030 = vpop.f32.mrf.mxu0
        %v2031 = vadd.f32 %v2017, %v2030
        %2032 = vdwg.mxu0
        %2033 = vmatpush.bf16.msra.mxu0 %v1750
        %2034 = vmatpush.bf16.msra.mxu0 %v1746
        %2035 = vmatpush.bf16.msra.mxu0 %v1742
        %2036 = vmatpush.bf16.msra.mxu0 %v1738
        %2037 = vmatpush.bf16.msra.mxu0 %v1734
        %2038 = vmatpush.bf16.msra.mxu0 %v1730
        %2039 = vmatpush.bf16.msra.mxu0 %v1726
        %2040 = vmatpush.bf16.msra.mxu0 %v1722
        %2041 = vmatmul.bf16.gmra.mxu0 %v1204
        %v2042 = vpop.f32.mrf.mxu0
        %v2043 = vadd.f32 0.0, %v2042
        %v2044 = vpop.f32.mrf.mxu0
        %v2045 = vadd.f32 0.0, %v2044
        %2046 = vdwg.mxu0
        %2047 = vmatpush.bf16.msra.mxu0 %v1782
        %2048 = vmatpush.bf16.msra.mxu0 %v1778
        %2049 = vmatpush.bf16.msra.mxu0 %v1774
        %2050 = vmatpush.bf16.msra.mxu0 %v1770
        %2051 = vmatpush.bf16.msra.mxu0 %v1766
        %2052 = vmatpush.bf16.msra.mxu0 %v1762
        %2053 = vmatpush.bf16.msra.mxu0 %v1758
        %2054 = vmatpush.bf16.msra.mxu0 %v1754
        %2055 = vmatmul.bf16.gmra.mxu0 %v1205
        %v2056 = vpop.f32.mrf.mxu0
        %v2057 = vadd.f32 %v2043, %v2056
        %v2058 = vpop.f32.mrf.mxu0
        %v2059 = vadd.f32 %v2045, %v2058
        %2060 = vdwg.mxu0
        %2061 = vmatpush.bf16.msra.mxu0 %v1814
        %2062 = vmatpush.bf16.msra.mxu0 %v1810
        %2063 = vmatpush.bf16.msra.mxu0 %v1806
        %2064 = vmatpush.bf16.msra.mxu0 %v1802
        %2065 = vmatpush.bf16.msra.mxu0 %v1798
        %2066 = vmatpush.bf16.msra.mxu0 %v1794
        %2067 = vmatpush.bf16.msra.mxu0 %v1790
        %2068 = vmatpush.bf16.msra.mxu0 %v1786
        %2069 = vmatmul.bf16.gmra.mxu0 %v1206
        %v2070 = vpop.f32.mrf.mxu0
        %v2071 = vadd.f32 %v2057, %v2070
        %v2072 = vpop.f32.mrf.mxu0
        %v2073 = vadd.f32 %v2059, %v2072
        %2074 = vdwg.mxu0
        %2075 = vmatpush.bf16.msra.mxu0 %v1846
        %2076 = vmatpush.bf16.msra.mxu0 %v1842
        %2077 = vmatpush.bf16.msra.mxu0 %v1838
        %2078 = vmatpush.bf16.msra.mxu0 %v1834
        %2079 = vmatpush.bf16.msra.mxu0 %v1830
        %2080 = vmatpush.bf16.msra.mxu0 %v1826
        %2081 = vmatpush.bf16.msra.mxu0 %v1822
        %2082 = vmatpush.bf16.msra.mxu0 %v1818
        %2083 = vmatmul.bf16.gmra.mxu0 %v1207
        %v2084 = vpop.f32.mrf.mxu0
        %v2085 = vadd.f32 %v2071, %v2084
        %v2086 = vpop.f32.mrf.mxu0
        %v2087 = vadd.f32 %v2073, %v2086
        %2088 = vdwg.mxu0
        %2089 = vmatpush.bf16.msra.mxu0 %v1751
        %2090 = vmatpush.bf16.msra.mxu0 %v1747
        %2091 = vmatpush.bf16.msra.mxu0 %v1743
        %2092 = vmatpush.bf16.msra.mxu0 %v1739
        %2093 = vmatpush.bf16.msra.mxu0 %v1735
        %2094 = vmatpush.bf16.msra.mxu0 %v1731
        %2095 = vmatpush.bf16.msra.mxu0 %v1727
        %2096 = vmatpush.bf16.msra.mxu0 %v1723
        %2097 = vmatmul.bf16.gmra.mxu0 %v1204
        %v2098 = vpop.f32.mrf.mxu0
        %v2099 = vadd.f32 0.0, %v2098
        %v2100 = vpop.f32.mrf.mxu0
        %v2101 = vadd.f32 0.0, %v2100
        %2102 = vdwg.mxu0
        %2103 = vmatpush.bf16.msra.mxu0 %v1783
        %2104 = vmatpush.bf16.msra.mxu0 %v1779
        %2105 = vmatpush.bf16.msra.mxu0 %v1775
        %2106 = vmatpush.bf16.msra.mxu0 %v1771
        %2107 = vmatpush.bf16.msra.mxu0 %v1767
        %2108 = vmatpush.bf16.msra.mxu0 %v1763
        %2109 = vmatpush.bf16.msra.mxu0 %v1759
        %2110 = vmatpush.bf16.msra.mxu0 %v1755
        %2111 = vmatmul.bf16.gmra.mxu0 %v1205
        %v2112 = vpop.f32.mrf.mxu0
        %v2113 = vadd.f32 %v2099, %v2112
        %v2114 = vpop.f32.mrf.mxu0
        %v2115 = vadd.f32 %v2101, %v2114
        %2116 = vdwg.mxu0
        %2117 = vmatpush.bf16.msra.mxu0 %v1815
        %2118 = vmatpush.bf16.msra.mxu0 %v1811
        %2119 = vmatpush.bf16.msra.mxu0 %v1807
        %2120 = vmatpush.bf16.msra.mxu0 %v1803
        %2121 = vmatpush.bf16.msra.mxu0 %v1799
        %2122 = vmatpush.bf16.msra.mxu0 %v1795
        %2123 = vmatpush.bf16.msra.mxu0 %v1791
        %2124 = vmatpush.bf16.msra.mxu0 %v1787
        %2125 = vmatmul.bf16.gmra.mxu0 %v1206
        %v2126 = vpop.f32.mrf.mxu0
        %v2127 = vadd.f32 %v2113, %v2126
        %v2128 = vpop.f32.mrf.mxu0
        %v2129 = vadd.f32 %v2115, %v2128
        %2130 = vdwg.mxu0
        %2131 = vmatpush.bf16.msra.mxu0 %v1847
        %2132 = vmatpush.bf16.msra.mxu0 %v1843
        %2133 = vmatpush.bf16.msra.mxu0 %v1839
        %2134 = vmatpush.bf16.msra.mxu0 %v1835
        %2135 = vmatpush.bf16.msra.mxu0 %v1831
        %2136 = vmatpush.bf16.msra.mxu0 %v1827
        %2137 = vmatpush.bf16.msra.mxu0 %v1823
        %2138 = vmatpush.bf16.msra.mxu0 %v1819
        %2139 = vmatmul.bf16.gmra.mxu0 %v1207
        %v2140 = vpop.f32.mrf.mxu0
        %v2141 = vadd.f32 %v2127, %v2140
        %v2142 = vpop.f32.mrf.mxu0
        %v2143 = vadd.f32 %v2129, %v2142
        %2144 = vdwg.mxu0
        %2145 = vmatpush.bf16.msra.mxu0 %v1752
        %2146 = vmatpush.bf16.msra.mxu0 %v1748
        %2147 = vmatpush.bf16.msra.mxu0 %v1744
        %2148 = vmatpush.bf16.msra.mxu0 %v1740
        %2149 = vmatpush.bf16.msra.mxu0 %v1736
        %2150 = vmatpush.bf16.msra.mxu0 %v1732
        %2151 = vmatpush.bf16.msra.mxu0 %v1728
        %2152 = vmatpush.bf16.msra.mxu0 %v1724
        %2153 = vmatmul.bf16.gmra.mxu0 %v1204
        %v2154 = vpop.f32.mrf.mxu0
        %v2155 = vadd.f32 0.0, %v2154
        %v2156 = vpop.f32.mrf.mxu0
        %v2157 = vadd.f32 0.0, %v2156
        %2158 = vdwg.mxu0
        %2159 = vmatpush.bf16.msra.mxu0 %v1784
        %2160 = vmatpush.bf16.msra.mxu0 %v1780
        %2161 = vmatpush.bf16.msra.mxu0 %v1776
        %2162 = vmatpush.bf16.msra.mxu0 %v1772
        %2163 = vmatpush.bf16.msra.mxu0 %v1768
        %2164 = vmatpush.bf16.msra.mxu0 %v1764
        %2165 = vmatpush.bf16.msra.mxu0 %v1760
        %2166 = vmatpush.bf16.msra.mxu0 %v1756
        %2167 = vmatmul.bf16.gmra.mxu0 %v1205
        %v2168 = vpop.f32.mrf.mxu0
        %v2169 = vadd.f32 %v2155, %v2168
        %v2170 = vpop.f32.mrf.mxu0
        %v2171 = vadd.f32 %v2157, %v2170
        %2172 = vdwg.mxu0
        %2173 = vmatpush.bf16.msra.mxu0 %v1816
        %2174 = vmatpush.bf16.msra.mxu0 %v1812
        %2175 = vmatpush.bf16.msra.mxu0 %v1808
        %2176 = vmatpush.bf16.msra.mxu0 %v1804
        %2177 = vmatpush.bf16.msra.mxu0 %v1800
        %2178 = vmatpush.bf16.msra.mxu0 %v1796
        %2179 = vmatpush.bf16.msra.mxu0 %v1792
        %2180 = vmatpush.bf16.msra.mxu0 %v1788
        %2181 = vmatmul.bf16.gmra.mxu0 %v1206
        %v2182 = vpop.f32.mrf.mxu0
        %v2183 = vadd.f32 %v2169, %v2182
        %v2184 = vpop.f32.mrf.mxu0
        %v2185 = vadd.f32 %v2171, %v2184
        %2186 = vdwg.mxu0
        %2187 = vmatpush.bf16.msra.mxu0 %v1848
        %2188 = vmatpush.bf16.msra.mxu0 %v1844
        %2189 = vmatpush.bf16.msra.mxu0 %v1840
        %2190 = vmatpush.bf16.msra.mxu0 %v1836
        %2191 = vmatpush.bf16.msra.mxu0 %v1832
        %2192 = vmatpush.bf16.msra.mxu0 %v1828
        %2193 = vmatpush.bf16.msra.mxu0 %v1824
        %2194 = vmatpush.bf16.msra.mxu0 %v1820
        %2195 = vmatmul.bf16.gmra.mxu0 %v1207
        %v2196 = vpop.f32.mrf.mxu0
        %v2197 = vadd.f32 %v2183, %v2196
        %v2198 = vpop.f32.mrf.mxu0
        %v2199 = vadd.f32 %v2185, %v2198
        %2200 = vdwg.mxu0
        %v2329 = vunpack.c.l.b16 %v1076
        %v2330 = vunpack.c.h.b16 %v1076
        %v2331 = vunpack.c.l.b16 %v1077
        %v2332 = vunpack.c.h.b16 %v1077
        %v2333 = vunpack.c.l.b16 %v1078
        %v2334 = vunpack.c.h.b16 %v1078
        %v2335 = vunpack.c.l.b16 %v1079
        %v2336 = vunpack.c.h.b16 %v1079
        %v2337 = vunpack.c.l.b16 %v1080
        %v2338 = vunpack.c.h.b16 %v1080
        %v2339 = vunpack.c.l.b16 %v1081
        %v2340 = vunpack.c.h.b16 %v1081
        %v2341 = vunpack.c.l.b16 %v1082
        %v2342 = vunpack.c.h.b16 %v1082
        %v2343 = vunpack.c.l.b16 %v1083
        %v2344 = vunpack.c.h.b16 %v1083
        %v2345 = vunpack.c.l.b16 %v1084
        %v2346 = vunpack.c.h.b16 %v1084
        %v2347 = vunpack.c.l.b16 %v1085
        %v2348 = vunpack.c.h.b16 %v1085
        %v2349 = vunpack.c.l.b16 %v1086
        %v2350 = vunpack.c.h.b16 %v1086
        %v2351 = vunpack.c.l.b16 %v1087
        %v2352 = vunpack.c.h.b16 %v1087
        %v2353 = vunpack.c.l.b16 %v1088
        %v2354 = vunpack.c.h.b16 %v1088
        %v2355 = vunpack.c.l.b16 %v1089
        %v2356 = vunpack.c.h.b16 %v1089
        %v2357 = vunpack.c.l.b16 %v1090
        %v2358 = vunpack.c.h.b16 %v1090
        %v2359 = vunpack.c.l.b16 %v1091
        %v2360 = vunpack.c.h.b16 %v1091
        %v2361 = vunpack.c.l.b16 %v1092
        %v2362 = vunpack.c.h.b16 %v1092
        %v2363 = vunpack.c.l.b16 %v1093
        %v2364 = vunpack.c.h.b16 %v1093
        %v2365 = vunpack.c.l.b16 %v1094
        %v2366 = vunpack.c.h.b16 %v1094
        %v2367 = vunpack.c.l.b16 %v1095
        %v2368 = vunpack.c.h.b16 %v1095
        %v2369 = vunpack.c.l.b16 %v1096
        %v2370 = vunpack.c.h.b16 %v1096
        %v2371 = vunpack.c.l.b16 %v1097
        %v2372 = vunpack.c.h.b16 %v1097
        %v2373 = vunpack.c.l.b16 %v1098
        %v2374 = vunpack.c.h.b16 %v1098
        %v2375 = vunpack.c.l.b16 %v1099
        %v2376 = vunpack.c.h.b16 %v1099
        %v2377 = vunpack.c.l.b16 %v1100
        %v2378 = vunpack.c.h.b16 %v1100
        %v2379 = vunpack.c.l.b16 %v1101
        %v2380 = vunpack.c.h.b16 %v1101
        %v2381 = vunpack.c.l.b16 %v1102
        %v2382 = vunpack.c.h.b16 %v1102
        %v2383 = vunpack.c.l.b16 %v1103
        %v2384 = vunpack.c.h.b16 %v1103
        %v2385 = vunpack.c.l.b16 %v1104
        %v2386 = vunpack.c.h.b16 %v1104
        %v2387 = vunpack.c.l.b16 %v1105
        %v2388 = vunpack.c.h.b16 %v1105
        %v2389 = vunpack.c.l.b16 %v1106
        %v2390 = vunpack.c.h.b16 %v1106
        %v2391 = vunpack.c.l.b16 %v1107
        %v2392 = vunpack.c.h.b16 %v1107
        %v2393 = vunpack.c.l.b16 %v1108
        %v2394 = vunpack.c.h.b16 %v1108
        %v2395 = vunpack.c.l.b16 %v1109
        %v2396 = vunpack.c.h.b16 %v1109
        %v2397 = vunpack.c.l.b16 %v1110
        %v2398 = vunpack.c.h.b16 %v1110
        %v2399 = vunpack.c.l.b16 %v1111
        %v2400 = vunpack.c.h.b16 %v1111
        %v2401 = vunpack.c.l.b16 %v1112
        %v2402 = vunpack.c.h.b16 %v1112
        %v2403 = vunpack.c.l.b16 %v1113
        %v2404 = vunpack.c.h.b16 %v1113
        %v2405 = vunpack.c.l.b16 %v1114
        %v2406 = vunpack.c.h.b16 %v1114
        %v2407 = vunpack.c.l.b16 %v1115
        %v2408 = vunpack.c.h.b16 %v1115
        %v2409 = vunpack.c.l.b16 %v1116
        %v2410 = vunpack.c.h.b16 %v1116
        %v2411 = vunpack.c.l.b16 %v1117
        %v2412 = vunpack.c.h.b16 %v1117
        %v2413 = vunpack.c.l.b16 %v1118
        %v2414 = vunpack.c.h.b16 %v1118
        %v2415 = vunpack.c.l.b16 %v1119
        %v2416 = vunpack.c.h.b16 %v1119
        %v2417 = vunpack.c.l.b16 %v1120
        %v2418 = vunpack.c.h.b16 %v1120
        %v2419 = vunpack.c.l.b16 %v1121
        %v2420 = vunpack.c.h.b16 %v1121
        %v2421 = vunpack.c.l.b16 %v1122
        %v2422 = vunpack.c.h.b16 %v1122
        %v2423 = vunpack.c.l.b16 %v1123
        %v2424 = vunpack.c.h.b16 %v1123
        %v2425 = vunpack.c.l.b16 %v1124
        %v2426 = vunpack.c.h.b16 %v1124
        %v2427 = vunpack.c.l.b16 %v1125
        %v2428 = vunpack.c.h.b16 %v1125
        %v2429 = vunpack.c.l.b16 %v1126
        %v2430 = vunpack.c.h.b16 %v1126
        %v2431 = vunpack.c.l.b16 %v1127
        %v2432 = vunpack.c.h.b16 %v1127
        %v2433 = vunpack.c.l.b16 %v1128
        %v2434 = vunpack.c.h.b16 %v1128
        %v2435 = vunpack.c.l.b16 %v1129
        %v2436 = vunpack.c.h.b16 %v1129
        %v2437 = vunpack.c.l.b16 %v1130
        %v2438 = vunpack.c.h.b16 %v1130
        %v2439 = vunpack.c.l.b16 %v1131
        %v2440 = vunpack.c.h.b16 %v1131
        %v2441 = vunpack.c.l.b16 %v1132
        %v2442 = vunpack.c.h.b16 %v1132
        %v2443 = vunpack.c.l.b16 %v1133
        %v2444 = vunpack.c.h.b16 %v1133
        %v2445 = vunpack.c.l.b16 %v1134
        %v2446 = vunpack.c.h.b16 %v1134
        %v2447 = vunpack.c.l.b16 %v1135
        %v2448 = vunpack.c.h.b16 %v1135
        %v2449 = vunpack.c.l.b16 %v1136
        %v2450 = vunpack.c.h.b16 %v1136
        %v2451 = vunpack.c.l.b16 %v1137
        %v2452 = vunpack.c.h.b16 %v1137
        %v2453 = vunpack.c.l.b16 %v1138
        %v2454 = vunpack.c.h.b16 %v1138
        %v2455 = vunpack.c.l.b16 %v1139
        %v2456 = vunpack.c.h.b16 %v1139
        %v2457 = vunpack.c.l.b16 %v1140
        %v2458 = vunpack.c.h.b16 %v1140
        %v2459 = vunpack.c.l.b16 %v1141
        %v2460 = vunpack.c.h.b16 %v1141
        %v2461 = vunpack.c.l.b16 %v1142
        %v2462 = vunpack.c.h.b16 %v1142
        %v2463 = vunpack.c.l.b16 %v1143
        %v2464 = vunpack.c.h.b16 %v1143
        %v2465 = vunpack.c.l.b16 %v1144
        %v2466 = vunpack.c.h.b16 %v1144
        %v2467 = vunpack.c.l.b16 %v1145
        %v2468 = vunpack.c.h.b16 %v1145
        %v2469 = vunpack.c.l.b16 %v1146
        %v2470 = vunpack.c.h.b16 %v1146
        %v2471 = vunpack.c.l.b16 %v1147
        %v2472 = vunpack.c.h.b16 %v1147
        %v2473 = vunpack.c.l.b16 %v1148
        %v2474 = vunpack.c.h.b16 %v1148
        %v2475 = vunpack.c.l.b16 %v1149
        %v2476 = vunpack.c.h.b16 %v1149
        %v2477 = vunpack.c.l.b16 %v1150
        %v2478 = vunpack.c.h.b16 %v1150
        %v2479 = vunpack.c.l.b16 %v1151
        %v2480 = vunpack.c.h.b16 %v1151
        %v2481 = vunpack.c.l.b16 %v1152
        %v2482 = vunpack.c.h.b16 %v1152
        %v2483 = vunpack.c.l.b16 %v1153
        %v2484 = vunpack.c.h.b16 %v1153
        %v2485 = vunpack.c.l.b16 %v1154
        %v2486 = vunpack.c.h.b16 %v1154
        %v2487 = vunpack.c.l.b16 %v1155
        %v2488 = vunpack.c.h.b16 %v1155
        %v2489 = vunpack.c.l.b16 %v1156
        %v2490 = vunpack.c.h.b16 %v1156
        %v2491 = vunpack.c.l.b16 %v1157
        %v2492 = vunpack.c.h.b16 %v1157
        %v2493 = vunpack.c.l.b16 %v1158
        %v2494 = vunpack.c.h.b16 %v1158
        %v2495 = vunpack.c.l.b16 %v1159
        %v2496 = vunpack.c.h.b16 %v1159
        %v2497 = vunpack.c.l.b16 %v1160
        %v2498 = vunpack.c.h.b16 %v1160
        %v2499 = vunpack.c.l.b16 %v1161
        %v2500 = vunpack.c.h.b16 %v1161
        %v2501 = vunpack.c.l.b16 %v1162
        %v2502 = vunpack.c.h.b16 %v1162
        %v2503 = vunpack.c.l.b16 %v1163
        %v2504 = vunpack.c.h.b16 %v1163
        %v2505 = vunpack.c.l.b16 %v1164
        %v2506 = vunpack.c.h.b16 %v1164
        %v2507 = vunpack.c.l.b16 %v1165
        %v2508 = vunpack.c.h.b16 %v1165
        %v2509 = vunpack.c.l.b16 %v1166
        %v2510 = vunpack.c.h.b16 %v1166
        %v2511 = vunpack.c.l.b16 %v1167
        %v2512 = vunpack.c.h.b16 %v1167
        %v2513 = vunpack.c.l.b16 %v1168
        %v2514 = vunpack.c.h.b16 %v1168
        %v2515 = vunpack.c.l.b16 %v1169
        %v2516 = vunpack.c.h.b16 %v1169
        %v2517 = vunpack.c.l.b16 %v1170
        %v2518 = vunpack.c.h.b16 %v1170
        %v2519 = vunpack.c.l.b16 %v1171
        %v2520 = vunpack.c.h.b16 %v1171
        %v2521 = vunpack.c.l.b16 %v1172
        %v2522 = vunpack.c.h.b16 %v1172
        %v2523 = vunpack.c.l.b16 %v1173
        %v2524 = vunpack.c.h.b16 %v1173
        %v2525 = vunpack.c.l.b16 %v1174
        %v2526 = vunpack.c.h.b16 %v1174
        %v2527 = vunpack.c.l.b16 %v1175
        %v2528 = vunpack.c.h.b16 %v1175
        %v2529 = vunpack.c.l.b16 %v1176
        %v2530 = vunpack.c.h.b16 %v1176
        %v2531 = vunpack.c.l.b16 %v1177
        %v2532 = vunpack.c.h.b16 %v1177
        %v2533 = vunpack.c.l.b16 %v1178
        %v2534 = vunpack.c.h.b16 %v1178
        %v2535 = vunpack.c.l.b16 %v1179
        %v2536 = vunpack.c.h.b16 %v1179
        %v2537 = vunpack.c.l.b16 %v1180
        %v2538 = vunpack.c.h.b16 %v1180
        %v2539 = vunpack.c.l.b16 %v1181
        %v2540 = vunpack.c.h.b16 %v1181
        %v2541 = vunpack.c.l.b16 %v1182
        %v2542 = vunpack.c.h.b16 %v1182
        %v2543 = vunpack.c.l.b16 %v1183
        %v2544 = vunpack.c.h.b16 %v1183
        %v2545 = vunpack.c.l.b16 %v1184
        %v2546 = vunpack.c.h.b16 %v1184
        %v2547 = vunpack.c.l.b16 %v1185
        %v2548 = vunpack.c.h.b16 %v1185
        %v2549 = vunpack.c.l.b16 %v1186
        %v2550 = vunpack.c.h.b16 %v1186
        %v2551 = vunpack.c.l.b16 %v1187
        %v2552 = vunpack.c.h.b16 %v1187
        %v2553 = vunpack.c.l.b16 %v1188
        %v2554 = vunpack.c.h.b16 %v1188
        %v2555 = vunpack.c.l.b16 %v1189
        %v2556 = vunpack.c.h.b16 %v1189
        %v2557 = vunpack.c.l.b16 %v1190
        %v2558 = vunpack.c.h.b16 %v1190
        %v2559 = vunpack.c.l.b16 %v1191
        %v2560 = vunpack.c.h.b16 %v1191
        %v2561 = vunpack.c.l.b16 %v1192
        %v2562 = vunpack.c.h.b16 %v1192
        %v2563 = vunpack.c.l.b16 %v1193
        %v2564 = vunpack.c.h.b16 %v1193
        %v2565 = vunpack.c.l.b16 %v1194
        %v2566 = vunpack.c.h.b16 %v1194
        %v2567 = vunpack.c.l.b16 %v1195
        %v2568 = vunpack.c.h.b16 %v1195
        %v2569 = vunpack.c.l.b16 %v1196
        %v2570 = vunpack.c.h.b16 %v1196
        %v2571 = vunpack.c.l.b16 %v1197
        %v2572 = vunpack.c.h.b16 %v1197
        %v2573 = vunpack.c.l.b16 %v1198
        %v2574 = vunpack.c.h.b16 %v1198
        %v2575 = vunpack.c.l.b16 %v1199
        %v2576 = vunpack.c.h.b16 %v1199
        %v2577 = vunpack.c.l.b16 %v1200
        %v2578 = vunpack.c.h.b16 %v1200
        %v2579 = vunpack.c.l.b16 %v1201
        %v2580 = vunpack.c.h.b16 %v1201
        %v2581 = vunpack.c.l.b16 %v1202
        %v2582 = vunpack.c.h.b16 %v1202
        %v2583 = vunpack.c.l.b16 %v1203
        %v2584 = vunpack.c.h.b16 %v1203
        %v2585 = vpack.c.b16 %v2333, %v2329
        %v2586 = vpack.c.b16 %v2334, %v2330
        %v2587 = vpack.c.b16 %v2335, %v2331
        %v2588 = vpack.c.b16 %v2336, %v2332
        %v2589 = vpack.c.b16 %v2341, %v2337
        %v2590 = vpack.c.b16 %v2342, %v2338
        %v2591 = vpack.c.b16 %v2343, %v2339
        %v2592 = vpack.c.b16 %v2344, %v2340
        %v2593 = vpack.c.b16 %v2349, %v2345
        %v2594 = vpack.c.b16 %v2350, %v2346
        %v2595 = vpack.c.b16 %v2351, %v2347
        %v2596 = vpack.c.b16 %v2352, %v2348
        %v2597 = vpack.c.b16 %v2357, %v2353
        %v2598 = vpack.c.b16 %v2358, %v2354
        %v2599 = vpack.c.b16 %v2359, %v2355
        %v2600 = vpack.c.b16 %v2360, %v2356
        %v2601 = vpack.c.b16 %v2365, %v2361
        %v2602 = vpack.c.b16 %v2366, %v2362
        %v2603 = vpack.c.b16 %v2367, %v2363
        %v2604 = vpack.c.b16 %v2368, %v2364
        %v2605 = vpack.c.b16 %v2373, %v2369
        %v2606 = vpack.c.b16 %v2374, %v2370
        %v2607 = vpack.c.b16 %v2375, %v2371
        %v2608 = vpack.c.b16 %v2376, %v2372
        %v2609 = vpack.c.b16 %v2381, %v2377
        %v2610 = vpack.c.b16 %v2382, %v2378
        %v2611 = vpack.c.b16 %v2383, %v2379
        %v2612 = vpack.c.b16 %v2384, %v2380
        %v2613 = vpack.c.b16 %v2389, %v2385
        %v2614 = vpack.c.b16 %v2390, %v2386
        %v2615 = vpack.c.b16 %v2391, %v2387
        %v2616 = vpack.c.b16 %v2392, %v2388
        %v2617 = vpack.c.b16 %v2397, %v2393
        %v2618 = vpack.c.b16 %v2398, %v2394
        %v2619 = vpack.c.b16 %v2399, %v2395
        %v2620 = vpack.c.b16 %v2400, %v2396
        %v2621 = vpack.c.b16 %v2405, %v2401
        %v2622 = vpack.c.b16 %v2406, %v2402
        %v2623 = vpack.c.b16 %v2407, %v2403
        %v2624 = vpack.c.b16 %v2408, %v2404
        %v2625 = vpack.c.b16 %v2413, %v2409
        %v2626 = vpack.c.b16 %v2414, %v2410
        %v2627 = vpack.c.b16 %v2415, %v2411
        %v2628 = vpack.c.b16 %v2416, %v2412
        %v2629 = vpack.c.b16 %v2421, %v2417
        %v2630 = vpack.c.b16 %v2422, %v2418
        %v2631 = vpack.c.b16 %v2423, %v2419
        %v2632 = vpack.c.b16 %v2424, %v2420
        %v2633 = vpack.c.b16 %v2429, %v2425
        %v2634 = vpack.c.b16 %v2430, %v2426
        %v2635 = vpack.c.b16 %v2431, %v2427
        %v2636 = vpack.c.b16 %v2432, %v2428
        %v2637 = vpack.c.b16 %v2437, %v2433
        %v2638 = vpack.c.b16 %v2438, %v2434
        %v2639 = vpack.c.b16 %v2439, %v2435
        %v2640 = vpack.c.b16 %v2440, %v2436
        %v2641 = vpack.c.b16 %v2445, %v2441
        %v2642 = vpack.c.b16 %v2446, %v2442
        %v2643 = vpack.c.b16 %v2447, %v2443
        %v2644 = vpack.c.b16 %v2448, %v2444
        %v2645 = vpack.c.b16 %v2453, %v2449
        %v2646 = vpack.c.b16 %v2454, %v2450
        %v2647 = vpack.c.b16 %v2455, %v2451
        %v2648 = vpack.c.b16 %v2456, %v2452
        %v2649 = vpack.c.b16 %v2461, %v2457
        %v2650 = vpack.c.b16 %v2462, %v2458
        %v2651 = vpack.c.b16 %v2463, %v2459
        %v2652 = vpack.c.b16 %v2464, %v2460
        %v2653 = vpack.c.b16 %v2469, %v2465
        %v2654 = vpack.c.b16 %v2470, %v2466
        %v2655 = vpack.c.b16 %v2471, %v2467
        %v2656 = vpack.c.b16 %v2472, %v2468
        %v2657 = vpack.c.b16 %v2477, %v2473
        %v2658 = vpack.c.b16 %v2478, %v2474
        %v2659 = vpack.c.b16 %v2479, %v2475
        %v2660 = vpack.c.b16 %v2480, %v2476
        %v2661 = vpack.c.b16 %v2485, %v2481
        %v2662 = vpack.c.b16 %v2486, %v2482
        %v2663 = vpack.c.b16 %v2487, %v2483
        %v2664 = vpack.c.b16 %v2488, %v2484
        %v2665 = vpack.c.b16 %v2493, %v2489
        %v2666 = vpack.c.b16 %v2494, %v2490
        %v2667 = vpack.c.b16 %v2495, %v2491
        %v2668 = vpack.c.b16 %v2496, %v2492
        %v2669 = vpack.c.b16 %v2501, %v2497
        %v2670 = vpack.c.b16 %v2502, %v2498
        %v2671 = vpack.c.b16 %v2503, %v2499
        %v2672 = vpack.c.b16 %v2504, %v2500
        %v2673 = vpack.c.b16 %v2509, %v2505
        %v2674 = vpack.c.b16 %v2510, %v2506
        %v2675 = vpack.c.b16 %v2511, %v2507
        %v2676 = vpack.c.b16 %v2512, %v2508
        %v2677 = vpack.c.b16 %v2517, %v2513
        %v2678 = vpack.c.b16 %v2518, %v2514
        %v2679 = vpack.c.b16 %v2519, %v2515
        %v2680 = vpack.c.b16 %v2520, %v2516
        %v2681 = vpack.c.b16 %v2525, %v2521
        %v2682 = vpack.c.b16 %v2526, %v2522
        %v2683 = vpack.c.b16 %v2527, %v2523
        %v2684 = vpack.c.b16 %v2528, %v2524
        %v2685 = vpack.c.b16 %v2533, %v2529
        %v2686 = vpack.c.b16 %v2534, %v2530
        %v2687 = vpack.c.b16 %v2535, %v2531
        %v2688 = vpack.c.b16 %v2536, %v2532
        %v2689 = vpack.c.b16 %v2541, %v2537
        %v2690 = vpack.c.b16 %v2542, %v2538
        %v2691 = vpack.c.b16 %v2543, %v2539
        %v2692 = vpack.c.b16 %v2544, %v2540
        %v2693 = vpack.c.b16 %v2549, %v2545
        %v2694 = vpack.c.b16 %v2550, %v2546
        %v2695 = vpack.c.b16 %v2551, %v2547
        %v2696 = vpack.c.b16 %v2552, %v2548
        %v2697 = vpack.c.b16 %v2557, %v2553
        %v2698 = vpack.c.b16 %v2558, %v2554
        %v2699 = vpack.c.b16 %v2559, %v2555
        %v2700 = vpack.c.b16 %v2560, %v2556
        %v2701 = vpack.c.b16 %v2565, %v2561
        %v2702 = vpack.c.b16 %v2566, %v2562
        %v2703 = vpack.c.b16 %v2567, %v2563
        %v2704 = vpack.c.b16 %v2568, %v2564
        %v2705 = vpack.c.b16 %v2573, %v2569
        %v2706 = vpack.c.b16 %v2574, %v2570
        %v2707 = vpack.c.b16 %v2575, %v2571
        %v2708 = vpack.c.b16 %v2576, %v2572
        %v2709 = vpack.c.b16 %v2581, %v2577
        %v2710 = vpack.c.b16 %v2582, %v2578
        %v2711 = vpack.c.b16 %v2583, %v2579
        %v2712 = vpack.c.b16 %v2584, %v2580
        %2841 = vmatpush.bf16.msra.mxu0 %v2613
        %2842 = vmatpush.bf16.msra.mxu0 %v2609
        %2843 = vmatpush.bf16.msra.mxu0 %v2605
        %2844 = vmatpush.bf16.msra.mxu0 %v2601
        %2845 = vmatpush.bf16.msra.mxu0 %v2597
        %2846 = vmatpush.bf16.msra.mxu0 %v2593
        %2847 = vmatpush.bf16.msra.mxu0 %v2589
        %2848 = vmatpush.bf16.msra.mxu0 %v2585
        %2849 = vmatmul.bf16.gmra.mxu0 %v1072
        %v2850 = vpop.f32.mrf.mxu0
        %v2851 = vadd.f32 %v2029, %v2850
        %v2852 = vpop.f32.mrf.mxu0
        %v2853 = vadd.f32 %v2031, %v2852
        %2854 = vdwg.mxu0
        %2855 = vmatpush.bf16.msra.mxu0 %v2645
        %2856 = vmatpush.bf16.msra.mxu0 %v2641
        %2857 = vmatpush.bf16.msra.mxu0 %v2637
        %2858 = vmatpush.bf16.msra.mxu0 %v2633
        %2859 = vmatpush.bf16.msra.mxu0 %v2629
        %2860 = vmatpush.bf16.msra.mxu0 %v2625
        %2861 = vmatpush.bf16.msra.mxu0 %v2621
        %2862 = vmatpush.bf16.msra.mxu0 %v2617
        %2863 = vmatmul.bf16.gmra.mxu0 %v1073
        %v2864 = vpop.f32.mrf.mxu0
        %v2865 = vadd.f32 %v2851, %v2864
        %v2866 = vpop.f32.mrf.mxu0
        %v2867 = vadd.f32 %v2853, %v2866
        %2868 = vdwg.mxu0
        %2869 = vmatpush.bf16.msra.mxu0 %v2677
        %2870 = vmatpush.bf16.msra.mxu0 %v2673
        %2871 = vmatpush.bf16.msra.mxu0 %v2669
        %2872 = vmatpush.bf16.msra.mxu0 %v2665
        %2873 = vmatpush.bf16.msra.mxu0 %v2661
        %2874 = vmatpush.bf16.msra.mxu0 %v2657
        %2875 = vmatpush.bf16.msra.mxu0 %v2653
        %2876 = vmatpush.bf16.msra.mxu0 %v2649
        %2877 = vmatmul.bf16.gmra.mxu0 %v1074
        %v2878 = vpop.f32.mrf.mxu0
        %v2879 = vadd.f32 %v2865, %v2878
        %v2880 = vpop.f32.mrf.mxu0
        %v2881 = vadd.f32 %v2867, %v2880
        %2882 = vdwg.mxu0
        %2883 = vmatpush.bf16.msra.mxu0 %v2709
        %2884 = vmatpush.bf16.msra.mxu0 %v2705
        %2885 = vmatpush.bf16.msra.mxu0 %v2701
        %2886 = vmatpush.bf16.msra.mxu0 %v2697
        %2887 = vmatpush.bf16.msra.mxu0 %v2693
        %2888 = vmatpush.bf16.msra.mxu0 %v2689
        %2889 = vmatpush.bf16.msra.mxu0 %v2685
        %2890 = vmatpush.bf16.msra.mxu0 %v2681
        %2891 = vmatmul.bf16.gmra.mxu0 %v1075
        %v2892 = vpop.f32.mrf.mxu0
        %v2893 = vadd.f32 %v2879, %v2892
        %v2894 = vpop.f32.mrf.mxu0
        %v2895 = vadd.f32 %v2881, %v2894
        %2896 = vdwg.mxu0
        %2897 = vmatpush.bf16.msra.mxu0 %v2614
        %2898 = vmatpush.bf16.msra.mxu0 %v2610
        %2899 = vmatpush.bf16.msra.mxu0 %v2606
        %2900 = vmatpush.bf16.msra.mxu0 %v2602
        %2901 = vmatpush.bf16.msra.mxu0 %v2598
        %2902 = vmatpush.bf16.msra.mxu0 %v2594
        %2903 = vmatpush.bf16.msra.mxu0 %v2590
        %2904 = vmatpush.bf16.msra.mxu0 %v2586
        %2905 = vmatmul.bf16.gmra.mxu0 %v1072
        %v2906 = vpop.f32.mrf.mxu0
        %v2907 = vadd.f32 %v2085, %v2906
        %v2908 = vpop.f32.mrf.mxu0
        %v2909 = vadd.f32 %v2087, %v2908
        %2910 = vdwg.mxu0
        %2911 = vmatpush.bf16.msra.mxu0 %v2646
        %2912 = vmatpush.bf16.msra.mxu0 %v2642
        %2913 = vmatpush.bf16.msra.mxu0 %v2638
        %2914 = vmatpush.bf16.msra.mxu0 %v2634
        %2915 = vmatpush.bf16.msra.mxu0 %v2630
        %2916 = vmatpush.bf16.msra.mxu0 %v2626
        %2917 = vmatpush.bf16.msra.mxu0 %v2622
        %2918 = vmatpush.bf16.msra.mxu0 %v2618
        %2919 = vmatmul.bf16.gmra.mxu0 %v1073
        %v2920 = vpop.f32.mrf.mxu0
        %v2921 = vadd.f32 %v2907, %v2920
        %v2922 = vpop.f32.mrf.mxu0
        %v2923 = vadd.f32 %v2909, %v2922
        %2924 = vdwg.mxu0
        %2925 = vmatpush.bf16.msra.mxu0 %v2678
        %2926 = vmatpush.bf16.msra.mxu0 %v2674
        %2927 = vmatpush.bf16.msra.mxu0 %v2670
        %2928 = vmatpush.bf16.msra.mxu0 %v2666
        %2929 = vmatpush.bf16.msra.mxu0 %v2662
        %2930 = vmatpush.bf16.msra.mxu0 %v2658
        %2931 = vmatpush.bf16.msra.mxu0 %v2654
        %2932 = vmatpush.bf16.msra.mxu0 %v2650
        %2933 = vmatmul.bf16.gmra.mxu0 %v1074
        %v2934 = vpop.f32.mrf.mxu0
        %v2935 = vadd.f32 %v2921, %v2934
        %v2936 = vpop.f32.mrf.mxu0
        %v2937 = vadd.f32 %v2923, %v2936
        %2938 = vdwg.mxu0
        %2939 = vmatpush.bf16.msra.mxu0 %v2710
        %2940 = vmatpush.bf16.msra.mxu0 %v2706
        %2941 = vmatpush.bf16.msra.mxu0 %v2702
        %2942 = vmatpush.bf16.msra.mxu0 %v2698
        %2943 = vmatpush.bf16.msra.mxu0 %v2694
        %2944 = vmatpush.bf16.msra.mxu0 %v2690
        %2945 = vmatpush.bf16.msra.mxu0 %v2686
        %2946 = vmatpush.bf16.msra.mxu0 %v2682
        %2947 = vmatmul.bf16.gmra.mxu0 %v1075
        %v2948 = vpop.f32.mrf.mxu0
        %v2949 = vadd.f32 %v2935, %v2948
        %v2950 = vpop.f32.mrf.mxu0
        %v2951 = vadd.f32 %v2937, %v2950
        %2952 = vdwg.mxu0
        %2953 = vmatpush.bf16.msra.mxu0 %v2615
        %2954 = vmatpush.bf16.msra.mxu0 %v2611
        %2955 = vmatpush.bf16.msra.mxu0 %v2607
        %2956 = vmatpush.bf16.msra.mxu0 %v2603
        %2957 = vmatpush.bf16.msra.mxu0 %v2599
        %2958 = vmatpush.bf16.msra.mxu0 %v2595
        %2959 = vmatpush.bf16.msra.mxu0 %v2591
        %2960 = vmatpush.bf16.msra.mxu0 %v2587
        %2961 = vmatmul.bf16.gmra.mxu0 %v1072
        %v2962 = vpop.f32.mrf.mxu0
        %v2963 = vadd.f32 %v2141, %v2962
        %v2964 = vpop.f32.mrf.mxu0
        %v2965 = vadd.f32 %v2143, %v2964
        %2966 = vdwg.mxu0
        %2967 = vmatpush.bf16.msra.mxu0 %v2647
        %2968 = vmatpush.bf16.msra.mxu0 %v2643
        %2969 = vmatpush.bf16.msra.mxu0 %v2639
        %2970 = vmatpush.bf16.msra.mxu0 %v2635
        %2971 = vmatpush.bf16.msra.mxu0 %v2631
        %2972 = vmatpush.bf16.msra.mxu0 %v2627
        %2973 = vmatpush.bf16.msra.mxu0 %v2623
        %2974 = vmatpush.bf16.msra.mxu0 %v2619
        %2975 = vmatmul.bf16.gmra.mxu0 %v1073
        %v2976 = vpop.f32.mrf.mxu0
        %v2977 = vadd.f32 %v2963, %v2976
        %v2978 = vpop.f32.mrf.mxu0
        %v2979 = vadd.f32 %v2965, %v2978
        %2980 = vdwg.mxu0
        %2981 = vmatpush.bf16.msra.mxu0 %v2679
        %2982 = vmatpush.bf16.msra.mxu0 %v2675
        %2983 = vmatpush.bf16.msra.mxu0 %v2671
        %2984 = vmatpush.bf16.msra.mxu0 %v2667
        %2985 = vmatpush.bf16.msra.mxu0 %v2663
        %2986 = vmatpush.bf16.msra.mxu0 %v2659
        %2987 = vmatpush.bf16.msra.mxu0 %v2655
        %2988 = vmatpush.bf16.msra.mxu0 %v2651
        %2989 = vmatmul.bf16.gmra.mxu0 %v1074
        %v2990 = vpop.f32.mrf.mxu0
        %v2991 = vadd.f32 %v2977, %v2990
        %v2992 = vpop.f32.mrf.mxu0
        %v2993 = vadd.f32 %v2979, %v2992
        %2994 = vdwg.mxu0
        %2995 = vmatpush.bf16.msra.mxu0 %v2711
        %2996 = vmatpush.bf16.msra.mxu0 %v2707
        %2997 = vmatpush.bf16.msra.mxu0 %v2703
        %2998 = vmatpush.bf16.msra.mxu0 %v2699
        %2999 = vmatpush.bf16.msra.mxu0 %v2695
        %3000 = vmatpush.bf16.msra.mxu0 %v2691
        %3001 = vmatpush.bf16.msra.mxu0 %v2687
        %3002 = vmatpush.bf16.msra.mxu0 %v2683
        %3003 = vmatmul.bf16.gmra.mxu0 %v1075
        %v3004 = vpop.f32.mrf.mxu0
        %v3005 = vadd.f32 %v2991, %v3004
        %v3006 = vpop.f32.mrf.mxu0
        %v3007 = vadd.f32 %v2993, %v3006
        %3008 = vdwg.mxu0
        %3009 = vmatpush.bf16.msra.mxu0 %v2616
        %3010 = vmatpush.bf16.msra.mxu0 %v2612
        %3011 = vmatpush.bf16.msra.mxu0 %v2608
        %3012 = vmatpush.bf16.msra.mxu0 %v2604
        %3013 = vmatpush.bf16.msra.mxu0 %v2600
        %3014 = vmatpush.bf16.msra.mxu0 %v2596
        %3015 = vmatpush.bf16.msra.mxu0 %v2592
        %3016 = vmatpush.bf16.msra.mxu0 %v2588
        %3017 = vmatmul.bf16.gmra.mxu0 %v1072
        %v3018 = vpop.f32.mrf.mxu0
        %v3019 = vadd.f32 %v2197, %v3018
        %v3020 = vpop.f32.mrf.mxu0
        %v3021 = vadd.f32 %v2199, %v3020
        %3022 = vdwg.mxu0
        %3023 = vmatpush.bf16.msra.mxu0 %v2648
        %3024 = vmatpush.bf16.msra.mxu0 %v2644
        %3025 = vmatpush.bf16.msra.mxu0 %v2640
        %3026 = vmatpush.bf16.msra.mxu0 %v2636
        %3027 = vmatpush.bf16.msra.mxu0 %v2632
        %3028 = vmatpush.bf16.msra.mxu0 %v2628
        %3029 = vmatpush.bf16.msra.mxu0 %v2624
        %3030 = vmatpush.bf16.msra.mxu0 %v2620
        %3031 = vmatmul.bf16.gmra.mxu0 %v1073
        %v3032 = vpop.f32.mrf.mxu0
        %v3033 = vadd.f32 %v3019, %v3032
        %v3034 = vpop.f32.mrf.mxu0
        %v3035 = vadd.f32 %v3021, %v3034
        %3036 = vdwg.mxu0
        %3037 = vmatpush.bf16.msra.mxu0 %v2680
        %3038 = vmatpush.bf16.msra.mxu0 %v2676
        %3039 = vmatpush.bf16.msra.mxu0 %v2672
        %3040 = vmatpush.bf16.msra.mxu0 %v2668
        %3041 = vmatpush.bf16.msra.mxu0 %v2664
        %3042 = vmatpush.bf16.msra.mxu0 %v2660
        %3043 = vmatpush.bf16.msra.mxu0 %v2656
        %3044 = vmatpush.bf16.msra.mxu0 %v2652
        %3045 = vmatmul.bf16.gmra.mxu0 %v1074
        %v3046 = vpop.f32.mrf.mxu0
        %v3047 = vadd.f32 %v3033, %v3046
        %v3048 = vpop.f32.mrf.mxu0
        %v3049 = vadd.f32 %v3035, %v3048
        %3050 = vdwg.mxu0
        %3051 = vmatpush.bf16.msra.mxu0 %v2712
        %3052 = vmatpush.bf16.msra.mxu0 %v2708
        %3053 = vmatpush.bf16.msra.mxu0 %v2704
        %3054 = vmatpush.bf16.msra.mxu0 %v2700
        %3055 = vmatpush.bf16.msra.mxu0 %v2696
        %3056 = vmatpush.bf16.msra.mxu0 %v2692
        %3057 = vmatpush.bf16.msra.mxu0 %v2688
        %3058 = vmatpush.bf16.msra.mxu0 %v2684
        %3059 = vmatmul.bf16.gmra.mxu0 %v1075
        %v3060 = vpop.f32.mrf.mxu0
        %v3061 = vadd.f32 %v3047, %v3060
        %v3062 = vpop.f32.mrf.mxu0
        %v3063 = vadd.f32 %v3049, %v3062
        %3064 = vdwg.mxu0
        %v3065 = vrot.slane %v1040, 1
        %v3066 = vrot.slane %v1041, 1
        %v3067 = vrot.slane %v1042, 1
        %v3068 = vrot.slane %v1043, 1
        %v3069 = vrot.slane %v1044, 1
        %v3070 = vrot.slane %v1045, 1
        %v3071 = vrot.slane %v1046, 1
        %v3072 = vrot.slane %v1047, 1
        %v3073 = vsel %vm834, %v3065, %v3069
        %v3074 = vsel %vm834, %v3066, %v3070
        %v3075 = vsel %vm834, %v3067, %v3071
        %v3076 = vsel %vm834, %v3068, %v3072
        %v3077 = vsel %vm834, %v3069, %v3065
        %v3078 = vsel %vm834, %v3070, %v3066
        %v3079 = vsel %vm834, %v3071, %v3067
        %v3080 = vsel %vm834, %v3072, %v3068
        %v3081 = vsel %vm843, %v3073, 0.0
        %v3082 = vsel %vm843, %v3074, 0.0
        %v3083 = vsel %vm843, %v3075, 0.0
        %v3084 = vsel %vm843, %v3076, 0.0
        %v3085 = vsel %vm844, %v3077, 0.0
        %v3086 = vsel %vm844, %v3078, 0.0
        %v3087 = vsel %vm844, %v3079, 0.0
        %v3088 = vsel %vm844, %v3080, 0.0
        %v3089 = vpack.c.bf16 %v3085, %v3081
        %v3090 = vpack.c.bf16 %v3086, %v3082
        %v3091 = vpack.c.bf16 %v3087, %v3083
        %v3092 = vpack.c.bf16 %v3088, %v3084
        %s3093 = scalar_lea.vmem [#allocation7], 2048
        %v3094 = vld [vmem:[%s3093] sm:$0xff]
        %v3095 = vld [vmem:[%s3093 + $0x8] sm:$0xff]
        %v3096 = vld [vmem:[%s3093 + $0x10] sm:$0xff]
        %v3097 = vld [vmem:[%s3093 + $0x18] sm:$0xff]
        %v3098 = vld [vmem:[%s3093 + $0x20] sm:$0xff]
        %v3099 = vld [vmem:[%s3093 + $0x28] sm:$0xff]
        %v3100 = vld [vmem:[%s3093 + $0x30] sm:$0xff]
        %v3101 = vld [vmem:[%s3093 + $0x38] sm:$0xff]
        %v3102 = vld [vmem:[%s3093 + $0x40] sm:$0xff]
        %v3103 = vld [vmem:[%s3093 + $0x48] sm:$0xff]
        %v3104 = vld [vmem:[%s3093 + $0x50] sm:$0xff]
        %v3105 = vld [vmem:[%s3093 + $0x58] sm:$0xff]
        %v3106 = vld [vmem:[%s3093 + $0x60] sm:$0xff]
        %v3107 = vld [vmem:[%s3093 + $0x68] sm:$0xff]
        %v3108 = vld [vmem:[%s3093 + $0x70] sm:$0xff]
        %v3109 = vld [vmem:[%s3093 + $0x78] sm:$0xff]
        %v3110 = vld [vmem:[%s3093 + $0x80] sm:$0xff]
        %v3111 = vld [vmem:[%s3093 + $0x88] sm:$0xff]
        %v3112 = vld [vmem:[%s3093 + $0x90] sm:$0xff]
        %v3113 = vld [vmem:[%s3093 + $0x98] sm:$0xff]
        %v3114 = vld [vmem:[%s3093 + $0xa0] sm:$0xff]
        %v3115 = vld [vmem:[%s3093 + $0xa8] sm:$0xff]
        %v3116 = vld [vmem:[%s3093 + $0xb0] sm:$0xff]
        %v3117 = vld [vmem:[%s3093 + $0xb8] sm:$0xff]
        %v3118 = vld [vmem:[%s3093 + $0xc0] sm:$0xff]
        %v3119 = vld [vmem:[%s3093 + $0xc8] sm:$0xff]
        %v3120 = vld [vmem:[%s3093 + $0xd0] sm:$0xff]
        %v3121 = vld [vmem:[%s3093 + $0xd8] sm:$0xff]
        %v3122 = vld [vmem:[%s3093 + $0xe0] sm:$0xff]
        %v3123 = vld [vmem:[%s3093 + $0xe8] sm:$0xff]
        %v3124 = vld [vmem:[%s3093 + $0xf0] sm:$0xff]
        %v3125 = vld [vmem:[%s3093 + $0xf8] sm:$0xff]
        %v3126 = vld [vmem:[%s3093 + $0x100] sm:$0xff]
        %v3127 = vld [vmem:[%s3093 + $0x108] sm:$0xff]
        %v3128 = vld [vmem:[%s3093 + $0x110] sm:$0xff]
        %v3129 = vld [vmem:[%s3093 + $0x118] sm:$0xff]
        %v3130 = vld [vmem:[%s3093 + $0x120] sm:$0xff]
        %v3131 = vld [vmem:[%s3093 + $0x128] sm:$0xff]
        %v3132 = vld [vmem:[%s3093 + $0x130] sm:$0xff]
        %v3133 = vld [vmem:[%s3093 + $0x138] sm:$0xff]
        %v3134 = vld [vmem:[%s3093 + $0x140] sm:$0xff]
        %v3135 = vld [vmem:[%s3093 + $0x148] sm:$0xff]
        %v3136 = vld [vmem:[%s3093 + $0x150] sm:$0xff]
        %v3137 = vld [vmem:[%s3093 + $0x158] sm:$0xff]
        %v3138 = vld [vmem:[%s3093 + $0x160] sm:$0xff]
        %v3139 = vld [vmem:[%s3093 + $0x168] sm:$0xff]
        %v3140 = vld [vmem:[%s3093 + $0x170] sm:$0xff]
        %v3141 = vld [vmem:[%s3093 + $0x178] sm:$0xff]
        %v3142 = vld [vmem:[%s3093 + $0x180] sm:$0xff]
        %v3143 = vld [vmem:[%s3093 + $0x188] sm:$0xff]
        %v3144 = vld [vmem:[%s3093 + $0x190] sm:$0xff]
        %v3145 = vld [vmem:[%s3093 + $0x198] sm:$0xff]
        %v3146 = vld [vmem:[%s3093 + $0x1a0] sm:$0xff]
        %v3147 = vld [vmem:[%s3093 + $0x1a8] sm:$0xff]
        %v3148 = vld [vmem:[%s3093 + $0x1b0] sm:$0xff]
        %v3149 = vld [vmem:[%s3093 + $0x1b8] sm:$0xff]
        %v3150 = vld [vmem:[%s3093 + $0x1c0] sm:$0xff]
        %v3151 = vld [vmem:[%s3093 + $0x1c8] sm:$0xff]
        %v3152 = vld [vmem:[%s3093 + $0x1d0] sm:$0xff]
        %v3153 = vld [vmem:[%s3093 + $0x1d8] sm:$0xff]
        %v3154 = vld [vmem:[%s3093 + $0x1e0] sm:$0xff]
        %v3155 = vld [vmem:[%s3093 + $0x1e8] sm:$0xff]
        %v3156 = vld [vmem:[%s3093 + $0x1f0] sm:$0xff]
        %v3157 = vld [vmem:[%s3093 + $0x1f8] sm:$0xff]
        %v3158 = vld [vmem:[%s3093 + $0x200] sm:$0xff]
        %v3159 = vld [vmem:[%s3093 + $0x208] sm:$0xff]
        %v3160 = vld [vmem:[%s3093 + $0x210] sm:$0xff]
        %v3161 = vld [vmem:[%s3093 + $0x218] sm:$0xff]
        %v3162 = vld [vmem:[%s3093 + $0x220] sm:$0xff]
        %v3163 = vld [vmem:[%s3093 + $0x228] sm:$0xff]
        %v3164 = vld [vmem:[%s3093 + $0x230] sm:$0xff]
        %v3165 = vld [vmem:[%s3093 + $0x238] sm:$0xff]
        %v3166 = vld [vmem:[%s3093 + $0x240] sm:$0xff]
        %v3167 = vld [vmem:[%s3093 + $0x248] sm:$0xff]
        %v3168 = vld [vmem:[%s3093 + $0x250] sm:$0xff]
        %v3169 = vld [vmem:[%s3093 + $0x258] sm:$0xff]
        %v3170 = vld [vmem:[%s3093 + $0x260] sm:$0xff]
        %v3171 = vld [vmem:[%s3093 + $0x268] sm:$0xff]
        %v3172 = vld [vmem:[%s3093 + $0x270] sm:$0xff]
        %v3173 = vld [vmem:[%s3093 + $0x278] sm:$0xff]
        %v3174 = vld [vmem:[%s3093 + $0x280] sm:$0xff]
        %v3175 = vld [vmem:[%s3093 + $0x288] sm:$0xff]
        %v3176 = vld [vmem:[%s3093 + $0x290] sm:$0xff]
        %v3177 = vld [vmem:[%s3093 + $0x298] sm:$0xff]
        %v3178 = vld [vmem:[%s3093 + $0x2a0] sm:$0xff]
        %v3179 = vld [vmem:[%s3093 + $0x2a8] sm:$0xff]
        %v3180 = vld [vmem:[%s3093 + $0x2b0] sm:$0xff]
        %v3181 = vld [vmem:[%s3093 + $0x2b8] sm:$0xff]
        %v3182 = vld [vmem:[%s3093 + $0x2c0] sm:$0xff]
        %v3183 = vld [vmem:[%s3093 + $0x2c8] sm:$0xff]
        %v3184 = vld [vmem:[%s3093 + $0x2d0] sm:$0xff]
        %v3185 = vld [vmem:[%s3093 + $0x2d8] sm:$0xff]
        %v3186 = vld [vmem:[%s3093 + $0x2e0] sm:$0xff]
        %v3187 = vld [vmem:[%s3093 + $0x2e8] sm:$0xff]
        %v3188 = vld [vmem:[%s3093 + $0x2f0] sm:$0xff]
        %v3189 = vld [vmem:[%s3093 + $0x2f8] sm:$0xff]
        %v3190 = vld [vmem:[%s3093 + $0x300] sm:$0xff]
        %v3191 = vld [vmem:[%s3093 + $0x308] sm:$0xff]
        %v3192 = vld [vmem:[%s3093 + $0x310] sm:$0xff]
        %v3193 = vld [vmem:[%s3093 + $0x318] sm:$0xff]
        %v3194 = vld [vmem:[%s3093 + $0x320] sm:$0xff]
        %v3195 = vld [vmem:[%s3093 + $0x328] sm:$0xff]
        %v3196 = vld [vmem:[%s3093 + $0x330] sm:$0xff]
        %v3197 = vld [vmem:[%s3093 + $0x338] sm:$0xff]
        %v3198 = vld [vmem:[%s3093 + $0x340] sm:$0xff]
        %v3199 = vld [vmem:[%s3093 + $0x348] sm:$0xff]
        %v3200 = vld [vmem:[%s3093 + $0x350] sm:$0xff]
        %v3201 = vld [vmem:[%s3093 + $0x358] sm:$0xff]
        %v3202 = vld [vmem:[%s3093 + $0x360] sm:$0xff]
        %v3203 = vld [vmem:[%s3093 + $0x368] sm:$0xff]
        %v3204 = vld [vmem:[%s3093 + $0x370] sm:$0xff]
        %v3205 = vld [vmem:[%s3093 + $0x378] sm:$0xff]
        %v3206 = vld [vmem:[%s3093 + $0x380] sm:$0xff]
        %v3207 = vld [vmem:[%s3093 + $0x388] sm:$0xff]
        %v3208 = vld [vmem:[%s3093 + $0x390] sm:$0xff]
        %v3209 = vld [vmem:[%s3093 + $0x398] sm:$0xff]
        %v3210 = vld [vmem:[%s3093 + $0x3a0] sm:$0xff]
        %v3211 = vld [vmem:[%s3093 + $0x3a8] sm:$0xff]
        %v3212 = vld [vmem:[%s3093 + $0x3b0] sm:$0xff]
        %v3213 = vld [vmem:[%s3093 + $0x3b8] sm:$0xff]
        %v3214 = vld [vmem:[%s3093 + $0x3c0] sm:$0xff]
        %v3215 = vld [vmem:[%s3093 + $0x3c8] sm:$0xff]
        %v3216 = vld [vmem:[%s3093 + $0x3d0] sm:$0xff]
        %v3217 = vld [vmem:[%s3093 + $0x3d8] sm:$0xff]
        %v3218 = vld [vmem:[%s3093 + $0x3e0] sm:$0xff]
        %v3219 = vld [vmem:[%s3093 + $0x3e8] sm:$0xff]
        %v3220 = vld [vmem:[%s3093 + $0x3f0] sm:$0xff]
        %v3221 = vld [vmem:[%s3093 + $0x3f8] sm:$0xff]
        %v3350 = vunpack.c.l.b16 %v3094
        %v3351 = vunpack.c.h.b16 %v3094
        %v3352 = vunpack.c.l.b16 %v3095
        %v3353 = vunpack.c.h.b16 %v3095
        %v3354 = vunpack.c.l.b16 %v3096
        %v3355 = vunpack.c.h.b16 %v3096
        %v3356 = vunpack.c.l.b16 %v3097
        %v3357 = vunpack.c.h.b16 %v3097
        %v3358 = vunpack.c.l.b16 %v3098
        %v3359 = vunpack.c.h.b16 %v3098
        %v3360 = vunpack.c.l.b16 %v3099
        %v3361 = vunpack.c.h.b16 %v3099
        %v3362 = vunpack.c.l.b16 %v3100
        %v3363 = vunpack.c.h.b16 %v3100
        %v3364 = vunpack.c.l.b16 %v3101
        %v3365 = vunpack.c.h.b16 %v3101
        %v3366 = vunpack.c.l.b16 %v3102
        %v3367 = vunpack.c.h.b16 %v3102
        %v3368 = vunpack.c.l.b16 %v3103
        %v3369 = vunpack.c.h.b16 %v3103
        %v3370 = vunpack.c.l.b16 %v3104
        %v3371 = vunpack.c.h.b16 %v3104
        %v3372 = vunpack.c.l.b16 %v3105
        %v3373 = vunpack.c.h.b16 %v3105
        %v3374 = vunpack.c.l.b16 %v3106
        %v3375 = vunpack.c.h.b16 %v3106
        %v3376 = vunpack.c.l.b16 %v3107
        %v3377 = vunpack.c.h.b16 %v3107
        %v3378 = vunpack.c.l.b16 %v3108
        %v3379 = vunpack.c.h.b16 %v3108
        %v3380 = vunpack.c.l.b16 %v3109
        %v3381 = vunpack.c.h.b16 %v3109
        %v3382 = vunpack.c.l.b16 %v3110
        %v3383 = vunpack.c.h.b16 %v3110
        %v3384 = vunpack.c.l.b16 %v3111
        %v3385 = vunpack.c.h.b16 %v3111
        %v3386 = vunpack.c.l.b16 %v3112
        %v3387 = vunpack.c.h.b16 %v3112
        %v3388 = vunpack.c.l.b16 %v3113
        %v3389 = vunpack.c.h.b16 %v3113
        %v3390 = vunpack.c.l.b16 %v3114
        %v3391 = vunpack.c.h.b16 %v3114
        %v3392 = vunpack.c.l.b16 %v3115
        %v3393 = vunpack.c.h.b16 %v3115
        %v3394 = vunpack.c.l.b16 %v3116
        %v3395 = vunpack.c.h.b16 %v3116
        %v3396 = vunpack.c.l.b16 %v3117
        %v3397 = vunpack.c.h.b16 %v3117
        %v3398 = vunpack.c.l.b16 %v3118
        %v3399 = vunpack.c.h.b16 %v3118
        %v3400 = vunpack.c.l.b16 %v3119
        %v3401 = vunpack.c.h.b16 %v3119
        %v3402 = vunpack.c.l.b16 %v3120
        %v3403 = vunpack.c.h.b16 %v3120
        %v3404 = vunpack.c.l.b16 %v3121
        %v3405 = vunpack.c.h.b16 %v3121
        %v3406 = vunpack.c.l.b16 %v3122
        %v3407 = vunpack.c.h.b16 %v3122
        %v3408 = vunpack.c.l.b16 %v3123
        %v3409 = vunpack.c.h.b16 %v3123
        %v3410 = vunpack.c.l.b16 %v3124
        %v3411 = vunpack.c.h.b16 %v3124
        %v3412 = vunpack.c.l.b16 %v3125
        %v3413 = vunpack.c.h.b16 %v3125
        %v3414 = vunpack.c.l.b16 %v3126
        %v3415 = vunpack.c.h.b16 %v3126
        %v3416 = vunpack.c.l.b16 %v3127
        %v3417 = vunpack.c.h.b16 %v3127
        %v3418 = vunpack.c.l.b16 %v3128
        %v3419 = vunpack.c.h.b16 %v3128
        %v3420 = vunpack.c.l.b16 %v3129
        %v3421 = vunpack.c.h.b16 %v3129
        %v3422 = vunpack.c.l.b16 %v3130
        %v3423 = vunpack.c.h.b16 %v3130
        %v3424 = vunpack.c.l.b16 %v3131
        %v3425 = vunpack.c.h.b16 %v3131
        %v3426 = vunpack.c.l.b16 %v3132
        %v3427 = vunpack.c.h.b16 %v3132
        %v3428 = vunpack.c.l.b16 %v3133
        %v3429 = vunpack.c.h.b16 %v3133
        %v3430 = vunpack.c.l.b16 %v3134
        %v3431 = vunpack.c.h.b16 %v3134
        %v3432 = vunpack.c.l.b16 %v3135
        %v3433 = vunpack.c.h.b16 %v3135
        %v3434 = vunpack.c.l.b16 %v3136
        %v3435 = vunpack.c.h.b16 %v3136
        %v3436 = vunpack.c.l.b16 %v3137
        %v3437 = vunpack.c.h.b16 %v3137
        %v3438 = vunpack.c.l.b16 %v3138
        %v3439 = vunpack.c.h.b16 %v3138
        %v3440 = vunpack.c.l.b16 %v3139
        %v3441 = vunpack.c.h.b16 %v3139
        %v3442 = vunpack.c.l.b16 %v3140
        %v3443 = vunpack.c.h.b16 %v3140
        %v3444 = vunpack.c.l.b16 %v3141
        %v3445 = vunpack.c.h.b16 %v3141
        %v3446 = vunpack.c.l.b16 %v3142
        %v3447 = vunpack.c.h.b16 %v3142
        %v3448 = vunpack.c.l.b16 %v3143
        %v3449 = vunpack.c.h.b16 %v3143
        %v3450 = vunpack.c.l.b16 %v3144
        %v3451 = vunpack.c.h.b16 %v3144
        %v3452 = vunpack.c.l.b16 %v3145
        %v3453 = vunpack.c.h.b16 %v3145
        %v3454 = vunpack.c.l.b16 %v3146
        %v3455 = vunpack.c.h.b16 %v3146
        %v3456 = vunpack.c.l.b16 %v3147
        %v3457 = vunpack.c.h.b16 %v3147
        %v3458 = vunpack.c.l.b16 %v3148
        %v3459 = vunpack.c.h.b16 %v3148
        %v3460 = vunpack.c.l.b16 %v3149
        %v3461 = vunpack.c.h.b16 %v3149
        %v3462 = vunpack.c.l.b16 %v3150
        %v3463 = vunpack.c.h.b16 %v3150
        %v3464 = vunpack.c.l.b16 %v3151
        %v3465 = vunpack.c.h.b16 %v3151
        %v3466 = vunpack.c.l.b16 %v3152
        %v3467 = vunpack.c.h.b16 %v3152
        %v3468 = vunpack.c.l.b16 %v3153
        %v3469 = vunpack.c.h.b16 %v3153
        %v3470 = vunpack.c.l.b16 %v3154
        %v3471 = vunpack.c.h.b16 %v3154
        %v3472 = vunpack.c.l.b16 %v3155
        %v3473 = vunpack.c.h.b16 %v3155
        %v3474 = vunpack.c.l.b16 %v3156
        %v3475 = vunpack.c.h.b16 %v3156
        %v3476 = vunpack.c.l.b16 %v3157
        %v3477 = vunpack.c.h.b16 %v3157
        %v3478 = vunpack.c.l.b16 %v3158
        %v3479 = vunpack.c.h.b16 %v3158
        %v3480 = vunpack.c.l.b16 %v3159
        %v3481 = vunpack.c.h.b16 %v3159
        %v3482 = vunpack.c.l.b16 %v3160
        %v3483 = vunpack.c.h.b16 %v3160
        %v3484 = vunpack.c.l.b16 %v3161
        %v3485 = vunpack.c.h.b16 %v3161
        %v3486 = vunpack.c.l.b16 %v3162
        %v3487 = vunpack.c.h.b16 %v3162
        %v3488 = vunpack.c.l.b16 %v3163
        %v3489 = vunpack.c.h.b16 %v3163
        %v3490 = vunpack.c.l.b16 %v3164
        %v3491 = vunpack.c.h.b16 %v3164
        %v3492 = vunpack.c.l.b16 %v3165
        %v3493 = vunpack.c.h.b16 %v3165
        %v3494 = vunpack.c.l.b16 %v3166
        %v3495 = vunpack.c.h.b16 %v3166
        %v3496 = vunpack.c.l.b16 %v3167
        %v3497 = vunpack.c.h.b16 %v3167
        %v3498 = vunpack.c.l.b16 %v3168
        %v3499 = vunpack.c.h.b16 %v3168
        %v3500 = vunpack.c.l.b16 %v3169
        %v3501 = vunpack.c.h.b16 %v3169
        %v3502 = vunpack.c.l.b16 %v3170
        %v3503 = vunpack.c.h.b16 %v3170
        %v3504 = vunpack.c.l.b16 %v3171
        %v3505 = vunpack.c.h.b16 %v3171
        %v3506 = vunpack.c.l.b16 %v3172
        %v3507 = vunpack.c.h.b16 %v3172
        %v3508 = vunpack.c.l.b16 %v3173
        %v3509 = vunpack.c.h.b16 %v3173
        %v3510 = vunpack.c.l.b16 %v3174
        %v3511 = vunpack.c.h.b16 %v3174
        %v3512 = vunpack.c.l.b16 %v3175
        %v3513 = vunpack.c.h.b16 %v3175
        %v3514 = vunpack.c.l.b16 %v3176
        %v3515 = vunpack.c.h.b16 %v3176
        %v3516 = vunpack.c.l.b16 %v3177
        %v3517 = vunpack.c.h.b16 %v3177
        %v3518 = vunpack.c.l.b16 %v3178
        %v3519 = vunpack.c.h.b16 %v3178
        %v3520 = vunpack.c.l.b16 %v3179
        %v3521 = vunpack.c.h.b16 %v3179
        %v3522 = vunpack.c.l.b16 %v3180
        %v3523 = vunpack.c.h.b16 %v3180
        %v3524 = vunpack.c.l.b16 %v3181
        %v3525 = vunpack.c.h.b16 %v3181
        %v3526 = vunpack.c.l.b16 %v3182
        %v3527 = vunpack.c.h.b16 %v3182
        %v3528 = vunpack.c.l.b16 %v3183
        %v3529 = vunpack.c.h.b16 %v3183
        %v3530 = vunpack.c.l.b16 %v3184
        %v3531 = vunpack.c.h.b16 %v3184
        %v3532 = vunpack.c.l.b16 %v3185
        %v3533 = vunpack.c.h.b16 %v3185
        %v3534 = vunpack.c.l.b16 %v3186
        %v3535 = vunpack.c.h.b16 %v3186
        %v3536 = vunpack.c.l.b16 %v3187
        %v3537 = vunpack.c.h.b16 %v3187
        %v3538 = vunpack.c.l.b16 %v3188
        %v3539 = vunpack.c.h.b16 %v3188
        %v3540 = vunpack.c.l.b16 %v3189
        %v3541 = vunpack.c.h.b16 %v3189
        %v3542 = vunpack.c.l.b16 %v3190
        %v3543 = vunpack.c.h.b16 %v3190
        %v3544 = vunpack.c.l.b16 %v3191
        %v3545 = vunpack.c.h.b16 %v3191
        %v3546 = vunpack.c.l.b16 %v3192
        %v3547 = vunpack.c.h.b16 %v3192
        %v3548 = vunpack.c.l.b16 %v3193
        %v3549 = vunpack.c.h.b16 %v3193
        %v3550 = vunpack.c.l.b16 %v3194
        %v3551 = vunpack.c.h.b16 %v3194
        %v3552 = vunpack.c.l.b16 %v3195
        %v3553 = vunpack.c.h.b16 %v3195
        %v3554 = vunpack.c.l.b16 %v3196
        %v3555 = vunpack.c.h.b16 %v3196
        %v3556 = vunpack.c.l.b16 %v3197
        %v3557 = vunpack.c.h.b16 %v3197
        %v3558 = vunpack.c.l.b16 %v3198
        %v3559 = vunpack.c.h.b16 %v3198
        %v3560 = vunpack.c.l.b16 %v3199
        %v3561 = vunpack.c.h.b16 %v3199
        %v3562 = vunpack.c.l.b16 %v3200
        %v3563 = vunpack.c.h.b16 %v3200
        %v3564 = vunpack.c.l.b16 %v3201
        %v3565 = vunpack.c.h.b16 %v3201
        %v3566 = vunpack.c.l.b16 %v3202
        %v3567 = vunpack.c.h.b16 %v3202
        %v3568 = vunpack.c.l.b16 %v3203
        %v3569 = vunpack.c.h.b16 %v3203
        %v3570 = vunpack.c.l.b16 %v3204
        %v3571 = vunpack.c.h.b16 %v3204
        %v3572 = vunpack.c.l.b16 %v3205
        %v3573 = vunpack.c.h.b16 %v3205
        %v3574 = vunpack.c.l.b16 %v3206
        %v3575 = vunpack.c.h.b16 %v3206
        %v3576 = vunpack.c.l.b16 %v3207
        %v3577 = vunpack.c.h.b16 %v3207
        %v3578 = vunpack.c.l.b16 %v3208
        %v3579 = vunpack.c.h.b16 %v3208
        %v3580 = vunpack.c.l.b16 %v3209
        %v3581 = vunpack.c.h.b16 %v3209
        %v3582 = vunpack.c.l.b16 %v3210
        %v3583 = vunpack.c.h.b16 %v3210
        %v3584 = vunpack.c.l.b16 %v3211
        %v3585 = vunpack.c.h.b16 %v3211
        %v3586 = vunpack.c.l.b16 %v3212
        %v3587 = vunpack.c.h.b16 %v3212
        %v3588 = vunpack.c.l.b16 %v3213
        %v3589 = vunpack.c.h.b16 %v3213
        %v3590 = vunpack.c.l.b16 %v3214
        %v3591 = vunpack.c.h.b16 %v3214
        %v3592 = vunpack.c.l.b16 %v3215
        %v3593 = vunpack.c.h.b16 %v3215
        %v3594 = vunpack.c.l.b16 %v3216
        %v3595 = vunpack.c.h.b16 %v3216
        %v3596 = vunpack.c.l.b16 %v3217
        %v3597 = vunpack.c.h.b16 %v3217
        %v3598 = vunpack.c.l.b16 %v3218
        %v3599 = vunpack.c.h.b16 %v3218
        %v3600 = vunpack.c.l.b16 %v3219
        %v3601 = vunpack.c.h.b16 %v3219
        %v3602 = vunpack.c.l.b16 %v3220
        %v3603 = vunpack.c.h.b16 %v3220
        %v3604 = vunpack.c.l.b16 %v3221
        %v3605 = vunpack.c.h.b16 %v3221
        %v3606 = vpack.c.b16 %v3354, %v3350
        %v3607 = vpack.c.b16 %v3355, %v3351
        %v3608 = vpack.c.b16 %v3356, %v3352
        %v3609 = vpack.c.b16 %v3357, %v3353
        %v3610 = vpack.c.b16 %v3362, %v3358
        %v3611 = vpack.c.b16 %v3363, %v3359
        %v3612 = vpack.c.b16 %v3364, %v3360
        %v3613 = vpack.c.b16 %v3365, %v3361
        %v3614 = vpack.c.b16 %v3370, %v3366
        %v3615 = vpack.c.b16 %v3371, %v3367
        %v3616 = vpack.c.b16 %v3372, %v3368
        %v3617 = vpack.c.b16 %v3373, %v3369
        %v3618 = vpack.c.b16 %v3378, %v3374
        %v3619 = vpack.c.b16 %v3379, %v3375
        %v3620 = vpack.c.b16 %v3380, %v3376
        %v3621 = vpack.c.b16 %v3381, %v3377
        %v3622 = vpack.c.b16 %v3386, %v3382
        %v3623 = vpack.c.b16 %v3387, %v3383
        %v3624 = vpack.c.b16 %v3388, %v3384
        %v3625 = vpack.c.b16 %v3389, %v3385
        %v3626 = vpack.c.b16 %v3394, %v3390
        %v3627 = vpack.c.b16 %v3395, %v3391
        %v3628 = vpack.c.b16 %v3396, %v3392
        %v3629 = vpack.c.b16 %v3397, %v3393
        %v3630 = vpack.c.b16 %v3402, %v3398
        %v3631 = vpack.c.b16 %v3403, %v3399
        %v3632 = vpack.c.b16 %v3404, %v3400
        %v3633 = vpack.c.b16 %v3405, %v3401
        %v3634 = vpack.c.b16 %v3410, %v3406
        %v3635 = vpack.c.b16 %v3411, %v3407
        %v3636 = vpack.c.b16 %v3412, %v3408
        %v3637 = vpack.c.b16 %v3413, %v3409
        %v3638 = vpack.c.b16 %v3418, %v3414
        %v3639 = vpack.c.b16 %v3419, %v3415
        %v3640 = vpack.c.b16 %v3420, %v3416
        %v3641 = vpack.c.b16 %v3421, %v3417
        %v3642 = vpack.c.b16 %v3426, %v3422
        %v3643 = vpack.c.b16 %v3427, %v3423
        %v3644 = vpack.c.b16 %v3428, %v3424
        %v3645 = vpack.c.b16 %v3429, %v3425
        %v3646 = vpack.c.b16 %v3434, %v3430
        %v3647 = vpack.c.b16 %v3435, %v3431
        %v3648 = vpack.c.b16 %v3436, %v3432
        %v3649 = vpack.c.b16 %v3437, %v3433
        %v3650 = vpack.c.b16 %v3442, %v3438
        %v3651 = vpack.c.b16 %v3443, %v3439
        %v3652 = vpack.c.b16 %v3444, %v3440
        %v3653 = vpack.c.b16 %v3445, %v3441
        %v3654 = vpack.c.b16 %v3450, %v3446
        %v3655 = vpack.c.b16 %v3451, %v3447
        %v3656 = vpack.c.b16 %v3452, %v3448
        %v3657 = vpack.c.b16 %v3453, %v3449
        %v3658 = vpack.c.b16 %v3458, %v3454
        %v3659 = vpack.c.b16 %v3459, %v3455
        %v3660 = vpack.c.b16 %v3460, %v3456
        %v3661 = vpack.c.b16 %v3461, %v3457
        %v3662 = vpack.c.b16 %v3466, %v3462
        %v3663 = vpack.c.b16 %v3467, %v3463
        %v3664 = vpack.c.b16 %v3468, %v3464
        %v3665 = vpack.c.b16 %v3469, %v3465
        %v3666 = vpack.c.b16 %v3474, %v3470
        %v3667 = vpack.c.b16 %v3475, %v3471
        %v3668 = vpack.c.b16 %v3476, %v3472
        %v3669 = vpack.c.b16 %v3477, %v3473
        %v3670 = vpack.c.b16 %v3482, %v3478
        %v3671 = vpack.c.b16 %v3483, %v3479
        %v3672 = vpack.c.b16 %v3484, %v3480
        %v3673 = vpack.c.b16 %v3485, %v3481
        %v3674 = vpack.c.b16 %v3490, %v3486
        %v3675 = vpack.c.b16 %v3491, %v3487
        %v3676 = vpack.c.b16 %v3492, %v3488
        %v3677 = vpack.c.b16 %v3493, %v3489
        %v3678 = vpack.c.b16 %v3498, %v3494
        %v3679 = vpack.c.b16 %v3499, %v3495
        %v3680 = vpack.c.b16 %v3500, %v3496
        %v3681 = vpack.c.b16 %v3501, %v3497
        %v3682 = vpack.c.b16 %v3506, %v3502
        %v3683 = vpack.c.b16 %v3507, %v3503
        %v3684 = vpack.c.b16 %v3508, %v3504
        %v3685 = vpack.c.b16 %v3509, %v3505
        %v3686 = vpack.c.b16 %v3514, %v3510
        %v3687 = vpack.c.b16 %v3515, %v3511
        %v3688 = vpack.c.b16 %v3516, %v3512
        %v3689 = vpack.c.b16 %v3517, %v3513
        %v3690 = vpack.c.b16 %v3522, %v3518
        %v3691 = vpack.c.b16 %v3523, %v3519
        %v3692 = vpack.c.b16 %v3524, %v3520
        %v3693 = vpack.c.b16 %v3525, %v3521
        %v3694 = vpack.c.b16 %v3530, %v3526
        %v3695 = vpack.c.b16 %v3531, %v3527
        %v3696 = vpack.c.b16 %v3532, %v3528
        %v3697 = vpack.c.b16 %v3533, %v3529
        %v3698 = vpack.c.b16 %v3538, %v3534
        %v3699 = vpack.c.b16 %v3539, %v3535
        %v3700 = vpack.c.b16 %v3540, %v3536
        %v3701 = vpack.c.b16 %v3541, %v3537
        %v3702 = vpack.c.b16 %v3546, %v3542
        %v3703 = vpack.c.b16 %v3547, %v3543
        %v3704 = vpack.c.b16 %v3548, %v3544
        %v3705 = vpack.c.b16 %v3549, %v3545
        %v3706 = vpack.c.b16 %v3554, %v3550
        %v3707 = vpack.c.b16 %v3555, %v3551
        %v3708 = vpack.c.b16 %v3556, %v3552
        %v3709 = vpack.c.b16 %v3557, %v3553
        %v3710 = vpack.c.b16 %v3562, %v3558
        %v3711 = vpack.c.b16 %v3563, %v3559
        %v3712 = vpack.c.b16 %v3564, %v3560
        %v3713 = vpack.c.b16 %v3565, %v3561
        %v3714 = vpack.c.b16 %v3570, %v3566
        %v3715 = vpack.c.b16 %v3571, %v3567
        %v3716 = vpack.c.b16 %v3572, %v3568
        %v3717 = vpack.c.b16 %v3573, %v3569
        %v3718 = vpack.c.b16 %v3578, %v3574
        %v3719 = vpack.c.b16 %v3579, %v3575
        %v3720 = vpack.c.b16 %v3580, %v3576
        %v3721 = vpack.c.b16 %v3581, %v3577
        %v3722 = vpack.c.b16 %v3586, %v3582
        %v3723 = vpack.c.b16 %v3587, %v3583
        %v3724 = vpack.c.b16 %v3588, %v3584
        %v3725 = vpack.c.b16 %v3589, %v3585
        %v3726 = vpack.c.b16 %v3594, %v3590
        %v3727 = vpack.c.b16 %v3595, %v3591
        %v3728 = vpack.c.b16 %v3596, %v3592
        %v3729 = vpack.c.b16 %v3597, %v3593
        %v3730 = vpack.c.b16 %v3602, %v3598
        %v3731 = vpack.c.b16 %v3603, %v3599
        %v3732 = vpack.c.b16 %v3604, %v3600
        %v3733 = vpack.c.b16 %v3605, %v3601
        %3862 = vmatpush.bf16.msra.mxu0 %v3634
        %3863 = vmatpush.bf16.msra.mxu0 %v3630
        %3864 = vmatpush.bf16.msra.mxu0 %v3626
        %3865 = vmatpush.bf16.msra.mxu0 %v3622
        %3866 = vmatpush.bf16.msra.mxu0 %v3618
        %3867 = vmatpush.bf16.msra.mxu0 %v3614
        %3868 = vmatpush.bf16.msra.mxu0 %v3610
        %3869 = vmatpush.bf16.msra.mxu0 %v3606
        %3870 = vmatmul.bf16.gmra.mxu0 %v3089
        %v3871 = vpop.f32.mrf.mxu0
        %v3872 = vadd.f32 0.0, %v3871
        %v3873 = vpop.f32.mrf.mxu0
        %v3874 = vadd.f32 0.0, %v3873
        %3875 = vdwg.mxu0
        %3876 = vmatpush.bf16.msra.mxu0 %v3666
        %3877 = vmatpush.bf16.msra.mxu0 %v3662
        %3878 = vmatpush.bf16.msra.mxu0 %v3658
        %3879 = vmatpush.bf16.msra.mxu0 %v3654
        %3880 = vmatpush.bf16.msra.mxu0 %v3650
        %3881 = vmatpush.bf16.msra.mxu0 %v3646
        %3882 = vmatpush.bf16.msra.mxu0 %v3642
        %3883 = vmatpush.bf16.msra.mxu0 %v3638
        %3884 = vmatmul.bf16.gmra.mxu0 %v3090
        %v3885 = vpop.f32.mrf.mxu0
        %v3886 = vadd.f32 %v3872, %v3885
        %v3887 = vpop.f32.mrf.mxu0
        %v3888 = vadd.f32 %v3874, %v3887
        %3889 = vdwg.mxu0
        %3890 = vmatpush.bf16.msra.mxu0 %v3698
        %3891 = vmatpush.bf16.msra.mxu0 %v3694
        %3892 = vmatpush.bf16.msra.mxu0 %v3690
        %3893 = vmatpush.bf16.msra.mxu0 %v3686
        %3894 = vmatpush.bf16.msra.mxu0 %v3682
        %3895 = vmatpush.bf16.msra.mxu0 %v3678
        %3896 = vmatpush.bf16.msra.mxu0 %v3674
        %3897 = vmatpush.bf16.msra.mxu0 %v3670
        %3898 = vmatmul.bf16.gmra.mxu0 %v3091
        %v3899 = vpop.f32.mrf.mxu0
        %v3900 = vadd.f32 %v3886, %v3899
        %v3901 = vpop.f32.mrf.mxu0
        %v3902 = vadd.f32 %v3888, %v3901
        %3903 = vdwg.mxu0
        %3904 = vmatpush.bf16.msra.mxu0 %v3730
        %3905 = vmatpush.bf16.msra.mxu0 %v3726
        %3906 = vmatpush.bf16.msra.mxu0 %v3722
        %3907 = vmatpush.bf16.msra.mxu0 %v3718
        %3908 = vmatpush.bf16.msra.mxu0 %v3714
        %3909 = vmatpush.bf16.msra.mxu0 %v3710
        %3910 = vmatpush.bf16.msra.mxu0 %v3706
        %3911 = vmatpush.bf16.msra.mxu0 %v3702
        %3912 = vmatmul.bf16.gmra.mxu0 %v3092
        %v3913 = vpop.f32.mrf.mxu0
        %v3914 = vadd.f32 %v3900, %v3913
        %v3915 = vpop.f32.mrf.mxu0
        %v3916 = vadd.f32 %v3902, %v3915
        %3917 = vdwg.mxu0
        %3918 = vmatpush.bf16.msra.mxu0 %v3635
        %3919 = vmatpush.bf16.msra.mxu0 %v3631
        %3920 = vmatpush.bf16.msra.mxu0 %v3627
        %3921 = vmatpush.bf16.msra.mxu0 %v3623
        %3922 = vmatpush.bf16.msra.mxu0 %v3619
        %3923 = vmatpush.bf16.msra.mxu0 %v3615
        %3924 = vmatpush.bf16.msra.mxu0 %v3611
        %3925 = vmatpush.bf16.msra.mxu0 %v3607
        %3926 = vmatmul.bf16.gmra.mxu0 %v3089
        %v3927 = vpop.f32.mrf.mxu0
        %v3928 = vadd.f32 0.0, %v3927
        %v3929 = vpop.f32.mrf.mxu0
        %v3930 = vadd.f32 0.0, %v3929
        %3931 = vdwg.mxu0
        %3932 = vmatpush.bf16.msra.mxu0 %v3667
        %3933 = vmatpush.bf16.msra.mxu0 %v3663
        %3934 = vmatpush.bf16.msra.mxu0 %v3659
        %3935 = vmatpush.bf16.msra.mxu0 %v3655
        %3936 = vmatpush.bf16.msra.mxu0 %v3651
        %3937 = vmatpush.bf16.msra.mxu0 %v3647
        %3938 = vmatpush.bf16.msra.mxu0 %v3643
        %3939 = vmatpush.bf16.msra.mxu0 %v3639
        %3940 = vmatmul.bf16.gmra.mxu0 %v3090
        %v3941 = vpop.f32.mrf.mxu0
        %v3942 = vadd.f32 %v3928, %v3941
        %v3943 = vpop.f32.mrf.mxu0
        %v3944 = vadd.f32 %v3930, %v3943
        %3945 = vdwg.mxu0
        %3946 = vmatpush.bf16.msra.mxu0 %v3699
        %3947 = vmatpush.bf16.msra.mxu0 %v3695
        %3948 = vmatpush.bf16.msra.mxu0 %v3691
        %3949 = vmatpush.bf16.msra.mxu0 %v3687
        %3950 = vmatpush.bf16.msra.mxu0 %v3683
        %3951 = vmatpush.bf16.msra.mxu0 %v3679
        %3952 = vmatpush.bf16.msra.mxu0 %v3675
        %3953 = vmatpush.bf16.msra.mxu0 %v3671
        %3954 = vmatmul.bf16.gmra.mxu0 %v3091
        %v3955 = vpop.f32.mrf.mxu0
        %v3956 = vadd.f32 %v3942, %v3955
        %v3957 = vpop.f32.mrf.mxu0
        %v3958 = vadd.f32 %v3944, %v3957
        %3959 = vdwg.mxu0
        %3960 = vmatpush.bf16.msra.mxu0 %v3731
        %3961 = vmatpush.bf16.msra.mxu0 %v3727
        %3962 = vmatpush.bf16.msra.mxu0 %v3723
        %3963 = vmatpush.bf16.msra.mxu0 %v3719
        %3964 = vmatpush.bf16.msra.mxu0 %v3715
        %3965 = vmatpush.bf16.msra.mxu0 %v3711
        %3966 = vmatpush.bf16.msra.mxu0 %v3707
        %3967 = vmatpush.bf16.msra.mxu0 %v3703
        %3968 = vmatmul.bf16.gmra.mxu0 %v3092
        %v3969 = vpop.f32.mrf.mxu0
        %v3970 = vadd.f32 %v3956, %v3969
        %v3971 = vpop.f32.mrf.mxu0
        %v3972 = vadd.f32 %v3958, %v3971
        %3973 = vdwg.mxu0
        %3974 = vmatpush.bf16.msra.mxu0 %v3636
        %3975 = vmatpush.bf16.msra.mxu0 %v3632
        %3976 = vmatpush.bf16.msra.mxu0 %v3628
        %3977 = vmatpush.bf16.msra.mxu0 %v3624
        %3978 = vmatpush.bf16.msra.mxu0 %v3620
        %3979 = vmatpush.bf16.msra.mxu0 %v3616
        %3980 = vmatpush.bf16.msra.mxu0 %v3612
        %3981 = vmatpush.bf16.msra.mxu0 %v3608
        %3982 = vmatmul.bf16.gmra.mxu0 %v3089
        %v3983 = vpop.f32.mrf.mxu0
        %v3984 = vadd.f32 0.0, %v3983
        %v3985 = vpop.f32.mrf.mxu0
        %v3986 = vadd.f32 0.0, %v3985
        %3987 = vdwg.mxu0
        %3988 = vmatpush.bf16.msra.mxu0 %v3668
        %3989 = vmatpush.bf16.msra.mxu0 %v3664
        %3990 = vmatpush.bf16.msra.mxu0 %v3660
        %3991 = vmatpush.bf16.msra.mxu0 %v3656
        %3992 = vmatpush.bf16.msra.mxu0 %v3652
        %3993 = vmatpush.bf16.msra.mxu0 %v3648
        %3994 = vmatpush.bf16.msra.mxu0 %v3644
        %3995 = vmatpush.bf16.msra.mxu0 %v3640
        %3996 = vmatmul.bf16.gmra.mxu0 %v3090
        %v3997 = vpop.f32.mrf.mxu0
        %v3998 = vadd.f32 %v3984, %v3997
        %v3999 = vpop.f32.mrf.mxu0
        %v4000 = vadd.f32 %v3986, %v3999
        %4001 = vdwg.mxu0
        %4002 = vmatpush.bf16.msra.mxu0 %v3700
        %4003 = vmatpush.bf16.msra.mxu0 %v3696
        %4004 = vmatpush.bf16.msra.mxu0 %v3692
        %4005 = vmatpush.bf16.msra.mxu0 %v3688
        %4006 = vmatpush.bf16.msra.mxu0 %v3684
        %4007 = vmatpush.bf16.msra.mxu0 %v3680
        %4008 = vmatpush.bf16.msra.mxu0 %v3676
        %4009 = vmatpush.bf16.msra.mxu0 %v3672
        %4010 = vmatmul.bf16.gmra.mxu0 %v3091
        %v4011 = vpop.f32.mrf.mxu0
        %v4012 = vadd.f32 %v3998, %v4011
        %v4013 = vpop.f32.mrf.mxu0
        %v4014 = vadd.f32 %v4000, %v4013
        %4015 = vdwg.mxu0
        %4016 = vmatpush.bf16.msra.mxu0 %v3732
        %4017 = vmatpush.bf16.msra.mxu0 %v3728
        %4018 = vmatpush.bf16.msra.mxu0 %v3724
        %4019 = vmatpush.bf16.msra.mxu0 %v3720
        %4020 = vmatpush.bf16.msra.mxu0 %v3716
        %4021 = vmatpush.bf16.msra.mxu0 %v3712
        %4022 = vmatpush.bf16.msra.mxu0 %v3708
        %4023 = vmatpush.bf16.msra.mxu0 %v3704
        %4024 = vmatmul.bf16.gmra.mxu0 %v3092
        %v4025 = vpop.f32.mrf.mxu0
        %v4026 = vadd.f32 %v4012, %v4025
        %v4027 = vpop.f32.mrf.mxu0
        %v4028 = vadd.f32 %v4014, %v4027
        %4029 = vdwg.mxu0
        %4030 = vmatpush.bf16.msra.mxu0 %v3637
        %4031 = vmatpush.bf16.msra.mxu0 %v3633
        %4032 = vmatpush.bf16.msra.mxu0 %v3629
        %4033 = vmatpush.bf16.msra.mxu0 %v3625
        %4034 = vmatpush.bf16.msra.mxu0 %v3621
        %4035 = vmatpush.bf16.msra.mxu0 %v3617
        %4036 = vmatpush.bf16.msra.mxu0 %v3613
        %4037 = vmatpush.bf16.msra.mxu0 %v3609
        %4038 = vmatmul.bf16.gmra.mxu0 %v3089
        %v4039 = vpop.f32.mrf.mxu0
        %v4040 = vadd.f32 0.0, %v4039
        %v4041 = vpop.f32.mrf.mxu0
        %v4042 = vadd.f32 0.0, %v4041
        %4043 = vdwg.mxu0
        %4044 = vmatpush.bf16.msra.mxu0 %v3669
        %4045 = vmatpush.bf16.msra.mxu0 %v3665
        %4046 = vmatpush.bf16.msra.mxu0 %v3661
        %4047 = vmatpush.bf16.msra.mxu0 %v3657
        %4048 = vmatpush.bf16.msra.mxu0 %v3653
        %4049 = vmatpush.bf16.msra.mxu0 %v3649
        %4050 = vmatpush.bf16.msra.mxu0 %v3645
        %4051 = vmatpush.bf16.msra.mxu0 %v3641
        %4052 = vmatmul.bf16.gmra.mxu0 %v3090
        %v4053 = vpop.f32.mrf.mxu0
        %v4054 = vadd.f32 %v4040, %v4053
        %v4055 = vpop.f32.mrf.mxu0
        %v4056 = vadd.f32 %v4042, %v4055
        %4057 = vdwg.mxu0
        %4058 = vmatpush.bf16.msra.mxu0 %v3701
        %4059 = vmatpush.bf16.msra.mxu0 %v3697
        %4060 = vmatpush.bf16.msra.mxu0 %v3693
        %4061 = vmatpush.bf16.msra.mxu0 %v3689
        %4062 = vmatpush.bf16.msra.mxu0 %v3685
        %4063 = vmatpush.bf16.msra.mxu0 %v3681
        %4064 = vmatpush.bf16.msra.mxu0 %v3677
        %4065 = vmatpush.bf16.msra.mxu0 %v3673
        %4066 = vmatmul.bf16.gmra.mxu0 %v3091
        %v4067 = vpop.f32.mrf.mxu0
        %v4068 = vadd.f32 %v4054, %v4067
        %v4069 = vpop.f32.mrf.mxu0
        %v4070 = vadd.f32 %v4056, %v4069
        %4071 = vdwg.mxu0
        %4072 = vmatpush.bf16.msra.mxu0 %v3733
        %4073 = vmatpush.bf16.msra.mxu0 %v3729
        %4074 = vmatpush.bf16.msra.mxu0 %v3725
        %4075 = vmatpush.bf16.msra.mxu0 %v3721
        %4076 = vmatpush.bf16.msra.mxu0 %v3717
        %4077 = vmatpush.bf16.msra.mxu0 %v3713
        %4078 = vmatpush.bf16.msra.mxu0 %v3709
        %4079 = vmatpush.bf16.msra.mxu0 %v3705
        %4080 = vmatmul.bf16.gmra.mxu0 %v3092
        %v4081 = vpop.f32.mrf.mxu0
        %v4082 = vadd.f32 %v4068, %v4081
        %v4083 = vpop.f32.mrf.mxu0
        %v4084 = vadd.f32 %v4070, %v4083
        %4085 = vdwg.mxu0
        %v4086 = vadd.f32 %v2893, %v3914
        %v4087 = vadd.f32 %v2949, %v3970
        %v4088 = vadd.f32 %v3005, %v4026
        %v4089 = vadd.f32 %v3061, %v4082
        %v4090 = vadd.f32 %v2895, %v3916
        %v4091 = vadd.f32 %v2951, %v3972
        %v4092 = vadd.f32 %v3007, %v4028
        %v4093 = vadd.f32 %v3063, %v4084
        %v4094 = vld [vmem:[#allocation9] sm:$0xf]
        %v4096 = vperm.slane %v4094, 0
        %v4097 = vperm.slane %v4094, 1
        %v4098 = vperm.slane %v4094, 2
        %v4099 = vperm.slane %v4094, 3
        %v4104 = vmul.f32 %v4086, %v4096
        %v4105 = vmul.f32 %v4087, %v4097
        %v4106 = vmul.f32 %v4088, %v4098
        %v4107 = vmul.f32 %v4089, %v4099
        %v4108 = vmul.f32 %v4090, %v4096
        %v4109 = vmul.f32 %v4091, %v4097
        %v4110 = vmul.f32 %v4092, %v4098
        %v4111 = vmul.f32 %v4093, %v4099
        %v4112 = vld [vmem:[#allocation10] sm:$0xf]
        %v4114 = vperm.slane %v4112, 0
        %v4115 = vperm.slane %v4112, 1
        %v4116 = vperm.slane %v4112, 2
        %v4117 = vperm.slane %v4112, 3
        %v4122 = vadd.f32 %v4104, %v4114
        %v4123 = vadd.f32 %v4105, %v4115
        %v4124 = vadd.f32 %v4106, %v4116
        %v4125 = vadd.f32 %v4107, %v4117
        %v4126 = vadd.f32 %v4108, %v4114
        %v4127 = vadd.f32 %v4109, %v4115
        %v4128 = vadd.f32 %v4110, %v4116
        %v4129 = vadd.f32 %v4111, %v4117
        %v4130 = vmax.f32 %v4122, 0.0
        %v4131 = vmax.f32 %v4123, 0.0
        %v4132 = vmax.f32 %v4124, 0.0
        %v4133 = vmax.f32 %v4125, 0.0
        %v4134 = vmax.f32 %v4126, 0.0
        %v4135 = vmax.f32 %v4127, 0.0
        %v4136 = vmax.f32 %v4128, 0.0
        %v4137 = vmax.f32 %v4129, 0.0
        %v4138 = vrot.slane %v4130, 7
        %v4139 = vrot.slane %v4131, 7
        %v4140 = vrot.slane %v4132, 7
        %v4141 = vrot.slane %v4133, 7
        %v4142 = vrot.slane %v4134, 7
        %v4143 = vrot.slane %v4135, 7
        %v4144 = vrot.slane %v4136, 7
        %v4145 = vrot.slane %v4137, 7
        %v4146 = vsel %vm504, %v4138, %v4142
        %v4147 = vsel %vm504, %v4139, %v4143
        %v4148 = vsel %vm504, %v4140, %v4144
        %v4149 = vsel %vm504, %v4141, %v4145
        %v4150 = vsel %vm504, %v4142, %v4138
        %v4151 = vsel %vm504, %v4143, %v4139
        %v4152 = vsel %vm504, %v4144, %v4140
        %v4153 = vsel %vm504, %v4145, %v4141
        %v4154 = vsel %vm514, %v4150, 0.0
        %v4155 = vsel %vm514, %v4151, 0.0
        %v4156 = vsel %vm514, %v4152, 0.0
        %v4157 = vsel %vm514, %v4153, 0.0
        %v4158 = vsel %vm515, %v4146, 0.0
        %v4159 = vsel %vm515, %v4147, 0.0
        %v4160 = vsel %vm515, %v4148, 0.0
        %v4161 = vsel %vm515, %v4149, 0.0
        %v4162 = vpack.c.bf16 %v4158, %v4154
        %v4163 = vpack.c.bf16 %v4159, %v4155
        %v4164 = vpack.c.bf16 %v4160, %v4156
        %v4165 = vpack.c.bf16 %v4161, %v4157
        %v4166 = vld [vmem:[#allocation12] sm:$0xff]
        %v4167 = vld [vmem:[#allocation12 + $0x8] sm:$0xff]
        %v4168 = vld [vmem:[#allocation12 + $0x10] sm:$0xff]
        %v4169 = vld [vmem:[#allocation12 + $0x18] sm:$0xff]
        %v4170 = vld [vmem:[#allocation12 + $0x20] sm:$0xff]
        %v4171 = vld [vmem:[#allocation12 + $0x28] sm:$0xff]
        %v4172 = vld [vmem:[#allocation12 + $0x30] sm:$0xff]
        %v4173 = vld [vmem:[#allocation12 + $0x38] sm:$0xff]
        %v4174 = vld [vmem:[#allocation12 + $0x40] sm:$0xff]
        %v4175 = vld [vmem:[#allocation12 + $0x48] sm:$0xff]
        %v4176 = vld [vmem:[#allocation12 + $0x50] sm:$0xff]
        %v4177 = vld [vmem:[#allocation12 + $0x58] sm:$0xff]
        %v4178 = vld [vmem:[#allocation12 + $0x60] sm:$0xff]
        %v4179 = vld [vmem:[#allocation12 + $0x68] sm:$0xff]
        %v4180 = vld [vmem:[#allocation12 + $0x70] sm:$0xff]
        %v4181 = vld [vmem:[#allocation12 + $0x78] sm:$0xff]
        %v4182 = vld [vmem:[#allocation12 + $0x80] sm:$0xff]
        %v4183 = vld [vmem:[#allocation12 + $0x88] sm:$0xff]
        %v4184 = vld [vmem:[#allocation12 + $0x90] sm:$0xff]
        %v4185 = vld [vmem:[#allocation12 + $0x98] sm:$0xff]
        %v4186 = vld [vmem:[#allocation12 + $0xa0] sm:$0xff]
        %v4187 = vld [vmem:[#allocation12 + $0xa8] sm:$0xff]
        %v4188 = vld [vmem:[#allocation12 + $0xb0] sm:$0xff]
        %v4189 = vld [vmem:[#allocation12 + $0xb8] sm:$0xff]
        %v4190 = vld [vmem:[#allocation12 + $0xc0] sm:$0xff]
        %v4191 = vld [vmem:[#allocation12 + $0xc8] sm:$0xff]
        %v4192 = vld [vmem:[#allocation12 + $0xd0] sm:$0xff]
        %v4193 = vld [vmem:[#allocation12 + $0xd8] sm:$0xff]
        %v4194 = vld [vmem:[#allocation12 + $0xe0] sm:$0xff]
        %v4195 = vld [vmem:[#allocation12 + $0xe8] sm:$0xff]
        %v4196 = vld [vmem:[#allocation12 + $0xf0] sm:$0xff]
        %v4197 = vld [vmem:[#allocation12 + $0xf8] sm:$0xff]
        %v4198 = vld [vmem:[#allocation12 + $0x100] sm:$0xff]
        %v4199 = vld [vmem:[#allocation12 + $0x108] sm:$0xff]
        %v4200 = vld [vmem:[#allocation12 + $0x110] sm:$0xff]
        %v4201 = vld [vmem:[#allocation12 + $0x118] sm:$0xff]
        %v4202 = vld [vmem:[#allocation12 + $0x120] sm:$0xff]
        %v4203 = vld [vmem:[#allocation12 + $0x128] sm:$0xff]
        %v4204 = vld [vmem:[#allocation12 + $0x130] sm:$0xff]
        %v4205 = vld [vmem:[#allocation12 + $0x138] sm:$0xff]
        %v4206 = vld [vmem:[#allocation12 + $0x140] sm:$0xff]
        %v4207 = vld [vmem:[#allocation12 + $0x148] sm:$0xff]
        %v4208 = vld [vmem:[#allocation12 + $0x150] sm:$0xff]
        %v4209 = vld [vmem:[#allocation12 + $0x158] sm:$0xff]
        %v4210 = vld [vmem:[#allocation12 + $0x160] sm:$0xff]
        %v4211 = vld [vmem:[#allocation12 + $0x168] sm:$0xff]
        %v4212 = vld [vmem:[#allocation12 + $0x170] sm:$0xff]
        %v4213 = vld [vmem:[#allocation12 + $0x178] sm:$0xff]
        %v4214 = vld [vmem:[#allocation12 + $0x180] sm:$0xff]
        %v4215 = vld [vmem:[#allocation12 + $0x188] sm:$0xff]
        %v4216 = vld [vmem:[#allocation12 + $0x190] sm:$0xff]
        %v4217 = vld [vmem:[#allocation12 + $0x198] sm:$0xff]
        %v4218 = vld [vmem:[#allocation12 + $0x1a0] sm:$0xff]
        %v4219 = vld [vmem:[#allocation12 + $0x1a8] sm:$0xff]
        %v4220 = vld [vmem:[#allocation12 + $0x1b0] sm:$0xff]
        %v4221 = vld [vmem:[#allocation12 + $0x1b8] sm:$0xff]
        %v4222 = vld [vmem:[#allocation12 + $0x1c0] sm:$0xff]
        %v4223 = vld [vmem:[#allocation12 + $0x1c8] sm:$0xff]
        %v4224 = vld [vmem:[#allocation12 + $0x1d0] sm:$0xff]
        %v4225 = vld [vmem:[#allocation12 + $0x1d8] sm:$0xff]
        %v4226 = vld [vmem:[#allocation12 + $0x1e0] sm:$0xff]
        %v4227 = vld [vmem:[#allocation12 + $0x1e8] sm:$0xff]
        %v4228 = vld [vmem:[#allocation12 + $0x1f0] sm:$0xff]
        %v4229 = vld [vmem:[#allocation12 + $0x1f8] sm:$0xff]
        %v4230 = vld [vmem:[#allocation12 + $0x200] sm:$0xff]
        %v4231 = vld [vmem:[#allocation12 + $0x208] sm:$0xff]
        %v4232 = vld [vmem:[#allocation12 + $0x210] sm:$0xff]
        %v4233 = vld [vmem:[#allocation12 + $0x218] sm:$0xff]
        %v4234 = vld [vmem:[#allocation12 + $0x220] sm:$0xff]
        %v4235 = vld [vmem:[#allocation12 + $0x228] sm:$0xff]
        %v4236 = vld [vmem:[#allocation12 + $0x230] sm:$0xff]
        %v4237 = vld [vmem:[#allocation12 + $0x238] sm:$0xff]
        %v4238 = vld [vmem:[#allocation12 + $0x240] sm:$0xff]
        %v4239 = vld [vmem:[#allocation12 + $0x248] sm:$0xff]
        %v4240 = vld [vmem:[#allocation12 + $0x250] sm:$0xff]
        %v4241 = vld [vmem:[#allocation12 + $0x258] sm:$0xff]
        %v4242 = vld [vmem:[#allocation12 + $0x260] sm:$0xff]
        %v4243 = vld [vmem:[#allocation12 + $0x268] sm:$0xff]
        %v4244 = vld [vmem:[#allocation12 + $0x270] sm:$0xff]
        %v4245 = vld [vmem:[#allocation12 + $0x278] sm:$0xff]
        %v4246 = vld [vmem:[#allocation12 + $0x280] sm:$0xff]
        %v4247 = vld [vmem:[#allocation12 + $0x288] sm:$0xff]
        %v4248 = vld [vmem:[#allocation12 + $0x290] sm:$0xff]
        %v4249 = vld [vmem:[#allocation12 + $0x298] sm:$0xff]
        %v4250 = vld [vmem:[#allocation12 + $0x2a0] sm:$0xff]
        %v4251 = vld [vmem:[#allocation12 + $0x2a8] sm:$0xff]
        %v4252 = vld [vmem:[#allocation12 + $0x2b0] sm:$0xff]
        %v4253 = vld [vmem:[#allocation12 + $0x2b8] sm:$0xff]
        %v4254 = vld [vmem:[#allocation12 + $0x2c0] sm:$0xff]
        %v4255 = vld [vmem:[#allocation12 + $0x2c8] sm:$0xff]
        %v4256 = vld [vmem:[#allocation12 + $0x2d0] sm:$0xff]
        %v4257 = vld [vmem:[#allocation12 + $0x2d8] sm:$0xff]
        %v4258 = vld [vmem:[#allocation12 + $0x2e0] sm:$0xff]
        %v4259 = vld [vmem:[#allocation12 + $0x2e8] sm:$0xff]
        %v4260 = vld [vmem:[#allocation12 + $0x2f0] sm:$0xff]
        %v4261 = vld [vmem:[#allocation12 + $0x2f8] sm:$0xff]
        %v4262 = vld [vmem:[#allocation12 + $0x300] sm:$0xff]
        %v4263 = vld [vmem:[#allocation12 + $0x308] sm:$0xff]
        %v4264 = vld [vmem:[#allocation12 + $0x310] sm:$0xff]
        %v4265 = vld [vmem:[#allocation12 + $0x318] sm:$0xff]
        %v4266 = vld [vmem:[#allocation12 + $0x320] sm:$0xff]
        %v4267 = vld [vmem:[#allocation12 + $0x328] sm:$0xff]
        %v4268 = vld [vmem:[#allocation12 + $0x330] sm:$0xff]
        %v4269 = vld [vmem:[#allocation12 + $0x338] sm:$0xff]
        %v4270 = vld [vmem:[#allocation12 + $0x340] sm:$0xff]
        %v4271 = vld [vmem:[#allocation12 + $0x348] sm:$0xff]
        %v4272 = vld [vmem:[#allocation12 + $0x350] sm:$0xff]
        %v4273 = vld [vmem:[#allocation12 + $0x358] sm:$0xff]
        %v4274 = vld [vmem:[#allocation12 + $0x360] sm:$0xff]
        %v4275 = vld [vmem:[#allocation12 + $0x368] sm:$0xff]
        %v4276 = vld [vmem:[#allocation12 + $0x370] sm:$0xff]
        %v4277 = vld [vmem:[#allocation12 + $0x378] sm:$0xff]
        %v4278 = vld [vmem:[#allocation12 + $0x380] sm:$0xff]
        %v4279 = vld [vmem:[#allocation12 + $0x388] sm:$0xff]
        %v4280 = vld [vmem:[#allocation12 + $0x390] sm:$0xff]
        %v4281 = vld [vmem:[#allocation12 + $0x398] sm:$0xff]
        %v4282 = vld [vmem:[#allocation12 + $0x3a0] sm:$0xff]
        %v4283 = vld [vmem:[#allocation12 + $0x3a8] sm:$0xff]
        %v4284 = vld [vmem:[#allocation12 + $0x3b0] sm:$0xff]
        %v4285 = vld [vmem:[#allocation12 + $0x3b8] sm:$0xff]
        %v4286 = vld [vmem:[#allocation12 + $0x3c0] sm:$0xff]
        %v4287 = vld [vmem:[#allocation12 + $0x3c8] sm:$0xff]
        %v4288 = vld [vmem:[#allocation12 + $0x3d0] sm:$0xff]
        %v4289 = vld [vmem:[#allocation12 + $0x3d8] sm:$0xff]
        %v4290 = vld [vmem:[#allocation12 + $0x3e0] sm:$0xff]
        %v4291 = vld [vmem:[#allocation12 + $0x3e8] sm:$0xff]
        %v4292 = vld [vmem:[#allocation12 + $0x3f0] sm:$0xff]
        %v4293 = vld [vmem:[#allocation12 + $0x3f8] sm:$0xff]
        %v4294 = vpack.c.bf16 %v4134, %v4130
        %v4295 = vpack.c.bf16 %v4135, %v4131
        %v4296 = vpack.c.bf16 %v4136, %v4132
        %v4297 = vpack.c.bf16 %v4137, %v4133
        %s4298 = scalar_lea.vmem [#allocation12], 1024
        %v4299 = vld [vmem:[%s4298] sm:$0xff]
        %v4300 = vld [vmem:[%s4298 + $0x8] sm:$0xff]
        %v4301 = vld [vmem:[%s4298 + $0x10] sm:$0xff]
        %v4302 = vld [vmem:[%s4298 + $0x18] sm:$0xff]
        %v4303 = vld [vmem:[%s4298 + $0x20] sm:$0xff]
        %v4304 = vld [vmem:[%s4298 + $0x28] sm:$0xff]
        %v4305 = vld [vmem:[%s4298 + $0x30] sm:$0xff]
        %v4306 = vld [vmem:[%s4298 + $0x38] sm:$0xff]
        %v4307 = vld [vmem:[%s4298 + $0x40] sm:$0xff]
        %v4308 = vld [vmem:[%s4298 + $0x48] sm:$0xff]
        %v4309 = vld [vmem:[%s4298 + $0x50] sm:$0xff]
        %v4310 = vld [vmem:[%s4298 + $0x58] sm:$0xff]
        %v4311 = vld [vmem:[%s4298 + $0x60] sm:$0xff]
        %v4312 = vld [vmem:[%s4298 + $0x68] sm:$0xff]
        %v4313 = vld [vmem:[%s4298 + $0x70] sm:$0xff]
        %v4314 = vld [vmem:[%s4298 + $0x78] sm:$0xff]
        %v4315 = vld [vmem:[%s4298 + $0x80] sm:$0xff]
        %v4316 = vld [vmem:[%s4298 + $0x88] sm:$0xff]
        %v4317 = vld [vmem:[%s4298 + $0x90] sm:$0xff]
        %v4318 = vld [vmem:[%s4298 + $0x98] sm:$0xff]
        %v4319 = vld [vmem:[%s4298 + $0xa0] sm:$0xff]
        %v4320 = vld [vmem:[%s4298 + $0xa8] sm:$0xff]
        %v4321 = vld [vmem:[%s4298 + $0xb0] sm:$0xff]
        %v4322 = vld [vmem:[%s4298 + $0xb8] sm:$0xff]
        %v4323 = vld [vmem:[%s4298 + $0xc0] sm:$0xff]
        %v4324 = vld [vmem:[%s4298 + $0xc8] sm:$0xff]
        %v4325 = vld [vmem:[%s4298 + $0xd0] sm:$0xff]
        %v4326 = vld [vmem:[%s4298 + $0xd8] sm:$0xff]
        %v4327 = vld [vmem:[%s4298 + $0xe0] sm:$0xff]
        %v4328 = vld [vmem:[%s4298 + $0xe8] sm:$0xff]
        %v4329 = vld [vmem:[%s4298 + $0xf0] sm:$0xff]
        %v4330 = vld [vmem:[%s4298 + $0xf8] sm:$0xff]
        %v4331 = vld [vmem:[%s4298 + $0x100] sm:$0xff]
        %v4332 = vld [vmem:[%s4298 + $0x108] sm:$0xff]
        %v4333 = vld [vmem:[%s4298 + $0x110] sm:$0xff]
        %v4334 = vld [vmem:[%s4298 + $0x118] sm:$0xff]
        %v4335 = vld [vmem:[%s4298 + $0x120] sm:$0xff]
        %v4336 = vld [vmem:[%s4298 + $0x128] sm:$0xff]
        %v4337 = vld [vmem:[%s4298 + $0x130] sm:$0xff]
        %v4338 = vld [vmem:[%s4298 + $0x138] sm:$0xff]
        %v4339 = vld [vmem:[%s4298 + $0x140] sm:$0xff]
        %v4340 = vld [vmem:[%s4298 + $0x148] sm:$0xff]
        %v4341 = vld [vmem:[%s4298 + $0x150] sm:$0xff]
        %v4342 = vld [vmem:[%s4298 + $0x158] sm:$0xff]
        %v4343 = vld [vmem:[%s4298 + $0x160] sm:$0xff]
        %v4344 = vld [vmem:[%s4298 + $0x168] sm:$0xff]
        %v4345 = vld [vmem:[%s4298 + $0x170] sm:$0xff]
        %v4346 = vld [vmem:[%s4298 + $0x178] sm:$0xff]
        %v4347 = vld [vmem:[%s4298 + $0x180] sm:$0xff]
        %v4348 = vld [vmem:[%s4298 + $0x188] sm:$0xff]
        %v4349 = vld [vmem:[%s4298 + $0x190] sm:$0xff]
        %v4350 = vld [vmem:[%s4298 + $0x198] sm:$0xff]
        %v4351 = vld [vmem:[%s4298 + $0x1a0] sm:$0xff]
        %v4352 = vld [vmem:[%s4298 + $0x1a8] sm:$0xff]
        %v4353 = vld [vmem:[%s4298 + $0x1b0] sm:$0xff]
        %v4354 = vld [vmem:[%s4298 + $0x1b8] sm:$0xff]
        %v4355 = vld [vmem:[%s4298 + $0x1c0] sm:$0xff]
        %v4356 = vld [vmem:[%s4298 + $0x1c8] sm:$0xff]
        %v4357 = vld [vmem:[%s4298 + $0x1d0] sm:$0xff]
        %v4358 = vld [vmem:[%s4298 + $0x1d8] sm:$0xff]
        %v4359 = vld [vmem:[%s4298 + $0x1e0] sm:$0xff]
        %v4360 = vld [vmem:[%s4298 + $0x1e8] sm:$0xff]
        %v4361 = vld [vmem:[%s4298 + $0x1f0] sm:$0xff]
        %v4362 = vld [vmem:[%s4298 + $0x1f8] sm:$0xff]
        %v4363 = vld [vmem:[%s4298 + $0x200] sm:$0xff]
        %v4364 = vld [vmem:[%s4298 + $0x208] sm:$0xff]
        %v4365 = vld [vmem:[%s4298 + $0x210] sm:$0xff]
        %v4366 = vld [vmem:[%s4298 + $0x218] sm:$0xff]
        %v4367 = vld [vmem:[%s4298 + $0x220] sm:$0xff]
        %v4368 = vld [vmem:[%s4298 + $0x228] sm:$0xff]
        %v4369 = vld [vmem:[%s4298 + $0x230] sm:$0xff]
        %v4370 = vld [vmem:[%s4298 + $0x238] sm:$0xff]
        %v4371 = vld [vmem:[%s4298 + $0x240] sm:$0xff]
        %v4372 = vld [vmem:[%s4298 + $0x248] sm:$0xff]
        %v4373 = vld [vmem:[%s4298 + $0x250] sm:$0xff]
        %v4374 = vld [vmem:[%s4298 + $0x258] sm:$0xff]
        %v4375 = vld [vmem:[%s4298 + $0x260] sm:$0xff]
        %v4376 = vld [vmem:[%s4298 + $0x268] sm:$0xff]
        %v4377 = vld [vmem:[%s4298 + $0x270] sm:$0xff]
        %v4378 = vld [vmem:[%s4298 + $0x278] sm:$0xff]
        %v4379 = vld [vmem:[%s4298 + $0x280] sm:$0xff]
        %v4380 = vld [vmem:[%s4298 + $0x288] sm:$0xff]
        %v4381 = vld [vmem:[%s4298 + $0x290] sm:$0xff]
        %v4382 = vld [vmem:[%s4298 + $0x298] sm:$0xff]
        %v4383 = vld [vmem:[%s4298 + $0x2a0] sm:$0xff]
        %v4384 = vld [vmem:[%s4298 + $0x2a8] sm:$0xff]
        %v4385 = vld [vmem:[%s4298 + $0x2b0] sm:$0xff]
        %v4386 = vld [vmem:[%s4298 + $0x2b8] sm:$0xff]
        %v4387 = vld [vmem:[%s4298 + $0x2c0] sm:$0xff]
        %v4388 = vld [vmem:[%s4298 + $0x2c8] sm:$0xff]
        %v4389 = vld [vmem:[%s4298 + $0x2d0] sm:$0xff]
        %v4390 = vld [vmem:[%s4298 + $0x2d8] sm:$0xff]
        %v4391 = vld [vmem:[%s4298 + $0x2e0] sm:$0xff]
        %v4392 = vld [vmem:[%s4298 + $0x2e8] sm:$0xff]
        %v4393 = vld [vmem:[%s4298 + $0x2f0] sm:$0xff]
        %v4394 = vld [vmem:[%s4298 + $0x2f8] sm:$0xff]
        %v4395 = vld [vmem:[%s4298 + $0x300] sm:$0xff]
        %v4396 = vld [vmem:[%s4298 + $0x308] sm:$0xff]
        %v4397 = vld [vmem:[%s4298 + $0x310] sm:$0xff]
        %v4398 = vld [vmem:[%s4298 + $0x318] sm:$0xff]
        %v4399 = vld [vmem:[%s4298 + $0x320] sm:$0xff]
        %v4400 = vld [vmem:[%s4298 + $0x328] sm:$0xff]
        %v4401 = vld [vmem:[%s4298 + $0x330] sm:$0xff]
        %v4402 = vld [vmem:[%s4298 + $0x338] sm:$0xff]
        %v4403 = vld [vmem:[%s4298 + $0x340] sm:$0xff]
        %v4404 = vld [vmem:[%s4298 + $0x348] sm:$0xff]
        %v4405 = vld [vmem:[%s4298 + $0x350] sm:$0xff]
        %v4406 = vld [vmem:[%s4298 + $0x358] sm:$0xff]
        %v4407 = vld [vmem:[%s4298 + $0x360] sm:$0xff]
        %v4408 = vld [vmem:[%s4298 + $0x368] sm:$0xff]
        %v4409 = vld [vmem:[%s4298 + $0x370] sm:$0xff]
        %v4410 = vld [vmem:[%s4298 + $0x378] sm:$0xff]
        %v4411 = vld [vmem:[%s4298 + $0x380] sm:$0xff]
        %v4412 = vld [vmem:[%s4298 + $0x388] sm:$0xff]
        %v4413 = vld [vmem:[%s4298 + $0x390] sm:$0xff]
        %v4414 = vld [vmem:[%s4298 + $0x398] sm:$0xff]
        %v4415 = vld [vmem:[%s4298 + $0x3a0] sm:$0xff]
        %v4416 = vld [vmem:[%s4298 + $0x3a8] sm:$0xff]
        %v4417 = vld [vmem:[%s4298 + $0x3b0] sm:$0xff]
        %v4418 = vld [vmem:[%s4298 + $0x3b8] sm:$0xff]
        %v4419 = vld [vmem:[%s4298 + $0x3c0] sm:$0xff]
        %v4420 = vld [vmem:[%s4298 + $0x3c8] sm:$0xff]
        %v4421 = vld [vmem:[%s4298 + $0x3d0] sm:$0xff]
        %v4422 = vld [vmem:[%s4298 + $0x3d8] sm:$0xff]
        %v4423 = vld [vmem:[%s4298 + $0x3e0] sm:$0xff]
        %v4424 = vld [vmem:[%s4298 + $0x3e8] sm:$0xff]
        %v4425 = vld [vmem:[%s4298 + $0x3f0] sm:$0xff]
        %v4426 = vld [vmem:[%s4298 + $0x3f8] sm:$0xff]
        %v4555 = vunpack.c.l.b16 %v4299
        %v4556 = vunpack.c.h.b16 %v4299
        %v4557 = vunpack.c.l.b16 %v4300
        %v4558 = vunpack.c.h.b16 %v4300
        %v4559 = vunpack.c.l.b16 %v4301
        %v4560 = vunpack.c.h.b16 %v4301
        %v4561 = vunpack.c.l.b16 %v4302
        %v4562 = vunpack.c.h.b16 %v4302
        %v4563 = vunpack.c.l.b16 %v4303
        %v4564 = vunpack.c.h.b16 %v4303
        %v4565 = vunpack.c.l.b16 %v4304
        %v4566 = vunpack.c.h.b16 %v4304
        %v4567 = vunpack.c.l.b16 %v4305
        %v4568 = vunpack.c.h.b16 %v4305
        %v4569 = vunpack.c.l.b16 %v4306
        %v4570 = vunpack.c.h.b16 %v4306
        %v4571 = vunpack.c.l.b16 %v4307
        %v4572 = vunpack.c.h.b16 %v4307
        %v4573 = vunpack.c.l.b16 %v4308
        %v4574 = vunpack.c.h.b16 %v4308
        %v4575 = vunpack.c.l.b16 %v4309
        %v4576 = vunpack.c.h.b16 %v4309
        %v4577 = vunpack.c.l.b16 %v4310
        %v4578 = vunpack.c.h.b16 %v4310
        %v4579 = vunpack.c.l.b16 %v4311
        %v4580 = vunpack.c.h.b16 %v4311
        %v4581 = vunpack.c.l.b16 %v4312
        %v4582 = vunpack.c.h.b16 %v4312
        %v4583 = vunpack.c.l.b16 %v4313
        %v4584 = vunpack.c.h.b16 %v4313
        %v4585 = vunpack.c.l.b16 %v4314
        %v4586 = vunpack.c.h.b16 %v4314
        %v4587 = vunpack.c.l.b16 %v4315
        %v4588 = vunpack.c.h.b16 %v4315
        %v4589 = vunpack.c.l.b16 %v4316
        %v4590 = vunpack.c.h.b16 %v4316
        %v4591 = vunpack.c.l.b16 %v4317
        %v4592 = vunpack.c.h.b16 %v4317
        %v4593 = vunpack.c.l.b16 %v4318
        %v4594 = vunpack.c.h.b16 %v4318
        %v4595 = vunpack.c.l.b16 %v4319
        %v4596 = vunpack.c.h.b16 %v4319
        %v4597 = vunpack.c.l.b16 %v4320
        %v4598 = vunpack.c.h.b16 %v4320
        %v4599 = vunpack.c.l.b16 %v4321
        %v4600 = vunpack.c.h.b16 %v4321
        %v4601 = vunpack.c.l.b16 %v4322
        %v4602 = vunpack.c.h.b16 %v4322
        %v4603 = vunpack.c.l.b16 %v4323
        %v4604 = vunpack.c.h.b16 %v4323
        %v4605 = vunpack.c.l.b16 %v4324
        %v4606 = vunpack.c.h.b16 %v4324
        %v4607 = vunpack.c.l.b16 %v4325
        %v4608 = vunpack.c.h.b16 %v4325
        %v4609 = vunpack.c.l.b16 %v4326
        %v4610 = vunpack.c.h.b16 %v4326
        %v4611 = vunpack.c.l.b16 %v4327
        %v4612 = vunpack.c.h.b16 %v4327
        %v4613 = vunpack.c.l.b16 %v4328
        %v4614 = vunpack.c.h.b16 %v4328
        %v4615 = vunpack.c.l.b16 %v4329
        %v4616 = vunpack.c.h.b16 %v4329
        %v4617 = vunpack.c.l.b16 %v4330
        %v4618 = vunpack.c.h.b16 %v4330
        %v4619 = vunpack.c.l.b16 %v4331
        %v4620 = vunpack.c.h.b16 %v4331
        %v4621 = vunpack.c.l.b16 %v4332
        %v4622 = vunpack.c.h.b16 %v4332
        %v4623 = vunpack.c.l.b16 %v4333
        %v4624 = vunpack.c.h.b16 %v4333
        %v4625 = vunpack.c.l.b16 %v4334
        %v4626 = vunpack.c.h.b16 %v4334
        %v4627 = vunpack.c.l.b16 %v4335
        %v4628 = vunpack.c.h.b16 %v4335
        %v4629 = vunpack.c.l.b16 %v4336
        %v4630 = vunpack.c.h.b16 %v4336
        %v4631 = vunpack.c.l.b16 %v4337
        %v4632 = vunpack.c.h.b16 %v4337
        %v4633 = vunpack.c.l.b16 %v4338
        %v4634 = vunpack.c.h.b16 %v4338
        %v4635 = vunpack.c.l.b16 %v4339
        %v4636 = vunpack.c.h.b16 %v4339
        %v4637 = vunpack.c.l.b16 %v4340
        %v4638 = vunpack.c.h.b16 %v4340
        %v4639 = vunpack.c.l.b16 %v4341
        %v4640 = vunpack.c.h.b16 %v4341
        %v4641 = vunpack.c.l.b16 %v4342
        %v4642 = vunpack.c.h.b16 %v4342
        %v4643 = vunpack.c.l.b16 %v4343
        %v4644 = vunpack.c.h.b16 %v4343
        %v4645 = vunpack.c.l.b16 %v4344
        %v4646 = vunpack.c.h.b16 %v4344
        %v4647 = vunpack.c.l.b16 %v4345
        %v4648 = vunpack.c.h.b16 %v4345
        %v4649 = vunpack.c.l.b16 %v4346
        %v4650 = vunpack.c.h.b16 %v4346
        %v4651 = vunpack.c.l.b16 %v4347
        %v4652 = vunpack.c.h.b16 %v4347
        %v4653 = vunpack.c.l.b16 %v4348
        %v4654 = vunpack.c.h.b16 %v4348
        %v4655 = vunpack.c.l.b16 %v4349
        %v4656 = vunpack.c.h.b16 %v4349
        %v4657 = vunpack.c.l.b16 %v4350
        %v4658 = vunpack.c.h.b16 %v4350
        %v4659 = vunpack.c.l.b16 %v4351
        %v4660 = vunpack.c.h.b16 %v4351
        %v4661 = vunpack.c.l.b16 %v4352
        %v4662 = vunpack.c.h.b16 %v4352
        %v4663 = vunpack.c.l.b16 %v4353
        %v4664 = vunpack.c.h.b16 %v4353
        %v4665 = vunpack.c.l.b16 %v4354
        %v4666 = vunpack.c.h.b16 %v4354
        %v4667 = vunpack.c.l.b16 %v4355
        %v4668 = vunpack.c.h.b16 %v4355
        %v4669 = vunpack.c.l.b16 %v4356
        %v4670 = vunpack.c.h.b16 %v4356
        %v4671 = vunpack.c.l.b16 %v4357
        %v4672 = vunpack.c.h.b16 %v4357
        %v4673 = vunpack.c.l.b16 %v4358
        %v4674 = vunpack.c.h.b16 %v4358
        %v4675 = vunpack.c.l.b16 %v4359
        %v4676 = vunpack.c.h.b16 %v4359
        %v4677 = vunpack.c.l.b16 %v4360
        %v4678 = vunpack.c.h.b16 %v4360
        %v4679 = vunpack.c.l.b16 %v4361
        %v4680 = vunpack.c.h.b16 %v4361
        %v4681 = vunpack.c.l.b16 %v4362
        %v4682 = vunpack.c.h.b16 %v4362
        %v4683 = vunpack.c.l.b16 %v4363
        %v4684 = vunpack.c.h.b16 %v4363
        %v4685 = vunpack.c.l.b16 %v4364
        %v4686 = vunpack.c.h.b16 %v4364
        %v4687 = vunpack.c.l.b16 %v4365
        %v4688 = vunpack.c.h.b16 %v4365
        %v4689 = vunpack.c.l.b16 %v4366
        %v4690 = vunpack.c.h.b16 %v4366
        %v4691 = vunpack.c.l.b16 %v4367
        %v4692 = vunpack.c.h.b16 %v4367
        %v4693 = vunpack.c.l.b16 %v4368
        %v4694 = vunpack.c.h.b16 %v4368
        %v4695 = vunpack.c.l.b16 %v4369
        %v4696 = vunpack.c.h.b16 %v4369
        %v4697 = vunpack.c.l.b16 %v4370
        %v4698 = vunpack.c.h.b16 %v4370
        %v4699 = vunpack.c.l.b16 %v4371
        %v4700 = vunpack.c.h.b16 %v4371
        %v4701 = vunpack.c.l.b16 %v4372
        %v4702 = vunpack.c.h.b16 %v4372
        %v4703 = vunpack.c.l.b16 %v4373
        %v4704 = vunpack.c.h.b16 %v4373
        %v4705 = vunpack.c.l.b16 %v4374
        %v4706 = vunpack.c.h.b16 %v4374
        %v4707 = vunpack.c.l.b16 %v4375
        %v4708 = vunpack.c.h.b16 %v4375
        %v4709 = vunpack.c.l.b16 %v4376
        %v4710 = vunpack.c.h.b16 %v4376
        %v4711 = vunpack.c.l.b16 %v4377
        %v4712 = vunpack.c.h.b16 %v4377
        %v4713 = vunpack.c.l.b16 %v4378
        %v4714 = vunpack.c.h.b16 %v4378
        %v4715 = vunpack.c.l.b16 %v4379
        %v4716 = vunpack.c.h.b16 %v4379
        %v4717 = vunpack.c.l.b16 %v4380
        %v4718 = vunpack.c.h.b16 %v4380
        %v4719 = vunpack.c.l.b16 %v4381
        %v4720 = vunpack.c.h.b16 %v4381
        %v4721 = vunpack.c.l.b16 %v4382
        %v4722 = vunpack.c.h.b16 %v4382
        %v4723 = vunpack.c.l.b16 %v4383
        %v4724 = vunpack.c.h.b16 %v4383
        %v4725 = vunpack.c.l.b16 %v4384
        %v4726 = vunpack.c.h.b16 %v4384
        %v4727 = vunpack.c.l.b16 %v4385
        %v4728 = vunpack.c.h.b16 %v4385
        %v4729 = vunpack.c.l.b16 %v4386
        %v4730 = vunpack.c.h.b16 %v4386
        %v4731 = vunpack.c.l.b16 %v4387
        %v4732 = vunpack.c.h.b16 %v4387
        %v4733 = vunpack.c.l.b16 %v4388
        %v4734 = vunpack.c.h.b16 %v4388
        %v4735 = vunpack.c.l.b16 %v4389
        %v4736 = vunpack.c.h.b16 %v4389
        %v4737 = vunpack.c.l.b16 %v4390
        %v4738 = vunpack.c.h.b16 %v4390
        %v4739 = vunpack.c.l.b16 %v4391
        %v4740 = vunpack.c.h.b16 %v4391
        %v4741 = vunpack.c.l.b16 %v4392
        %v4742 = vunpack.c.h.b16 %v4392
        %v4743 = vunpack.c.l.b16 %v4393
        %v4744 = vunpack.c.h.b16 %v4393
        %v4745 = vunpack.c.l.b16 %v4394
        %v4746 = vunpack.c.h.b16 %v4394
        %v4747 = vunpack.c.l.b16 %v4395
        %v4748 = vunpack.c.h.b16 %v4395
        %v4749 = vunpack.c.l.b16 %v4396
        %v4750 = vunpack.c.h.b16 %v4396
        %v4751 = vunpack.c.l.b16 %v4397
        %v4752 = vunpack.c.h.b16 %v4397
        %v4753 = vunpack.c.l.b16 %v4398
        %v4754 = vunpack.c.h.b16 %v4398
        %v4755 = vunpack.c.l.b16 %v4399
        %v4756 = vunpack.c.h.b16 %v4399
        %v4757 = vunpack.c.l.b16 %v4400
        %v4758 = vunpack.c.h.b16 %v4400
        %v4759 = vunpack.c.l.b16 %v4401
        %v4760 = vunpack.c.h.b16 %v4401
        %v4761 = vunpack.c.l.b16 %v4402
        %v4762 = vunpack.c.h.b16 %v4402
        %v4763 = vunpack.c.l.b16 %v4403
        %v4764 = vunpack.c.h.b16 %v4403
        %v4765 = vunpack.c.l.b16 %v4404
        %v4766 = vunpack.c.h.b16 %v4404
        %v4767 = vunpack.c.l.b16 %v4405
        %v4768 = vunpack.c.h.b16 %v4405
        %v4769 = vunpack.c.l.b16 %v4406
        %v4770 = vunpack.c.h.b16 %v4406
        %v4771 = vunpack.c.l.b16 %v4407
        %v4772 = vunpack.c.h.b16 %v4407
        %v4773 = vunpack.c.l.b16 %v4408
        %v4774 = vunpack.c.h.b16 %v4408
        %v4775 = vunpack.c.l.b16 %v4409
        %v4776 = vunpack.c.h.b16 %v4409
        %v4777 = vunpack.c.l.b16 %v4410
        %v4778 = vunpack.c.h.b16 %v4410
        %v4779 = vunpack.c.l.b16 %v4411
        %v4780 = vunpack.c.h.b16 %v4411
        %v4781 = vunpack.c.l.b16 %v4412
        %v4782 = vunpack.c.h.b16 %v4412
        %v4783 = vunpack.c.l.b16 %v4413
        %v4784 = vunpack.c.h.b16 %v4413
        %v4785 = vunpack.c.l.b16 %v4414
        %v4786 = vunpack.c.h.b16 %v4414
        %v4787 = vunpack.c.l.b16 %v4415
        %v4788 = vunpack.c.h.b16 %v4415
        %v4789 = vunpack.c.l.b16 %v4416
        %v4790 = vunpack.c.h.b16 %v4416
        %v4791 = vunpack.c.l.b16 %v4417
        %v4792 = vunpack.c.h.b16 %v4417
        %v4793 = vunpack.c.l.b16 %v4418
        %v4794 = vunpack.c.h.b16 %v4418
        %v4795 = vunpack.c.l.b16 %v4419
        %v4796 = vunpack.c.h.b16 %v4419
        %v4797 = vunpack.c.l.b16 %v4420
        %v4798 = vunpack.c.h.b16 %v4420
        %v4799 = vunpack.c.l.b16 %v4421
        %v4800 = vunpack.c.h.b16 %v4421
        %v4801 = vunpack.c.l.b16 %v4422
        %v4802 = vunpack.c.h.b16 %v4422
        %v4803 = vunpack.c.l.b16 %v4423
        %v4804 = vunpack.c.h.b16 %v4423
        %v4805 = vunpack.c.l.b16 %v4424
        %v4806 = vunpack.c.h.b16 %v4424
        %v4807 = vunpack.c.l.b16 %v4425
        %v4808 = vunpack.c.h.b16 %v4425
        %v4809 = vunpack.c.l.b16 %v4426
        %v4810 = vunpack.c.h.b16 %v4426
        %v4811 = vpack.c.b16 %v4559, %v4555
        %v4812 = vpack.c.b16 %v4560, %v4556
        %v4813 = vpack.c.b16 %v4561, %v4557
        %v4814 = vpack.c.b16 %v4562, %v4558
        %v4815 = vpack.c.b16 %v4567, %v4563
        %v4816 = vpack.c.b16 %v4568, %v4564
        %v4817 = vpack.c.b16 %v4569, %v4565
        %v4818 = vpack.c.b16 %v4570, %v4566
        %v4819 = vpack.c.b16 %v4575, %v4571
        %v4820 = vpack.c.b16 %v4576, %v4572
        %v4821 = vpack.c.b16 %v4577, %v4573
        %v4822 = vpack.c.b16 %v4578, %v4574
        %v4823 = vpack.c.b16 %v4583, %v4579
        %v4824 = vpack.c.b16 %v4584, %v4580
        %v4825 = vpack.c.b16 %v4585, %v4581
        %v4826 = vpack.c.b16 %v4586, %v4582
        %v4827 = vpack.c.b16 %v4591, %v4587
        %v4828 = vpack.c.b16 %v4592, %v4588
        %v4829 = vpack.c.b16 %v4593, %v4589
        %v4830 = vpack.c.b16 %v4594, %v4590
        %v4831 = vpack.c.b16 %v4599, %v4595
        %v4832 = vpack.c.b16 %v4600, %v4596
        %v4833 = vpack.c.b16 %v4601, %v4597
        %v4834 = vpack.c.b16 %v4602, %v4598
        %v4835 = vpack.c.b16 %v4607, %v4603
        %v4836 = vpack.c.b16 %v4608, %v4604
        %v4837 = vpack.c.b16 %v4609, %v4605
        %v4838 = vpack.c.b16 %v4610, %v4606
        %v4839 = vpack.c.b16 %v4615, %v4611
        %v4840 = vpack.c.b16 %v4616, %v4612
        %v4841 = vpack.c.b16 %v4617, %v4613
        %v4842 = vpack.c.b16 %v4618, %v4614
        %v4843 = vpack.c.b16 %v4623, %v4619
        %v4844 = vpack.c.b16 %v4624, %v4620
        %v4845 = vpack.c.b16 %v4625, %v4621
        %v4846 = vpack.c.b16 %v4626, %v4622
        %v4847 = vpack.c.b16 %v4631, %v4627
        %v4848 = vpack.c.b16 %v4632, %v4628
        %v4849 = vpack.c.b16 %v4633, %v4629
        %v4850 = vpack.c.b16 %v4634, %v4630
        %v4851 = vpack.c.b16 %v4639, %v4635
        %v4852 = vpack.c.b16 %v4640, %v4636
        %v4853 = vpack.c.b16 %v4641, %v4637
        %v4854 = vpack.c.b16 %v4642, %v4638
        %v4855 = vpack.c.b16 %v4647, %v4643
        %v4856 = vpack.c.b16 %v4648, %v4644
        %v4857 = vpack.c.b16 %v4649, %v4645
        %v4858 = vpack.c.b16 %v4650, %v4646
        %v4859 = vpack.c.b16 %v4655, %v4651
        %v4860 = vpack.c.b16 %v4656, %v4652
        %v4861 = vpack.c.b16 %v4657, %v4653
        %v4862 = vpack.c.b16 %v4658, %v4654
        %v4863 = vpack.c.b16 %v4663, %v4659
        %v4864 = vpack.c.b16 %v4664, %v4660
        %v4865 = vpack.c.b16 %v4665, %v4661
        %v4866 = vpack.c.b16 %v4666, %v4662
        %v4867 = vpack.c.b16 %v4671, %v4667
        %v4868 = vpack.c.b16 %v4672, %v4668
        %v4869 = vpack.c.b16 %v4673, %v4669
        %v4870 = vpack.c.b16 %v4674, %v4670
        %v4871 = vpack.c.b16 %v4679, %v4675
        %v4872 = vpack.c.b16 %v4680, %v4676
        %v4873 = vpack.c.b16 %v4681, %v4677
        %v4874 = vpack.c.b16 %v4682, %v4678
        %v4875 = vpack.c.b16 %v4687, %v4683
        %v4876 = vpack.c.b16 %v4688, %v4684
        %v4877 = vpack.c.b16 %v4689, %v4685
        %v4878 = vpack.c.b16 %v4690, %v4686
        %v4879 = vpack.c.b16 %v4695, %v4691
        %v4880 = vpack.c.b16 %v4696, %v4692
        %v4881 = vpack.c.b16 %v4697, %v4693
        %v4882 = vpack.c.b16 %v4698, %v4694
        %v4883 = vpack.c.b16 %v4703, %v4699
        %v4884 = vpack.c.b16 %v4704, %v4700
        %v4885 = vpack.c.b16 %v4705, %v4701
        %v4886 = vpack.c.b16 %v4706, %v4702
        %v4887 = vpack.c.b16 %v4711, %v4707
        %v4888 = vpack.c.b16 %v4712, %v4708
        %v4889 = vpack.c.b16 %v4713, %v4709
        %v4890 = vpack.c.b16 %v4714, %v4710
        %v4891 = vpack.c.b16 %v4719, %v4715
        %v4892 = vpack.c.b16 %v4720, %v4716
        %v4893 = vpack.c.b16 %v4721, %v4717
        %v4894 = vpack.c.b16 %v4722, %v4718
        %v4895 = vpack.c.b16 %v4727, %v4723
        %v4896 = vpack.c.b16 %v4728, %v4724
        %v4897 = vpack.c.b16 %v4729, %v4725
        %v4898 = vpack.c.b16 %v4730, %v4726
        %v4899 = vpack.c.b16 %v4735, %v4731
        %v4900 = vpack.c.b16 %v4736, %v4732
        %v4901 = vpack.c.b16 %v4737, %v4733
        %v4902 = vpack.c.b16 %v4738, %v4734
        %v4903 = vpack.c.b16 %v4743, %v4739
        %v4904 = vpack.c.b16 %v4744, %v4740
        %v4905 = vpack.c.b16 %v4745, %v4741
        %v4906 = vpack.c.b16 %v4746, %v4742
        %v4907 = vpack.c.b16 %v4751, %v4747
        %v4908 = vpack.c.b16 %v4752, %v4748
        %v4909 = vpack.c.b16 %v4753, %v4749
        %v4910 = vpack.c.b16 %v4754, %v4750
        %v4911 = vpack.c.b16 %v4759, %v4755
        %v4912 = vpack.c.b16 %v4760, %v4756
        %v4913 = vpack.c.b16 %v4761, %v4757
        %v4914 = vpack.c.b16 %v4762, %v4758
        %v4915 = vpack.c.b16 %v4767, %v4763
        %v4916 = vpack.c.b16 %v4768, %v4764
        %v4917 = vpack.c.b16 %v4769, %v4765
        %v4918 = vpack.c.b16 %v4770, %v4766
        %v4919 = vpack.c.b16 %v4775, %v4771
        %v4920 = vpack.c.b16 %v4776, %v4772
        %v4921 = vpack.c.b16 %v4777, %v4773
        %v4922 = vpack.c.b16 %v4778, %v4774
        %v4923 = vpack.c.b16 %v4783, %v4779
        %v4924 = vpack.c.b16 %v4784, %v4780
        %v4925 = vpack.c.b16 %v4785, %v4781
        %v4926 = vpack.c.b16 %v4786, %v4782
        %v4927 = vpack.c.b16 %v4791, %v4787
        %v4928 = vpack.c.b16 %v4792, %v4788
        %v4929 = vpack.c.b16 %v4793, %v4789
        %v4930 = vpack.c.b16 %v4794, %v4790
        %v4931 = vpack.c.b16 %v4799, %v4795
        %v4932 = vpack.c.b16 %v4800, %v4796
        %v4933 = vpack.c.b16 %v4801, %v4797
        %v4934 = vpack.c.b16 %v4802, %v4798
        %v4935 = vpack.c.b16 %v4807, %v4803
        %v4936 = vpack.c.b16 %v4808, %v4804
        %v4937 = vpack.c.b16 %v4809, %v4805
        %v4938 = vpack.c.b16 %v4810, %v4806
        %5067 = vmatpush.bf16.msra.mxu0 %v4839
        %5068 = vmatpush.bf16.msra.mxu0 %v4835
        %5069 = vmatpush.bf16.msra.mxu0 %v4831
        %5070 = vmatpush.bf16.msra.mxu0 %v4827
        %5071 = vmatpush.bf16.msra.mxu0 %v4823
        %5072 = vmatpush.bf16.msra.mxu0 %v4819
        %5073 = vmatpush.bf16.msra.mxu0 %v4815
        %5074 = vmatpush.bf16.msra.mxu0 %v4811
        %5075 = vmatmul.bf16.gmra.mxu0 %v4294
        %v5076 = vpop.f32.mrf.mxu0
        %v5077 = vadd.f32 0.0, %v5076
        %v5078 = vpop.f32.mrf.mxu0
        %v5079 = vadd.f32 0.0, %v5078
        %5080 = vdwg.mxu0
        %5081 = vmatpush.bf16.msra.mxu0 %v4871
        %5082 = vmatpush.bf16.msra.mxu0 %v4867
        %5083 = vmatpush.bf16.msra.mxu0 %v4863
        %5084 = vmatpush.bf16.msra.mxu0 %v4859
        %5085 = vmatpush.bf16.msra.mxu0 %v4855
        %5086 = vmatpush.bf16.msra.mxu0 %v4851
        %5087 = vmatpush.bf16.msra.mxu0 %v4847
        %5088 = vmatpush.bf16.msra.mxu0 %v4843
        %5089 = vmatmul.bf16.gmra.mxu0 %v4295
        %v5090 = vpop.f32.mrf.mxu0
        %v5091 = vadd.f32 %v5077, %v5090
        %v5092 = vpop.f32.mrf.mxu0
        %v5093 = vadd.f32 %v5079, %v5092
        %5094 = vdwg.mxu0
        %5095 = vmatpush.bf16.msra.mxu0 %v4903
        %5096 = vmatpush.bf16.msra.mxu0 %v4899
        %5097 = vmatpush.bf16.msra.mxu0 %v4895
        %5098 = vmatpush.bf16.msra.mxu0 %v4891
        %5099 = vmatpush.bf16.msra.mxu0 %v4887
        %5100 = vmatpush.bf16.msra.mxu0 %v4883
        %5101 = vmatpush.bf16.msra.mxu0 %v4879
        %5102 = vmatpush.bf16.msra.mxu0 %v4875
        %5103 = vmatmul.bf16.gmra.mxu0 %v4296
        %v5104 = vpop.f32.mrf.mxu0
        %v5105 = vadd.f32 %v5091, %v5104
        %v5106 = vpop.f32.mrf.mxu0
        %v5107 = vadd.f32 %v5093, %v5106
        %5108 = vdwg.mxu0
        %5109 = vmatpush.bf16.msra.mxu0 %v4935
        %5110 = vmatpush.bf16.msra.mxu0 %v4931
        %5111 = vmatpush.bf16.msra.mxu0 %v4927
        %5112 = vmatpush.bf16.msra.mxu0 %v4923
        %5113 = vmatpush.bf16.msra.mxu0 %v4919
        %5114 = vmatpush.bf16.msra.mxu0 %v4915
        %5115 = vmatpush.bf16.msra.mxu0 %v4911
        %5116 = vmatpush.bf16.msra.mxu0 %v4907
        %5117 = vmatmul.bf16.gmra.mxu0 %v4297
        %v5118 = vpop.f32.mrf.mxu0
        %v5119 = vadd.f32 %v5105, %v5118
        %v5120 = vpop.f32.mrf.mxu0
        %v5121 = vadd.f32 %v5107, %v5120
        %5122 = vdwg.mxu0
        %5123 = vmatpush.bf16.msra.mxu0 %v4840
        %5124 = vmatpush.bf16.msra.mxu0 %v4836
        %5125 = vmatpush.bf16.msra.mxu0 %v4832
        %5126 = vmatpush.bf16.msra.mxu0 %v4828
        %5127 = vmatpush.bf16.msra.mxu0 %v4824
        %5128 = vmatpush.bf16.msra.mxu0 %v4820
        %5129 = vmatpush.bf16.msra.mxu0 %v4816
        %5130 = vmatpush.bf16.msra.mxu0 %v4812
        %5131 = vmatmul.bf16.gmra.mxu0 %v4294
        %v5132 = vpop.f32.mrf.mxu0
        %v5133 = vadd.f32 0.0, %v5132
        %v5134 = vpop.f32.mrf.mxu0
        %v5135 = vadd.f32 0.0, %v5134
        %5136 = vdwg.mxu0
        %5137 = vmatpush.bf16.msra.mxu0 %v4872
        %5138 = vmatpush.bf16.msra.mxu0 %v4868
        %5139 = vmatpush.bf16.msra.mxu0 %v4864
        %5140 = vmatpush.bf16.msra.mxu0 %v4860
        %5141 = vmatpush.bf16.msra.mxu0 %v4856
        %5142 = vmatpush.bf16.msra.mxu0 %v4852
        %5143 = vmatpush.bf16.msra.mxu0 %v4848
        %5144 = vmatpush.bf16.msra.mxu0 %v4844
        %5145 = vmatmul.bf16.gmra.mxu0 %v4295
        %v5146 = vpop.f32.mrf.mxu0
        %v5147 = vadd.f32 %v5133, %v5146
        %v5148 = vpop.f32.mrf.mxu0
        %v5149 = vadd.f32 %v5135, %v5148
        %5150 = vdwg.mxu0
        %5151 = vmatpush.bf16.msra.mxu0 %v4904
        %5152 = vmatpush.bf16.msra.mxu0 %v4900
        %5153 = vmatpush.bf16.msra.mxu0 %v4896
        %5154 = vmatpush.bf16.msra.mxu0 %v4892
        %5155 = vmatpush.bf16.msra.mxu0 %v4888
        %5156 = vmatpush.bf16.msra.mxu0 %v4884
        %5157 = vmatpush.bf16.msra.mxu0 %v4880
        %5158 = vmatpush.bf16.msra.mxu0 %v4876
        %5159 = vmatmul.bf16.gmra.mxu0 %v4296
        %v5160 = vpop.f32.mrf.mxu0
        %v5161 = vadd.f32 %v5147, %v5160
        %v5162 = vpop.f32.mrf.mxu0
        %v5163 = vadd.f32 %v5149, %v5162
        %5164 = vdwg.mxu0
        %5165 = vmatpush.bf16.msra.mxu0 %v4936
        %5166 = vmatpush.bf16.msra.mxu0 %v4932
        %5167 = vmatpush.bf16.msra.mxu0 %v4928
        %5168 = vmatpush.bf16.msra.mxu0 %v4924
        %5169 = vmatpush.bf16.msra.mxu0 %v4920
        %5170 = vmatpush.bf16.msra.mxu0 %v4916
        %5171 = vmatpush.bf16.msra.mxu0 %v4912
        %5172 = vmatpush.bf16.msra.mxu0 %v4908
        %5173 = vmatmul.bf16.gmra.mxu0 %v4297
        %v5174 = vpop.f32.mrf.mxu0
        %v5175 = vadd.f32 %v5161, %v5174
        %v5176 = vpop.f32.mrf.mxu0
        %v5177 = vadd.f32 %v5163, %v5176
        %5178 = vdwg.mxu0
        %5179 = vmatpush.bf16.msra.mxu0 %v4841
        %5180 = vmatpush.bf16.msra.mxu0 %v4837
        %5181 = vmatpush.bf16.msra.mxu0 %v4833
        %5182 = vmatpush.bf16.msra.mxu0 %v4829
        %5183 = vmatpush.bf16.msra.mxu0 %v4825
        %5184 = vmatpush.bf16.msra.mxu0 %v4821
        %5185 = vmatpush.bf16.msra.mxu0 %v4817
        %5186 = vmatpush.bf16.msra.mxu0 %v4813
        %5187 = vmatmul.bf16.gmra.mxu0 %v4294
        %v5188 = vpop.f32.mrf.mxu0
        %v5189 = vadd.f32 0.0, %v5188
        %v5190 = vpop.f32.mrf.mxu0
        %v5191 = vadd.f32 0.0, %v5190
        %5192 = vdwg.mxu0
        %5193 = vmatpush.bf16.msra.mxu0 %v4873
        %5194 = vmatpush.bf16.msra.mxu0 %v4869
        %5195 = vmatpush.bf16.msra.mxu0 %v4865
        %5196 = vmatpush.bf16.msra.mxu0 %v4861
        %5197 = vmatpush.bf16.msra.mxu0 %v4857
        %5198 = vmatpush.bf16.msra.mxu0 %v4853
        %5199 = vmatpush.bf16.msra.mxu0 %v4849
        %5200 = vmatpush.bf16.msra.mxu0 %v4845
        %5201 = vmatmul.bf16.gmra.mxu0 %v4295
        %v5202 = vpop.f32.mrf.mxu0
        %v5203 = vadd.f32 %v5189, %v5202
        %v5204 = vpop.f32.mrf.mxu0
        %v5205 = vadd.f32 %v5191, %v5204
        %5206 = vdwg.mxu0
        %5207 = vmatpush.bf16.msra.mxu0 %v4905
        %5208 = vmatpush.bf16.msra.mxu0 %v4901
        %5209 = vmatpush.bf16.msra.mxu0 %v4897
        %5210 = vmatpush.bf16.msra.mxu0 %v4893
        %5211 = vmatpush.bf16.msra.mxu0 %v4889
        %5212 = vmatpush.bf16.msra.mxu0 %v4885
        %5213 = vmatpush.bf16.msra.mxu0 %v4881
        %5214 = vmatpush.bf16.msra.mxu0 %v4877
        %5215 = vmatmul.bf16.gmra.mxu0 %v4296
        %v5216 = vpop.f32.mrf.mxu0
        %v5217 = vadd.f32 %v5203, %v5216
        %v5218 = vpop.f32.mrf.mxu0
        %v5219 = vadd.f32 %v5205, %v5218
        %5220 = vdwg.mxu0
        %5221 = vmatpush.bf16.msra.mxu0 %v4937
        %5222 = vmatpush.bf16.msra.mxu0 %v4933
        %5223 = vmatpush.bf16.msra.mxu0 %v4929
        %5224 = vmatpush.bf16.msra.mxu0 %v4925
        %5225 = vmatpush.bf16.msra.mxu0 %v4921
        %5226 = vmatpush.bf16.msra.mxu0 %v4917
        %5227 = vmatpush.bf16.msra.mxu0 %v4913
        %5228 = vmatpush.bf16.msra.mxu0 %v4909
        %5229 = vmatmul.bf16.gmra.mxu0 %v4297
        %v5230 = vpop.f32.mrf.mxu0
        %v5231 = vadd.f32 %v5217, %v5230
        %v5232 = vpop.f32.mrf.mxu0
        %v5233 = vadd.f32 %v5219, %v5232
        %5234 = vdwg.mxu0
        %5235 = vmatpush.bf16.msra.mxu0 %v4842
        %5236 = vmatpush.bf16.msra.mxu0 %v4838
        %5237 = vmatpush.bf16.msra.mxu0 %v4834
        %5238 = vmatpush.bf16.msra.mxu0 %v4830
        %5239 = vmatpush.bf16.msra.mxu0 %v4826
        %5240 = vmatpush.bf16.msra.mxu0 %v4822
        %5241 = vmatpush.bf16.msra.mxu0 %v4818
        %5242 = vmatpush.bf16.msra.mxu0 %v4814
        %5243 = vmatmul.bf16.gmra.mxu0 %v4294
        %v5244 = vpop.f32.mrf.mxu0
        %v5245 = vadd.f32 0.0, %v5244
        %v5246 = vpop.f32.mrf.mxu0
        %v5247 = vadd.f32 0.0, %v5246
        %5248 = vdwg.mxu0
        %5249 = vmatpush.bf16.msra.mxu0 %v4874
        %5250 = vmatpush.bf16.msra.mxu0 %v4870
        %5251 = vmatpush.bf16.msra.mxu0 %v4866
        %5252 = vmatpush.bf16.msra.mxu0 %v4862
        %5253 = vmatpush.bf16.msra.mxu0 %v4858
        %5254 = vmatpush.bf16.msra.mxu0 %v4854
        %5255 = vmatpush.bf16.msra.mxu0 %v4850
        %5256 = vmatpush.bf16.msra.mxu0 %v4846
        %5257 = vmatmul.bf16.gmra.mxu0 %v4295
        %v5258 = vpop.f32.mrf.mxu0
        %v5259 = vadd.f32 %v5245, %v5258
        %v5260 = vpop.f32.mrf.mxu0
        %v5261 = vadd.f32 %v5247, %v5260
        %5262 = vdwg.mxu0
        %5263 = vmatpush.bf16.msra.mxu0 %v4906
        %5264 = vmatpush.bf16.msra.mxu0 %v4902
        %5265 = vmatpush.bf16.msra.mxu0 %v4898
        %5266 = vmatpush.bf16.msra.mxu0 %v4894
        %5267 = vmatpush.bf16.msra.mxu0 %v4890
        %5268 = vmatpush.bf16.msra.mxu0 %v4886
        %5269 = vmatpush.bf16.msra.mxu0 %v4882
        %5270 = vmatpush.bf16.msra.mxu0 %v4878
        %5271 = vmatmul.bf16.gmra.mxu0 %v4296
        %v5272 = vpop.f32.mrf.mxu0
        %v5273 = vadd.f32 %v5259, %v5272
        %v5274 = vpop.f32.mrf.mxu0
        %v5275 = vadd.f32 %v5261, %v5274
        %5276 = vdwg.mxu0
        %5277 = vmatpush.bf16.msra.mxu0 %v4938
        %5278 = vmatpush.bf16.msra.mxu0 %v4934
        %5279 = vmatpush.bf16.msra.mxu0 %v4930
        %5280 = vmatpush.bf16.msra.mxu0 %v4926
        %5281 = vmatpush.bf16.msra.mxu0 %v4922
        %5282 = vmatpush.bf16.msra.mxu0 %v4918
        %5283 = vmatpush.bf16.msra.mxu0 %v4914
        %5284 = vmatpush.bf16.msra.mxu0 %v4910
        %5285 = vmatmul.bf16.gmra.mxu0 %v4297
        %v5286 = vpop.f32.mrf.mxu0
        %v5287 = vadd.f32 %v5273, %v5286
        %v5288 = vpop.f32.mrf.mxu0
        %v5289 = vadd.f32 %v5275, %v5288
        %5290 = vdwg.mxu0
        %v5419 = vunpack.c.l.b16 %v4166
        %v5420 = vunpack.c.h.b16 %v4166
        %v5421 = vunpack.c.l.b16 %v4167
        %v5422 = vunpack.c.h.b16 %v4167
        %v5423 = vunpack.c.l.b16 %v4168
        %v5424 = vunpack.c.h.b16 %v4168
        %v5425 = vunpack.c.l.b16 %v4169
        %v5426 = vunpack.c.h.b16 %v4169
        %v5427 = vunpack.c.l.b16 %v4170
        %v5428 = vunpack.c.h.b16 %v4170
        %v5429 = vunpack.c.l.b16 %v4171
        %v5430 = vunpack.c.h.b16 %v4171
        %v5431 = vunpack.c.l.b16 %v4172
        %v5432 = vunpack.c.h.b16 %v4172
        %v5433 = vunpack.c.l.b16 %v4173
        %v5434 = vunpack.c.h.b16 %v4173
        %v5435 = vunpack.c.l.b16 %v4174
        %v5436 = vunpack.c.h.b16 %v4174
        %v5437 = vunpack.c.l.b16 %v4175
        %v5438 = vunpack.c.h.b16 %v4175
        %v5439 = vunpack.c.l.b16 %v4176
        %v5440 = vunpack.c.h.b16 %v4176
        %v5441 = vunpack.c.l.b16 %v4177
        %v5442 = vunpack.c.h.b16 %v4177
        %v5443 = vunpack.c.l.b16 %v4178
        %v5444 = vunpack.c.h.b16 %v4178
        %v5445 = vunpack.c.l.b16 %v4179
        %v5446 = vunpack.c.h.b16 %v4179
        %v5447 = vunpack.c.l.b16 %v4180
        %v5448 = vunpack.c.h.b16 %v4180
        %v5449 = vunpack.c.l.b16 %v4181
        %v5450 = vunpack.c.h.b16 %v4181
        %v5451 = vunpack.c.l.b16 %v4182
        %v5452 = vunpack.c.h.b16 %v4182
        %v5453 = vunpack.c.l.b16 %v4183
        %v5454 = vunpack.c.h.b16 %v4183
        %v5455 = vunpack.c.l.b16 %v4184
        %v5456 = vunpack.c.h.b16 %v4184
        %v5457 = vunpack.c.l.b16 %v4185
        %v5458 = vunpack.c.h.b16 %v4185
        %v5459 = vunpack.c.l.b16 %v4186
        %v5460 = vunpack.c.h.b16 %v4186
        %v5461 = vunpack.c.l.b16 %v4187
        %v5462 = vunpack.c.h.b16 %v4187
        %v5463 = vunpack.c.l.b16 %v4188
        %v5464 = vunpack.c.h.b16 %v4188
        %v5465 = vunpack.c.l.b16 %v4189
        %v5466 = vunpack.c.h.b16 %v4189
        %v5467 = vunpack.c.l.b16 %v4190
        %v5468 = vunpack.c.h.b16 %v4190
        %v5469 = vunpack.c.l.b16 %v4191
        %v5470 = vunpack.c.h.b16 %v4191
        %v5471 = vunpack.c.l.b16 %v4192
        %v5472 = vunpack.c.h.b16 %v4192
        %v5473 = vunpack.c.l.b16 %v4193
        %v5474 = vunpack.c.h.b16 %v4193
        %v5475 = vunpack.c.l.b16 %v4194
        %v5476 = vunpack.c.h.b16 %v4194
        %v5477 = vunpack.c.l.b16 %v4195
        %v5478 = vunpack.c.h.b16 %v4195
        %v5479 = vunpack.c.l.b16 %v4196
        %v5480 = vunpack.c.h.b16 %v4196
        %v5481 = vunpack.c.l.b16 %v4197
        %v5482 = vunpack.c.h.b16 %v4197
        %v5483 = vunpack.c.l.b16 %v4198
        %v5484 = vunpack.c.h.b16 %v4198
        %v5485 = vunpack.c.l.b16 %v4199
        %v5486 = vunpack.c.h.b16 %v4199
        %v5487 = vunpack.c.l.b16 %v4200
        %v5488 = vunpack.c.h.b16 %v4200
        %v5489 = vunpack.c.l.b16 %v4201
        %v5490 = vunpack.c.h.b16 %v4201
        %v5491 = vunpack.c.l.b16 %v4202
        %v5492 = vunpack.c.h.b16 %v4202
        %v5493 = vunpack.c.l.b16 %v4203
        %v5494 = vunpack.c.h.b16 %v4203
        %v5495 = vunpack.c.l.b16 %v4204
        %v5496 = vunpack.c.h.b16 %v4204
        %v5497 = vunpack.c.l.b16 %v4205
        %v5498 = vunpack.c.h.b16 %v4205
        %v5499 = vunpack.c.l.b16 %v4206
        %v5500 = vunpack.c.h.b16 %v4206
        %v5501 = vunpack.c.l.b16 %v4207
        %v5502 = vunpack.c.h.b16 %v4207
        %v5503 = vunpack.c.l.b16 %v4208
        %v5504 = vunpack.c.h.b16 %v4208
        %v5505 = vunpack.c.l.b16 %v4209
        %v5506 = vunpack.c.h.b16 %v4209
        %v5507 = vunpack.c.l.b16 %v4210
        %v5508 = vunpack.c.h.b16 %v4210
        %v5509 = vunpack.c.l.b16 %v4211
        %v5510 = vunpack.c.h.b16 %v4211
        %v5511 = vunpack.c.l.b16 %v4212
        %v5512 = vunpack.c.h.b16 %v4212
        %v5513 = vunpack.c.l.b16 %v4213
        %v5514 = vunpack.c.h.b16 %v4213
        %v5515 = vunpack.c.l.b16 %v4214
        %v5516 = vunpack.c.h.b16 %v4214
        %v5517 = vunpack.c.l.b16 %v4215
        %v5518 = vunpack.c.h.b16 %v4215
        %v5519 = vunpack.c.l.b16 %v4216
        %v5520 = vunpack.c.h.b16 %v4216
        %v5521 = vunpack.c.l.b16 %v4217
        %v5522 = vunpack.c.h.b16 %v4217
        %v5523 = vunpack.c.l.b16 %v4218
        %v5524 = vunpack.c.h.b16 %v4218
        %v5525 = vunpack.c.l.b16 %v4219
        %v5526 = vunpack.c.h.b16 %v4219
        %v5527 = vunpack.c.l.b16 %v4220
        %v5528 = vunpack.c.h.b16 %v4220
        %v5529 = vunpack.c.l.b16 %v4221
        %v5530 = vunpack.c.h.b16 %v4221
        %v5531 = vunpack.c.l.b16 %v4222
        %v5532 = vunpack.c.h.b16 %v4222
        %v5533 = vunpack.c.l.b16 %v4223
        %v5534 = vunpack.c.h.b16 %v4223
        %v5535 = vunpack.c.l.b16 %v4224
        %v5536 = vunpack.c.h.b16 %v4224
        %v5537 = vunpack.c.l.b16 %v4225
        %v5538 = vunpack.c.h.b16 %v4225
        %v5539 = vunpack.c.l.b16 %v4226
        %v5540 = vunpack.c.h.b16 %v4226
        %v5541 = vunpack.c.l.b16 %v4227
        %v5542 = vunpack.c.h.b16 %v4227
        %v5543 = vunpack.c.l.b16 %v4228
        %v5544 = vunpack.c.h.b16 %v4228
        %v5545 = vunpack.c.l.b16 %v4229
        %v5546 = vunpack.c.h.b16 %v4229
        %v5547 = vunpack.c.l.b16 %v4230
        %v5548 = vunpack.c.h.b16 %v4230
        %v5549 = vunpack.c.l.b16 %v4231
        %v5550 = vunpack.c.h.b16 %v4231
        %v5551 = vunpack.c.l.b16 %v4232
        %v5552 = vunpack.c.h.b16 %v4232
        %v5553 = vunpack.c.l.b16 %v4233
        %v5554 = vunpack.c.h.b16 %v4233
        %v5555 = vunpack.c.l.b16 %v4234
        %v5556 = vunpack.c.h.b16 %v4234
        %v5557 = vunpack.c.l.b16 %v4235
        %v5558 = vunpack.c.h.b16 %v4235
        %v5559 = vunpack.c.l.b16 %v4236
        %v5560 = vunpack.c.h.b16 %v4236
        %v5561 = vunpack.c.l.b16 %v4237
        %v5562 = vunpack.c.h.b16 %v4237
        %v5563 = vunpack.c.l.b16 %v4238
        %v5564 = vunpack.c.h.b16 %v4238
        %v5565 = vunpack.c.l.b16 %v4239
        %v5566 = vunpack.c.h.b16 %v4239
        %v5567 = vunpack.c.l.b16 %v4240
        %v5568 = vunpack.c.h.b16 %v4240
        %v5569 = vunpack.c.l.b16 %v4241
        %v5570 = vunpack.c.h.b16 %v4241
        %v5571 = vunpack.c.l.b16 %v4242
        %v5572 = vunpack.c.h.b16 %v4242
        %v5573 = vunpack.c.l.b16 %v4243
        %v5574 = vunpack.c.h.b16 %v4243
        %v5575 = vunpack.c.l.b16 %v4244
        %v5576 = vunpack.c.h.b16 %v4244
        %v5577 = vunpack.c.l.b16 %v4245
        %v5578 = vunpack.c.h.b16 %v4245
        %v5579 = vunpack.c.l.b16 %v4246
        %v5580 = vunpack.c.h.b16 %v4246
        %v5581 = vunpack.c.l.b16 %v4247
        %v5582 = vunpack.c.h.b16 %v4247
        %v5583 = vunpack.c.l.b16 %v4248
        %v5584 = vunpack.c.h.b16 %v4248
        %v5585 = vunpack.c.l.b16 %v4249
        %v5586 = vunpack.c.h.b16 %v4249
        %v5587 = vunpack.c.l.b16 %v4250
        %v5588 = vunpack.c.h.b16 %v4250
        %v5589 = vunpack.c.l.b16 %v4251
        %v5590 = vunpack.c.h.b16 %v4251
        %v5591 = vunpack.c.l.b16 %v4252
        %v5592 = vunpack.c.h.b16 %v4252
        %v5593 = vunpack.c.l.b16 %v4253
        %v5594 = vunpack.c.h.b16 %v4253
        %v5595 = vunpack.c.l.b16 %v4254
        %v5596 = vunpack.c.h.b16 %v4254
        %v5597 = vunpack.c.l.b16 %v4255
        %v5598 = vunpack.c.h.b16 %v4255
        %v5599 = vunpack.c.l.b16 %v4256
        %v5600 = vunpack.c.h.b16 %v4256
        %v5601 = vunpack.c.l.b16 %v4257
        %v5602 = vunpack.c.h.b16 %v4257
        %v5603 = vunpack.c.l.b16 %v4258
        %v5604 = vunpack.c.h.b16 %v4258
        %v5605 = vunpack.c.l.b16 %v4259
        %v5606 = vunpack.c.h.b16 %v4259
        %v5607 = vunpack.c.l.b16 %v4260
        %v5608 = vunpack.c.h.b16 %v4260
        %v5609 = vunpack.c.l.b16 %v4261
        %v5610 = vunpack.c.h.b16 %v4261
        %v5611 = vunpack.c.l.b16 %v4262
        %v5612 = vunpack.c.h.b16 %v4262
        %v5613 = vunpack.c.l.b16 %v4263
        %v5614 = vunpack.c.h.b16 %v4263
        %v5615 = vunpack.c.l.b16 %v4264
        %v5616 = vunpack.c.h.b16 %v4264
        %v5617 = vunpack.c.l.b16 %v4265
        %v5618 = vunpack.c.h.b16 %v4265
        %v5619 = vunpack.c.l.b16 %v4266
        %v5620 = vunpack.c.h.b16 %v4266
        %v5621 = vunpack.c.l.b16 %v4267
        %v5622 = vunpack.c.h.b16 %v4267
        %v5623 = vunpack.c.l.b16 %v4268
        %v5624 = vunpack.c.h.b16 %v4268
        %v5625 = vunpack.c.l.b16 %v4269
        %v5626 = vunpack.c.h.b16 %v4269
        %v5627 = vunpack.c.l.b16 %v4270
        %v5628 = vunpack.c.h.b16 %v4270
        %v5629 = vunpack.c.l.b16 %v4271
        %v5630 = vunpack.c.h.b16 %v4271
        %v5631 = vunpack.c.l.b16 %v4272
        %v5632 = vunpack.c.h.b16 %v4272
        %v5633 = vunpack.c.l.b16 %v4273
        %v5634 = vunpack.c.h.b16 %v4273
        %v5635 = vunpack.c.l.b16 %v4274
        %v5636 = vunpack.c.h.b16 %v4274
        %v5637 = vunpack.c.l.b16 %v4275
        %v5638 = vunpack.c.h.b16 %v4275
        %v5639 = vunpack.c.l.b16 %v4276
        %v5640 = vunpack.c.h.b16 %v4276
        %v5641 = vunpack.c.l.b16 %v4277
        %v5642 = vunpack.c.h.b16 %v4277
        %v5643 = vunpack.c.l.b16 %v4278
        %v5644 = vunpack.c.h.b16 %v4278
        %v5645 = vunpack.c.l.b16 %v4279
        %v5646 = vunpack.c.h.b16 %v4279
        %v5647 = vunpack.c.l.b16 %v4280
        %v5648 = vunpack.c.h.b16 %v4280
        %v5649 = vunpack.c.l.b16 %v4281
        %v5650 = vunpack.c.h.b16 %v4281
        %v5651 = vunpack.c.l.b16 %v4282
        %v5652 = vunpack.c.h.b16 %v4282
        %v5653 = vunpack.c.l.b16 %v4283
        %v5654 = vunpack.c.h.b16 %v4283
        %v5655 = vunpack.c.l.b16 %v4284
        %v5656 = vunpack.c.h.b16 %v4284
        %v5657 = vunpack.c.l.b16 %v4285
        %v5658 = vunpack.c.h.b16 %v4285
        %v5659 = vunpack.c.l.b16 %v4286
        %v5660 = vunpack.c.h.b16 %v4286
        %v5661 = vunpack.c.l.b16 %v4287
        %v5662 = vunpack.c.h.b16 %v4287
        %v5663 = vunpack.c.l.b16 %v4288
        %v5664 = vunpack.c.h.b16 %v4288
        %v5665 = vunpack.c.l.b16 %v4289
        %v5666 = vunpack.c.h.b16 %v4289
        %v5667 = vunpack.c.l.b16 %v4290
        %v5668 = vunpack.c.h.b16 %v4290
        %v5669 = vunpack.c.l.b16 %v4291
        %v5670 = vunpack.c.h.b16 %v4291
        %v5671 = vunpack.c.l.b16 %v4292
        %v5672 = vunpack.c.h.b16 %v4292
        %v5673 = vunpack.c.l.b16 %v4293
        %v5674 = vunpack.c.h.b16 %v4293
        %v5675 = vpack.c.b16 %v5423, %v5419
        %v5676 = vpack.c.b16 %v5424, %v5420
        %v5677 = vpack.c.b16 %v5425, %v5421
        %v5678 = vpack.c.b16 %v5426, %v5422
        %v5679 = vpack.c.b16 %v5431, %v5427
        %v5680 = vpack.c.b16 %v5432, %v5428
        %v5681 = vpack.c.b16 %v5433, %v5429
        %v5682 = vpack.c.b16 %v5434, %v5430
        %v5683 = vpack.c.b16 %v5439, %v5435
        %v5684 = vpack.c.b16 %v5440, %v5436
        %v5685 = vpack.c.b16 %v5441, %v5437
        %v5686 = vpack.c.b16 %v5442, %v5438
        %v5687 = vpack.c.b16 %v5447, %v5443
        %v5688 = vpack.c.b16 %v5448, %v5444
        %v5689 = vpack.c.b16 %v5449, %v5445
        %v5690 = vpack.c.b16 %v5450, %v5446
        %v5691 = vpack.c.b16 %v5455, %v5451
        %v5692 = vpack.c.b16 %v5456, %v5452
        %v5693 = vpack.c.b16 %v5457, %v5453
        %v5694 = vpack.c.b16 %v5458, %v5454
        %v5695 = vpack.c.b16 %v5463, %v5459
        %v5696 = vpack.c.b16 %v5464, %v5460
        %v5697 = vpack.c.b16 %v5465, %v5461
        %v5698 = vpack.c.b16 %v5466, %v5462
        %v5699 = vpack.c.b16 %v5471, %v5467
        %v5700 = vpack.c.b16 %v5472, %v5468
        %v5701 = vpack.c.b16 %v5473, %v5469
        %v5702 = vpack.c.b16 %v5474, %v5470
        %v5703 = vpack.c.b16 %v5479, %v5475
        %v5704 = vpack.c.b16 %v5480, %v5476
        %v5705 = vpack.c.b16 %v5481, %v5477
        %v5706 = vpack.c.b16 %v5482, %v5478
        %v5707 = vpack.c.b16 %v5487, %v5483
        %v5708 = vpack.c.b16 %v5488, %v5484
        %v5709 = vpack.c.b16 %v5489, %v5485
        %v5710 = vpack.c.b16 %v5490, %v5486
        %v5711 = vpack.c.b16 %v5495, %v5491
        %v5712 = vpack.c.b16 %v5496, %v5492
        %v5713 = vpack.c.b16 %v5497, %v5493
        %v5714 = vpack.c.b16 %v5498, %v5494
        %v5715 = vpack.c.b16 %v5503, %v5499
        %v5716 = vpack.c.b16 %v5504, %v5500
        %v5717 = vpack.c.b16 %v5505, %v5501
        %v5718 = vpack.c.b16 %v5506, %v5502
        %v5719 = vpack.c.b16 %v5511, %v5507
        %v5720 = vpack.c.b16 %v5512, %v5508
        %v5721 = vpack.c.b16 %v5513, %v5509
        %v5722 = vpack.c.b16 %v5514, %v5510
        %v5723 = vpack.c.b16 %v5519, %v5515
        %v5724 = vpack.c.b16 %v5520, %v5516
        %v5725 = vpack.c.b16 %v5521, %v5517
        %v5726 = vpack.c.b16 %v5522, %v5518
        %v5727 = vpack.c.b16 %v5527, %v5523
        %v5728 = vpack.c.b16 %v5528, %v5524
        %v5729 = vpack.c.b16 %v5529, %v5525
        %v5730 = vpack.c.b16 %v5530, %v5526
        %v5731 = vpack.c.b16 %v5535, %v5531
        %v5732 = vpack.c.b16 %v5536, %v5532
        %v5733 = vpack.c.b16 %v5537, %v5533
        %v5734 = vpack.c.b16 %v5538, %v5534
        %v5735 = vpack.c.b16 %v5543, %v5539
        %v5736 = vpack.c.b16 %v5544, %v5540
        %v5737 = vpack.c.b16 %v5545, %v5541
        %v5738 = vpack.c.b16 %v5546, %v5542
        %v5739 = vpack.c.b16 %v5551, %v5547
        %v5740 = vpack.c.b16 %v5552, %v5548
        %v5741 = vpack.c.b16 %v5553, %v5549
        %v5742 = vpack.c.b16 %v5554, %v5550
        %v5743 = vpack.c.b16 %v5559, %v5555
        %v5744 = vpack.c.b16 %v5560, %v5556
        %v5745 = vpack.c.b16 %v5561, %v5557
        %v5746 = vpack.c.b16 %v5562, %v5558
        %v5747 = vpack.c.b16 %v5567, %v5563
        %v5748 = vpack.c.b16 %v5568, %v5564
        %v5749 = vpack.c.b16 %v5569, %v5565
        %v5750 = vpack.c.b16 %v5570, %v5566
        %v5751 = vpack.c.b16 %v5575, %v5571
        %v5752 = vpack.c.b16 %v5576, %v5572
        %v5753 = vpack.c.b16 %v5577, %v5573
        %v5754 = vpack.c.b16 %v5578, %v5574
        %v5755 = vpack.c.b16 %v5583, %v5579
        %v5756 = vpack.c.b16 %v5584, %v5580
        %v5757 = vpack.c.b16 %v5585, %v5581
        %v5758 = vpack.c.b16 %v5586, %v5582
        %v5759 = vpack.c.b16 %v5591, %v5587
        %v5760 = vpack.c.b16 %v5592, %v5588
        %v5761 = vpack.c.b16 %v5593, %v5589
        %v5762 = vpack.c.b16 %v5594, %v5590
        %v5763 = vpack.c.b16 %v5599, %v5595
        %v5764 = vpack.c.b16 %v5600, %v5596
        %v5765 = vpack.c.b16 %v5601, %v5597
        %v5766 = vpack.c.b16 %v5602, %v5598
        %v5767 = vpack.c.b16 %v5607, %v5603
        %v5768 = vpack.c.b16 %v5608, %v5604
        %v5769 = vpack.c.b16 %v5609, %v5605
        %v5770 = vpack.c.b16 %v5610, %v5606
        %v5771 = vpack.c.b16 %v5615, %v5611
        %v5772 = vpack.c.b16 %v5616, %v5612
        %v5773 = vpack.c.b16 %v5617, %v5613
        %v5774 = vpack.c.b16 %v5618, %v5614
        %v5775 = vpack.c.b16 %v5623, %v5619
        %v5776 = vpack.c.b16 %v5624, %v5620
        %v5777 = vpack.c.b16 %v5625, %v5621
        %v5778 = vpack.c.b16 %v5626, %v5622
        %v5779 = vpack.c.b16 %v5631, %v5627
        %v5780 = vpack.c.b16 %v5632, %v5628
        %v5781 = vpack.c.b16 %v5633, %v5629
        %v5782 = vpack.c.b16 %v5634, %v5630
        %v5783 = vpack.c.b16 %v5639, %v5635
        %v5784 = vpack.c.b16 %v5640, %v5636
        %v5785 = vpack.c.b16 %v5641, %v5637
        %v5786 = vpack.c.b16 %v5642, %v5638
        %v5787 = vpack.c.b16 %v5647, %v5643
        %v5788 = vpack.c.b16 %v5648, %v5644
        %v5789 = vpack.c.b16 %v5649, %v5645
        %v5790 = vpack.c.b16 %v5650, %v5646
        %v5791 = vpack.c.b16 %v5655, %v5651
        %v5792 = vpack.c.b16 %v5656, %v5652
        %v5793 = vpack.c.b16 %v5657, %v5653
        %v5794 = vpack.c.b16 %v5658, %v5654
        %v5795 = vpack.c.b16 %v5663, %v5659
        %v5796 = vpack.c.b16 %v5664, %v5660
        %v5797 = vpack.c.b16 %v5665, %v5661
        %v5798 = vpack.c.b16 %v5666, %v5662
        %v5799 = vpack.c.b16 %v5671, %v5667
        %v5800 = vpack.c.b16 %v5672, %v5668
        %v5801 = vpack.c.b16 %v5673, %v5669
        %v5802 = vpack.c.b16 %v5674, %v5670
        %5931 = vmatpush.bf16.msra.mxu0 %v5703
        %5932 = vmatpush.bf16.msra.mxu0 %v5699
        %5933 = vmatpush.bf16.msra.mxu0 %v5695
        %5934 = vmatpush.bf16.msra.mxu0 %v5691
        %5935 = vmatpush.bf16.msra.mxu0 %v5687
        %5936 = vmatpush.bf16.msra.mxu0 %v5683
        %5937 = vmatpush.bf16.msra.mxu0 %v5679
        %5938 = vmatpush.bf16.msra.mxu0 %v5675
        %5939 = vmatmul.bf16.gmra.mxu0 %v4162
        %v5940 = vpop.f32.mrf.mxu0
        %v5941 = vadd.f32 %v5119, %v5940
        %v5942 = vpop.f32.mrf.mxu0
        %v5943 = vadd.f32 %v5121, %v5942
        %5944 = vdwg.mxu0
        %5945 = vmatpush.bf16.msra.mxu0 %v5735
        %5946 = vmatpush.bf16.msra.mxu0 %v5731
        %5947 = vmatpush.bf16.msra.mxu0 %v5727
        %5948 = vmatpush.bf16.msra.mxu0 %v5723
        %5949 = vmatpush.bf16.msra.mxu0 %v5719
        %5950 = vmatpush.bf16.msra.mxu0 %v5715
        %5951 = vmatpush.bf16.msra.mxu0 %v5711
        %5952 = vmatpush.bf16.msra.mxu0 %v5707
        %5953 = vmatmul.bf16.gmra.mxu0 %v4163
        %v5954 = vpop.f32.mrf.mxu0
        %v5955 = vadd.f32 %v5941, %v5954
        %v5956 = vpop.f32.mrf.mxu0
        %v5957 = vadd.f32 %v5943, %v5956
        %5958 = vdwg.mxu0
        %5959 = vmatpush.bf16.msra.mxu0 %v5767
        %5960 = vmatpush.bf16.msra.mxu0 %v5763
        %5961 = vmatpush.bf16.msra.mxu0 %v5759
        %5962 = vmatpush.bf16.msra.mxu0 %v5755
        %5963 = vmatpush.bf16.msra.mxu0 %v5751
        %5964 = vmatpush.bf16.msra.mxu0 %v5747
        %5965 = vmatpush.bf16.msra.mxu0 %v5743
        %5966 = vmatpush.bf16.msra.mxu0 %v5739
        %5967 = vmatmul.bf16.gmra.mxu0 %v4164
        %v5968 = vpop.f32.mrf.mxu0
        %v5969 = vadd.f32 %v5955, %v5968
        %v5970 = vpop.f32.mrf.mxu0
        %v5971 = vadd.f32 %v5957, %v5970
        %5972 = vdwg.mxu0
        %5973 = vmatpush.bf16.msra.mxu0 %v5799
        %5974 = vmatpush.bf16.msra.mxu0 %v5795
        %5975 = vmatpush.bf16.msra.mxu0 %v5791
        %5976 = vmatpush.bf16.msra.mxu0 %v5787
        %5977 = vmatpush.bf16.msra.mxu0 %v5783
        %5978 = vmatpush.bf16.msra.mxu0 %v5779
        %5979 = vmatpush.bf16.msra.mxu0 %v5775
        %5980 = vmatpush.bf16.msra.mxu0 %v5771
        %5981 = vmatmul.bf16.gmra.mxu0 %v4165
        %v5982 = vpop.f32.mrf.mxu0
        %v5983 = vadd.f32 %v5969, %v5982
        %v5984 = vpop.f32.mrf.mxu0
        %v5985 = vadd.f32 %v5971, %v5984
        %5986 = vdwg.mxu0
        %5987 = vmatpush.bf16.msra.mxu0 %v5704
        %5988 = vmatpush.bf16.msra.mxu0 %v5700
        %5989 = vmatpush.bf16.msra.mxu0 %v5696
        %5990 = vmatpush.bf16.msra.mxu0 %v5692
        %5991 = vmatpush.bf16.msra.mxu0 %v5688
        %5992 = vmatpush.bf16.msra.mxu0 %v5684
        %5993 = vmatpush.bf16.msra.mxu0 %v5680
        %5994 = vmatpush.bf16.msra.mxu0 %v5676
        %5995 = vmatmul.bf16.gmra.mxu0 %v4162
        %v5996 = vpop.f32.mrf.mxu0
        %v5997 = vadd.f32 %v5175, %v5996
        %v5998 = vpop.f32.mrf.mxu0
        %v5999 = vadd.f32 %v5177, %v5998
        %6000 = vdwg.mxu0
        %6001 = vmatpush.bf16.msra.mxu0 %v5736
        %6002 = vmatpush.bf16.msra.mxu0 %v5732
        %6003 = vmatpush.bf16.msra.mxu0 %v5728
        %6004 = vmatpush.bf16.msra.mxu0 %v5724
        %6005 = vmatpush.bf16.msra.mxu0 %v5720
        %6006 = vmatpush.bf16.msra.mxu0 %v5716
        %6007 = vmatpush.bf16.msra.mxu0 %v5712
        %6008 = vmatpush.bf16.msra.mxu0 %v5708
        %6009 = vmatmul.bf16.gmra.mxu0 %v4163
        %v6010 = vpop.f32.mrf.mxu0
        %v6011 = vadd.f32 %v5997, %v6010
        %v6012 = vpop.f32.mrf.mxu0
        %v6013 = vadd.f32 %v5999, %v6012
        %6014 = vdwg.mxu0
        %6015 = vmatpush.bf16.msra.mxu0 %v5768
        %6016 = vmatpush.bf16.msra.mxu0 %v5764
        %6017 = vmatpush.bf16.msra.mxu0 %v5760
        %6018 = vmatpush.bf16.msra.mxu0 %v5756
        %6019 = vmatpush.bf16.msra.mxu0 %v5752
        %6020 = vmatpush.bf16.msra.mxu0 %v5748
        %6021 = vmatpush.bf16.msra.mxu0 %v5744
        %6022 = vmatpush.bf16.msra.mxu0 %v5740
        %6023 = vmatmul.bf16.gmra.mxu0 %v4164
        %v6024 = vpop.f32.mrf.mxu0
        %v6025 = vadd.f32 %v6011, %v6024
        %v6026 = vpop.f32.mrf.mxu0
        %v6027 = vadd.f32 %v6013, %v6026
        %6028 = vdwg.mxu0
        %6029 = vmatpush.bf16.msra.mxu0 %v5800
        %6030 = vmatpush.bf16.msra.mxu0 %v5796
        %6031 = vmatpush.bf16.msra.mxu0 %v5792
        %6032 = vmatpush.bf16.msra.mxu0 %v5788
        %6033 = vmatpush.bf16.msra.mxu0 %v5784
        %6034 = vmatpush.bf16.msra.mxu0 %v5780
        %6035 = vmatpush.bf16.msra.mxu0 %v5776
        %6036 = vmatpush.bf16.msra.mxu0 %v5772
        %6037 = vmatmul.bf16.gmra.mxu0 %v4165
        %v6038 = vpop.f32.mrf.mxu0
        %v6039 = vadd.f32 %v6025, %v6038
        %v6040 = vpop.f32.mrf.mxu0
        %v6041 = vadd.f32 %v6027, %v6040
        %6042 = vdwg.mxu0
        %6043 = vmatpush.bf16.msra.mxu0 %v5705
        %6044 = vmatpush.bf16.msra.mxu0 %v5701
        %6045 = vmatpush.bf16.msra.mxu0 %v5697
        %6046 = vmatpush.bf16.msra.mxu0 %v5693
        %6047 = vmatpush.bf16.msra.mxu0 %v5689
        %6048 = vmatpush.bf16.msra.mxu0 %v5685
        %6049 = vmatpush.bf16.msra.mxu0 %v5681
        %6050 = vmatpush.bf16.msra.mxu0 %v5677
        %6051 = vmatmul.bf16.gmra.mxu0 %v4162
        %v6052 = vpop.f32.mrf.mxu0
        %v6053 = vadd.f32 %v5231, %v6052
        %v6054 = vpop.f32.mrf.mxu0
        %v6055 = vadd.f32 %v5233, %v6054
        %6056 = vdwg.mxu0
        %6057 = vmatpush.bf16.msra.mxu0 %v5737
        %6058 = vmatpush.bf16.msra.mxu0 %v5733
        %6059 = vmatpush.bf16.msra.mxu0 %v5729
        %6060 = vmatpush.bf16.msra.mxu0 %v5725
        %6061 = vmatpush.bf16.msra.mxu0 %v5721
        %6062 = vmatpush.bf16.msra.mxu0 %v5717
        %6063 = vmatpush.bf16.msra.mxu0 %v5713
        %6064 = vmatpush.bf16.msra.mxu0 %v5709
        %6065 = vmatmul.bf16.gmra.mxu0 %v4163
        %v6066 = vpop.f32.mrf.mxu0
        %v6067 = vadd.f32 %v6053, %v6066
        %v6068 = vpop.f32.mrf.mxu0
        %v6069 = vadd.f32 %v6055, %v6068
        %6070 = vdwg.mxu0
        %6071 = vmatpush.bf16.msra.mxu0 %v5769
        %6072 = vmatpush.bf16.msra.mxu0 %v5765
        %6073 = vmatpush.bf16.msra.mxu0 %v5761
        %6074 = vmatpush.bf16.msra.mxu0 %v5757
        %6075 = vmatpush.bf16.msra.mxu0 %v5753
        %6076 = vmatpush.bf16.msra.mxu0 %v5749
        %6077 = vmatpush.bf16.msra.mxu0 %v5745
        %6078 = vmatpush.bf16.msra.mxu0 %v5741
        %6079 = vmatmul.bf16.gmra.mxu0 %v4164
        %v6080 = vpop.f32.mrf.mxu0
        %v6081 = vadd.f32 %v6067, %v6080
        %v6082 = vpop.f32.mrf.mxu0
        %v6083 = vadd.f32 %v6069, %v6082
        %6084 = vdwg.mxu0
        %6085 = vmatpush.bf16.msra.mxu0 %v5801
        %6086 = vmatpush.bf16.msra.mxu0 %v5797
        %6087 = vmatpush.bf16.msra.mxu0 %v5793
        %6088 = vmatpush.bf16.msra.mxu0 %v5789
        %6089 = vmatpush.bf16.msra.mxu0 %v5785
        %6090 = vmatpush.bf16.msra.mxu0 %v5781
        %6091 = vmatpush.bf16.msra.mxu0 %v5777
        %6092 = vmatpush.bf16.msra.mxu0 %v5773
        %6093 = vmatmul.bf16.gmra.mxu0 %v4165
        %v6094 = vpop.f32.mrf.mxu0
        %v6095 = vadd.f32 %v6081, %v6094
        %v6096 = vpop.f32.mrf.mxu0
        %v6097 = vadd.f32 %v6083, %v6096
        %6098 = vdwg.mxu0
        %6099 = vmatpush.bf16.msra.mxu0 %v5706
        %6100 = vmatpush.bf16.msra.mxu0 %v5702
        %6101 = vmatpush.bf16.msra.mxu0 %v5698
        %6102 = vmatpush.bf16.msra.mxu0 %v5694
        %6103 = vmatpush.bf16.msra.mxu0 %v5690
        %6104 = vmatpush.bf16.msra.mxu0 %v5686
        %6105 = vmatpush.bf16.msra.mxu0 %v5682
        %6106 = vmatpush.bf16.msra.mxu0 %v5678
        %6107 = vmatmul.bf16.gmra.mxu0 %v4162
        %v6108 = vpop.f32.mrf.mxu0
        %v6109 = vadd.f32 %v5287, %v6108
        %v6110 = vpop.f32.mrf.mxu0
        %v6111 = vadd.f32 %v5289, %v6110
        %6112 = vdwg.mxu0
        %6113 = vmatpush.bf16.msra.mxu0 %v5738
        %6114 = vmatpush.bf16.msra.mxu0 %v5734
        %6115 = vmatpush.bf16.msra.mxu0 %v5730
        %6116 = vmatpush.bf16.msra.mxu0 %v5726
        %6117 = vmatpush.bf16.msra.mxu0 %v5722
        %6118 = vmatpush.bf16.msra.mxu0 %v5718
        %6119 = vmatpush.bf16.msra.mxu0 %v5714
        %6120 = vmatpush.bf16.msra.mxu0 %v5710
        %6121 = vmatmul.bf16.gmra.mxu0 %v4163
        %v6122 = vpop.f32.mrf.mxu0
        %v6123 = vadd.f32 %v6109, %v6122
        %v6124 = vpop.f32.mrf.mxu0
        %v6125 = vadd.f32 %v6111, %v6124
        %6126 = vdwg.mxu0
        %6127 = vmatpush.bf16.msra.mxu0 %v5770
        %6128 = vmatpush.bf16.msra.mxu0 %v5766
        %6129 = vmatpush.bf16.msra.mxu0 %v5762
        %6130 = vmatpush.bf16.msra.mxu0 %v5758
        %6131 = vmatpush.bf16.msra.mxu0 %v5754
        %6132 = vmatpush.bf16.msra.mxu0 %v5750
        %6133 = vmatpush.bf16.msra.mxu0 %v5746
        %6134 = vmatpush.bf16.msra.mxu0 %v5742
        %6135 = vmatmul.bf16.gmra.mxu0 %v4164
        %v6136 = vpop.f32.mrf.mxu0
        %v6137 = vadd.f32 %v6123, %v6136
        %v6138 = vpop.f32.mrf.mxu0
        %v6139 = vadd.f32 %v6125, %v6138
        %6140 = vdwg.mxu0
        %6141 = vmatpush.bf16.msra.mxu0 %v5802
        %6142 = vmatpush.bf16.msra.mxu0 %v5798
        %6143 = vmatpush.bf16.msra.mxu0 %v5794
        %6144 = vmatpush.bf16.msra.mxu0 %v5790
        %6145 = vmatpush.bf16.msra.mxu0 %v5786
        %6146 = vmatpush.bf16.msra.mxu0 %v5782
        %6147 = vmatpush.bf16.msra.mxu0 %v5778
        %6148 = vmatpush.bf16.msra.mxu0 %v5774
        %6149 = vmatmul.bf16.gmra.mxu0 %v4165
        %v6150 = vpop.f32.mrf.mxu0
        %v6151 = vadd.f32 %v6137, %v6150
        %v6152 = vpop.f32.mrf.mxu0
        %v6153 = vadd.f32 %v6139, %v6152
        %6154 = vdwg.mxu0
        %v6155 = vrot.slane %v4130, 1
        %v6156 = vrot.slane %v4131, 1
        %v6157 = vrot.slane %v4132, 1
        %v6158 = vrot.slane %v4133, 1
        %v6159 = vrot.slane %v4134, 1
        %v6160 = vrot.slane %v4135, 1
        %v6161 = vrot.slane %v4136, 1
        %v6162 = vrot.slane %v4137, 1
        %v6163 = vsel %vm834, %v6155, %v6159
        %v6164 = vsel %vm834, %v6156, %v6160
        %v6165 = vsel %vm834, %v6157, %v6161
        %v6166 = vsel %vm834, %v6158, %v6162
        %v6167 = vsel %vm834, %v6159, %v6155
        %v6168 = vsel %vm834, %v6160, %v6156
        %v6169 = vsel %vm834, %v6161, %v6157
        %v6170 = vsel %vm834, %v6162, %v6158
        %v6171 = vsel %vm843, %v6163, 0.0
        %v6172 = vsel %vm843, %v6164, 0.0
        %v6173 = vsel %vm843, %v6165, 0.0
        %v6174 = vsel %vm843, %v6166, 0.0
        %v6175 = vsel %vm844, %v6167, 0.0
        %v6176 = vsel %vm844, %v6168, 0.0
        %v6177 = vsel %vm844, %v6169, 0.0
        %v6178 = vsel %vm844, %v6170, 0.0
        %v6179 = vpack.c.bf16 %v6175, %v6171
        %v6180 = vpack.c.bf16 %v6176, %v6172
        %v6181 = vpack.c.bf16 %v6177, %v6173
        %v6182 = vpack.c.bf16 %v6178, %v6174
        %s6183 = scalar_lea.vmem [#allocation12], 2048
        %v6184 = vld [vmem:[%s6183] sm:$0xff]
        %v6185 = vld [vmem:[%s6183 + $0x8] sm:$0xff]
        %v6186 = vld [vmem:[%s6183 + $0x10] sm:$0xff]
        %v6187 = vld [vmem:[%s6183 + $0x18] sm:$0xff]
        %v6188 = vld [vmem:[%s6183 + $0x20] sm:$0xff]
        %v6189 = vld [vmem:[%s6183 + $0x28] sm:$0xff]
        %v6190 = vld [vmem:[%s6183 + $0x30] sm:$0xff]
        %v6191 = vld [vmem:[%s6183 + $0x38] sm:$0xff]
        %v6192 = vld [vmem:[%s6183 + $0x40] sm:$0xff]
        %v6193 = vld [vmem:[%s6183 + $0x48] sm:$0xff]
        %v6194 = vld [vmem:[%s6183 + $0x50] sm:$0xff]
        %v6195 = vld [vmem:[%s6183 + $0x58] sm:$0xff]
        %v6196 = vld [vmem:[%s6183 + $0x60] sm:$0xff]
        %v6197 = vld [vmem:[%s6183 + $0x68] sm:$0xff]
        %v6198 = vld [vmem:[%s6183 + $0x70] sm:$0xff]
        %v6199 = vld [vmem:[%s6183 + $0x78] sm:$0xff]
        %v6200 = vld [vmem:[%s6183 + $0x80] sm:$0xff]
        %v6201 = vld [vmem:[%s6183 + $0x88] sm:$0xff]
        %v6202 = vld [vmem:[%s6183 + $0x90] sm:$0xff]
        %v6203 = vld [vmem:[%s6183 + $0x98] sm:$0xff]
        %v6204 = vld [vmem:[%s6183 + $0xa0] sm:$0xff]
        %v6205 = vld [vmem:[%s6183 + $0xa8] sm:$0xff]
        %v6206 = vld [vmem:[%s6183 + $0xb0] sm:$0xff]
        %v6207 = vld [vmem:[%s6183 + $0xb8] sm:$0xff]
        %v6208 = vld [vmem:[%s6183 + $0xc0] sm:$0xff]
        %v6209 = vld [vmem:[%s6183 + $0xc8] sm:$0xff]
        %v6210 = vld [vmem:[%s6183 + $0xd0] sm:$0xff]
        %v6211 = vld [vmem:[%s6183 + $0xd8] sm:$0xff]
        %v6212 = vld [vmem:[%s6183 + $0xe0] sm:$0xff]
        %v6213 = vld [vmem:[%s6183 + $0xe8] sm:$0xff]
        %v6214 = vld [vmem:[%s6183 + $0xf0] sm:$0xff]
        %v6215 = vld [vmem:[%s6183 + $0xf8] sm:$0xff]
        %v6216 = vld [vmem:[%s6183 + $0x100] sm:$0xff]
        %v6217 = vld [vmem:[%s6183 + $0x108] sm:$0xff]
        %v6218 = vld [vmem:[%s6183 + $0x110] sm:$0xff]
        %v6219 = vld [vmem:[%s6183 + $0x118] sm:$0xff]
        %v6220 = vld [vmem:[%s6183 + $0x120] sm:$0xff]
        %v6221 = vld [vmem:[%s6183 + $0x128] sm:$0xff]
        %v6222 = vld [vmem:[%s6183 + $0x130] sm:$0xff]
        %v6223 = vld [vmem:[%s6183 + $0x138] sm:$0xff]
        %v6224 = vld [vmem:[%s6183 + $0x140] sm:$0xff]
        %v6225 = vld [vmem:[%s6183 + $0x148] sm:$0xff]
        %v6226 = vld [vmem:[%s6183 + $0x150] sm:$0xff]
        %v6227 = vld [vmem:[%s6183 + $0x158] sm:$0xff]
        %v6228 = vld [vmem:[%s6183 + $0x160] sm:$0xff]
        %v6229 = vld [vmem:[%s6183 + $0x168] sm:$0xff]
        %v6230 = vld [vmem:[%s6183 + $0x170] sm:$0xff]
        %v6231 = vld [vmem:[%s6183 + $0x178] sm:$0xff]
        %v6232 = vld [vmem:[%s6183 + $0x180] sm:$0xff]
        %v6233 = vld [vmem:[%s6183 + $0x188] sm:$0xff]
        %v6234 = vld [vmem:[%s6183 + $0x190] sm:$0xff]
        %v6235 = vld [vmem:[%s6183 + $0x198] sm:$0xff]
        %v6236 = vld [vmem:[%s6183 + $0x1a0] sm:$0xff]
        %v6237 = vld [vmem:[%s6183 + $0x1a8] sm:$0xff]
        %v6238 = vld [vmem:[%s6183 + $0x1b0] sm:$0xff]
        %v6239 = vld [vmem:[%s6183 + $0x1b8] sm:$0xff]
        %v6240 = vld [vmem:[%s6183 + $0x1c0] sm:$0xff]
        %v6241 = vld [vmem:[%s6183 + $0x1c8] sm:$0xff]
        %v6242 = vld [vmem:[%s6183 + $0x1d0] sm:$0xff]
        %v6243 = vld [vmem:[%s6183 + $0x1d8] sm:$0xff]
        %v6244 = vld [vmem:[%s6183 + $0x1e0] sm:$0xff]
        %v6245 = vld [vmem:[%s6183 + $0x1e8] sm:$0xff]
        %v6246 = vld [vmem:[%s6183 + $0x1f0] sm:$0xff]
        %v6247 = vld [vmem:[%s6183 + $0x1f8] sm:$0xff]
        %v6248 = vld [vmem:[%s6183 + $0x200] sm:$0xff]
        %v6249 = vld [vmem:[%s6183 + $0x208] sm:$0xff]
        %v6250 = vld [vmem:[%s6183 + $0x210] sm:$0xff]
        %v6251 = vld [vmem:[%s6183 + $0x218] sm:$0xff]
        %v6252 = vld [vmem:[%s6183 + $0x220] sm:$0xff]
        %v6253 = vld [vmem:[%s6183 + $0x228] sm:$0xff]
        %v6254 = vld [vmem:[%s6183 + $0x230] sm:$0xff]
        %v6255 = vld [vmem:[%s6183 + $0x238] sm:$0xff]
        %v6256 = vld [vmem:[%s6183 + $0x240] sm:$0xff]
        %v6257 = vld [vmem:[%s6183 + $0x248] sm:$0xff]
        %v6258 = vld [vmem:[%s6183 + $0x250] sm:$0xff]
        %v6259 = vld [vmem:[%s6183 + $0x258] sm:$0xff]
        %v6260 = vld [vmem:[%s6183 + $0x260] sm:$0xff]
        %v6261 = vld [vmem:[%s6183 + $0x268] sm:$0xff]
        %v6262 = vld [vmem:[%s6183 + $0x270] sm:$0xff]
        %v6263 = vld [vmem:[%s6183 + $0x278] sm:$0xff]
        %v6264 = vld [vmem:[%s6183 + $0x280] sm:$0xff]
        %v6265 = vld [vmem:[%s6183 + $0x288] sm:$0xff]
        %v6266 = vld [vmem:[%s6183 + $0x290] sm:$0xff]
        %v6267 = vld [vmem:[%s6183 + $0x298] sm:$0xff]
        %v6268 = vld [vmem:[%s6183 + $0x2a0] sm:$0xff]
        %v6269 = vld [vmem:[%s6183 + $0x2a8] sm:$0xff]
        %v6270 = vld [vmem:[%s6183 + $0x2b0] sm:$0xff]
        %v6271 = vld [vmem:[%s6183 + $0x2b8] sm:$0xff]
        %v6272 = vld [vmem:[%s6183 + $0x2c0] sm:$0xff]
        %v6273 = vld [vmem:[%s6183 + $0x2c8] sm:$0xff]
        %v6274 = vld [vmem:[%s6183 + $0x2d0] sm:$0xff]
        %v6275 = vld [vmem:[%s6183 + $0x2d8] sm:$0xff]
        %v6276 = vld [vmem:[%s6183 + $0x2e0] sm:$0xff]
        %v6277 = vld [vmem:[%s6183 + $0x2e8] sm:$0xff]
        %v6278 = vld [vmem:[%s6183 + $0x2f0] sm:$0xff]
        %v6279 = vld [vmem:[%s6183 + $0x2f8] sm:$0xff]
        %v6280 = vld [vmem:[%s6183 + $0x300] sm:$0xff]
        %v6281 = vld [vmem:[%s6183 + $0x308] sm:$0xff]
        %v6282 = vld [vmem:[%s6183 + $0x310] sm:$0xff]
        %v6283 = vld [vmem:[%s6183 + $0x318] sm:$0xff]
        %v6284 = vld [vmem:[%s6183 + $0x320] sm:$0xff]
        %v6285 = vld [vmem:[%s6183 + $0x328] sm:$0xff]
        %v6286 = vld [vmem:[%s6183 + $0x330] sm:$0xff]
        %v6287 = vld [vmem:[%s6183 + $0x338] sm:$0xff]
        %v6288 = vld [vmem:[%s6183 + $0x340] sm:$0xff]
        %v6289 = vld [vmem:[%s6183 + $0x348] sm:$0xff]
        %v6290 = vld [vmem:[%s6183 + $0x350] sm:$0xff]
        %v6291 = vld [vmem:[%s6183 + $0x358] sm:$0xff]
        %v6292 = vld [vmem:[%s6183 + $0x360] sm:$0xff]
        %v6293 = vld [vmem:[%s6183 + $0x368] sm:$0xff]
        %v6294 = vld [vmem:[%s6183 + $0x370] sm:$0xff]
        %v6295 = vld [vmem:[%s6183 + $0x378] sm:$0xff]
        %v6296 = vld [vmem:[%s6183 + $0x380] sm:$0xff]
        %v6297 = vld [vmem:[%s6183 + $0x388] sm:$0xff]
        %v6298 = vld [vmem:[%s6183 + $0x390] sm:$0xff]
        %v6299 = vld [vmem:[%s6183 + $0x398] sm:$0xff]
        %v6300 = vld [vmem:[%s6183 + $0x3a0] sm:$0xff]
        %v6301 = vld [vmem:[%s6183 + $0x3a8] sm:$0xff]
        %v6302 = vld [vmem:[%s6183 + $0x3b0] sm:$0xff]
        %v6303 = vld [vmem:[%s6183 + $0x3b8] sm:$0xff]
        %v6304 = vld [vmem:[%s6183 + $0x3c0] sm:$0xff]
        %v6305 = vld [vmem:[%s6183 + $0x3c8] sm:$0xff]
        %v6306 = vld [vmem:[%s6183 + $0x3d0] sm:$0xff]
        %v6307 = vld [vmem:[%s6183 + $0x3d8] sm:$0xff]
        %v6308 = vld [vmem:[%s6183 + $0x3e0] sm:$0xff]
        %v6309 = vld [vmem:[%s6183 + $0x3e8] sm:$0xff]
        %v6310 = vld [vmem:[%s6183 + $0x3f0] sm:$0xff]
        %v6311 = vld [vmem:[%s6183 + $0x3f8] sm:$0xff]
        %v6440 = vunpack.c.l.b16 %v6184
        %v6441 = vunpack.c.h.b16 %v6184
        %v6442 = vunpack.c.l.b16 %v6185
        %v6443 = vunpack.c.h.b16 %v6185
        %v6444 = vunpack.c.l.b16 %v6186
        %v6445 = vunpack.c.h.b16 %v6186
        %v6446 = vunpack.c.l.b16 %v6187
        %v6447 = vunpack.c.h.b16 %v6187
        %v6448 = vunpack.c.l.b16 %v6188
        %v6449 = vunpack.c.h.b16 %v6188
        %v6450 = vunpack.c.l.b16 %v6189
        %v6451 = vunpack.c.h.b16 %v6189
        %v6452 = vunpack.c.l.b16 %v6190
        %v6453 = vunpack.c.h.b16 %v6190
        %v6454 = vunpack.c.l.b16 %v6191
        %v6455 = vunpack.c.h.b16 %v6191
        %v6456 = vunpack.c.l.b16 %v6192
        %v6457 = vunpack.c.h.b16 %v6192
        %v6458 = vunpack.c.l.b16 %v6193
        %v6459 = vunpack.c.h.b16 %v6193
        %v6460 = vunpack.c.l.b16 %v6194
        %v6461 = vunpack.c.h.b16 %v6194
        %v6462 = vunpack.c.l.b16 %v6195
        %v6463 = vunpack.c.h.b16 %v6195
        %v6464 = vunpack.c.l.b16 %v6196
        %v6465 = vunpack.c.h.b16 %v6196
        %v6466 = vunpack.c.l.b16 %v6197
        %v6467 = vunpack.c.h.b16 %v6197
        %v6468 = vunpack.c.l.b16 %v6198
        %v6469 = vunpack.c.h.b16 %v6198
        %v6470 = vunpack.c.l.b16 %v6199
        %v6471 = vunpack.c.h.b16 %v6199
        %v6472 = vunpack.c.l.b16 %v6200
        %v6473 = vunpack.c.h.b16 %v6200
        %v6474 = vunpack.c.l.b16 %v6201
        %v6475 = vunpack.c.h.b16 %v6201
        %v6476 = vunpack.c.l.b16 %v6202
        %v6477 = vunpack.c.h.b16 %v6202
        %v6478 = vunpack.c.l.b16 %v6203
        %v6479 = vunpack.c.h.b16 %v6203
        %v6480 = vunpack.c.l.b16 %v6204
        %v6481 = vunpack.c.h.b16 %v6204
        %v6482 = vunpack.c.l.b16 %v6205
        %v6483 = vunpack.c.h.b16 %v6205
        %v6484 = vunpack.c.l.b16 %v6206
        %v6485 = vunpack.c.h.b16 %v6206
        %v6486 = vunpack.c.l.b16 %v6207
        %v6487 = vunpack.c.h.b16 %v6207
        %v6488 = vunpack.c.l.b16 %v6208
        %v6489 = vunpack.c.h.b16 %v6208
        %v6490 = vunpack.c.l.b16 %v6209
        %v6491 = vunpack.c.h.b16 %v6209
        %v6492 = vunpack.c.l.b16 %v6210
        %v6493 = vunpack.c.h.b16 %v6210
        %v6494 = vunpack.c.l.b16 %v6211
        %v6495 = vunpack.c.h.b16 %v6211
        %v6496 = vunpack.c.l.b16 %v6212
        %v6497 = vunpack.c.h.b16 %v6212
        %v6498 = vunpack.c.l.b16 %v6213
        %v6499 = vunpack.c.h.b16 %v6213
        %v6500 = vunpack.c.l.b16 %v6214
        %v6501 = vunpack.c.h.b16 %v6214
        %v6502 = vunpack.c.l.b16 %v6215
        %v6503 = vunpack.c.h.b16 %v6215
        %v6504 = vunpack.c.l.b16 %v6216
        %v6505 = vunpack.c.h.b16 %v6216
        %v6506 = vunpack.c.l.b16 %v6217
        %v6507 = vunpack.c.h.b16 %v6217
        %v6508 = vunpack.c.l.b16 %v6218
        %v6509 = vunpack.c.h.b16 %v6218
        %v6510 = vunpack.c.l.b16 %v6219
        %v6511 = vunpack.c.h.b16 %v6219
        %v6512 = vunpack.c.l.b16 %v6220
        %v6513 = vunpack.c.h.b16 %v6220
        %v6514 = vunpack.c.l.b16 %v6221
        %v6515 = vunpack.c.h.b16 %v6221
        %v6516 = vunpack.c.l.b16 %v6222
        %v6517 = vunpack.c.h.b16 %v6222
        %v6518 = vunpack.c.l.b16 %v6223
        %v6519 = vunpack.c.h.b16 %v6223
        %v6520 = vunpack.c.l.b16 %v6224
        %v6521 = vunpack.c.h.b16 %v6224
        %v6522 = vunpack.c.l.b16 %v6225
        %v6523 = vunpack.c.h.b16 %v6225
        %v6524 = vunpack.c.l.b16 %v6226
        %v6525 = vunpack.c.h.b16 %v6226
        %v6526 = vunpack.c.l.b16 %v6227
        %v6527 = vunpack.c.h.b16 %v6227
        %v6528 = vunpack.c.l.b16 %v6228
        %v6529 = vunpack.c.h.b16 %v6228
        %v6530 = vunpack.c.l.b16 %v6229
        %v6531 = vunpack.c.h.b16 %v6229
        %v6532 = vunpack.c.l.b16 %v6230
        %v6533 = vunpack.c.h.b16 %v6230
        %v6534 = vunpack.c.l.b16 %v6231
        %v6535 = vunpack.c.h.b16 %v6231
        %v6536 = vunpack.c.l.b16 %v6232
        %v6537 = vunpack.c.h.b16 %v6232
        %v6538 = vunpack.c.l.b16 %v6233
        %v6539 = vunpack.c.h.b16 %v6233
        %v6540 = vunpack.c.l.b16 %v6234
        %v6541 = vunpack.c.h.b16 %v6234
        %v6542 = vunpack.c.l.b16 %v6235
        %v6543 = vunpack.c.h.b16 %v6235
        %v6544 = vunpack.c.l.b16 %v6236
        %v6545 = vunpack.c.h.b16 %v6236
        %v6546 = vunpack.c.l.b16 %v6237
        %v6547 = vunpack.c.h.b16 %v6237
        %v6548 = vunpack.c.l.b16 %v6238
        %v6549 = vunpack.c.h.b16 %v6238
        %v6550 = vunpack.c.l.b16 %v6239
        %v6551 = vunpack.c.h.b16 %v6239
        %v6552 = vunpack.c.l.b16 %v6240
        %v6553 = vunpack.c.h.b16 %v6240
        %v6554 = vunpack.c.l.b16 %v6241
        %v6555 = vunpack.c.h.b16 %v6241
        %v6556 = vunpack.c.l.b16 %v6242
        %v6557 = vunpack.c.h.b16 %v6242
        %v6558 = vunpack.c.l.b16 %v6243
        %v6559 = vunpack.c.h.b16 %v6243
        %v6560 = vunpack.c.l.b16 %v6244
        %v6561 = vunpack.c.h.b16 %v6244
        %v6562 = vunpack.c.l.b16 %v6245
        %v6563 = vunpack.c.h.b16 %v6245
        %v6564 = vunpack.c.l.b16 %v6246
        %v6565 = vunpack.c.h.b16 %v6246
        %v6566 = vunpack.c.l.b16 %v6247
        %v6567 = vunpack.c.h.b16 %v6247
        %v6568 = vunpack.c.l.b16 %v6248
        %v6569 = vunpack.c.h.b16 %v6248
        %v6570 = vunpack.c.l.b16 %v6249
        %v6571 = vunpack.c.h.b16 %v6249
        %v6572 = vunpack.c.l.b16 %v6250
        %v6573 = vunpack.c.h.b16 %v6250
        %v6574 = vunpack.c.l.b16 %v6251
        %v6575 = vunpack.c.h.b16 %v6251
        %v6576 = vunpack.c.l.b16 %v6252
        %v6577 = vunpack.c.h.b16 %v6252
        %v6578 = vunpack.c.l.b16 %v6253
        %v6579 = vunpack.c.h.b16 %v6253
        %v6580 = vunpack.c.l.b16 %v6254
        %v6581 = vunpack.c.h.b16 %v6254
        %v6582 = vunpack.c.l.b16 %v6255
        %v6583 = vunpack.c.h.b16 %v6255
        %v6584 = vunpack.c.l.b16 %v6256
        %v6585 = vunpack.c.h.b16 %v6256
        %v6586 = vunpack.c.l.b16 %v6257
        %v6587 = vunpack.c.h.b16 %v6257
        %v6588 = vunpack.c.l.b16 %v6258
        %v6589 = vunpack.c.h.b16 %v6258
        %v6590 = vunpack.c.l.b16 %v6259
        %v6591 = vunpack.c.h.b16 %v6259
        %v6592 = vunpack.c.l.b16 %v6260
        %v6593 = vunpack.c.h.b16 %v6260
        %v6594 = vunpack.c.l.b16 %v6261
        %v6595 = vunpack.c.h.b16 %v6261
        %v6596 = vunpack.c.l.b16 %v6262
        %v6597 = vunpack.c.h.b16 %v6262
        %v6598 = vunpack.c.l.b16 %v6263
        %v6599 = vunpack.c.h.b16 %v6263
        %v6600 = vunpack.c.l.b16 %v6264
        %v6601 = vunpack.c.h.b16 %v6264
        %v6602 = vunpack.c.l.b16 %v6265
        %v6603 = vunpack.c.h.b16 %v6265
        %v6604 = vunpack.c.l.b16 %v6266
        %v6605 = vunpack.c.h.b16 %v6266
        %v6606 = vunpack.c.l.b16 %v6267
        %v6607 = vunpack.c.h.b16 %v6267
        %v6608 = vunpack.c.l.b16 %v6268
        %v6609 = vunpack.c.h.b16 %v6268
        %v6610 = vunpack.c.l.b16 %v6269
        %v6611 = vunpack.c.h.b16 %v6269
        %v6612 = vunpack.c.l.b16 %v6270
        %v6613 = vunpack.c.h.b16 %v6270
        %v6614 = vunpack.c.l.b16 %v6271
        %v6615 = vunpack.c.h.b16 %v6271
        %v6616 = vunpack.c.l.b16 %v6272
        %v6617 = vunpack.c.h.b16 %v6272
        %v6618 = vunpack.c.l.b16 %v6273
        %v6619 = vunpack.c.h.b16 %v6273
        %v6620 = vunpack.c.l.b16 %v6274
        %v6621 = vunpack.c.h.b16 %v6274
        %v6622 = vunpack.c.l.b16 %v6275
        %v6623 = vunpack.c.h.b16 %v6275
        %v6624 = vunpack.c.l.b16 %v6276
        %v6625 = vunpack.c.h.b16 %v6276
        %v6626 = vunpack.c.l.b16 %v6277
        %v6627 = vunpack.c.h.b16 %v6277
        %v6628 = vunpack.c.l.b16 %v6278
        %v6629 = vunpack.c.h.b16 %v6278
        %v6630 = vunpack.c.l.b16 %v6279
        %v6631 = vunpack.c.h.b16 %v6279
        %v6632 = vunpack.c.l.b16 %v6280
        %v6633 = vunpack.c.h.b16 %v6280
        %v6634 = vunpack.c.l.b16 %v6281
        %v6635 = vunpack.c.h.b16 %v6281
        %v6636 = vunpack.c.l.b16 %v6282
        %v6637 = vunpack.c.h.b16 %v6282
        %v6638 = vunpack.c.l.b16 %v6283
        %v6639 = vunpack.c.h.b16 %v6283
        %v6640 = vunpack.c.l.b16 %v6284
        %v6641 = vunpack.c.h.b16 %v6284
        %v6642 = vunpack.c.l.b16 %v6285
        %v6643 = vunpack.c.h.b16 %v6285
        %v6644 = vunpack.c.l.b16 %v6286
        %v6645 = vunpack.c.h.b16 %v6286
        %v6646 = vunpack.c.l.b16 %v6287
        %v6647 = vunpack.c.h.b16 %v6287
        %v6648 = vunpack.c.l.b16 %v6288
        %v6649 = vunpack.c.h.b16 %v6288
        %v6650 = vunpack.c.l.b16 %v6289
        %v6651 = vunpack.c.h.b16 %v6289
        %v6652 = vunpack.c.l.b16 %v6290
        %v6653 = vunpack.c.h.b16 %v6290
        %v6654 = vunpack.c.l.b16 %v6291
        %v6655 = vunpack.c.h.b16 %v6291
        %v6656 = vunpack.c.l.b16 %v6292
        %v6657 = vunpack.c.h.b16 %v6292
        %v6658 = vunpack.c.l.b16 %v6293
        %v6659 = vunpack.c.h.b16 %v6293
        %v6660 = vunpack.c.l.b16 %v6294
        %v6661 = vunpack.c.h.b16 %v6294
        %v6662 = vunpack.c.l.b16 %v6295
        %v6663 = vunpack.c.h.b16 %v6295
        %v6664 = vunpack.c.l.b16 %v6296
        %v6665 = vunpack.c.h.b16 %v6296
        %v6666 = vunpack.c.l.b16 %v6297
        %v6667 = vunpack.c.h.b16 %v6297
        %v6668 = vunpack.c.l.b16 %v6298
        %v6669 = vunpack.c.h.b16 %v6298
        %v6670 = vunpack.c.l.b16 %v6299
        %v6671 = vunpack.c.h.b16 %v6299
        %v6672 = vunpack.c.l.b16 %v6300
        %v6673 = vunpack.c.h.b16 %v6300
        %v6674 = vunpack.c.l.b16 %v6301
        %v6675 = vunpack.c.h.b16 %v6301
        %v6676 = vunpack.c.l.b16 %v6302
        %v6677 = vunpack.c.h.b16 %v6302
        %v6678 = vunpack.c.l.b16 %v6303
        %v6679 = vunpack.c.h.b16 %v6303
        %v6680 = vunpack.c.l.b16 %v6304
        %v6681 = vunpack.c.h.b16 %v6304
        %v6682 = vunpack.c.l.b16 %v6305
        %v6683 = vunpack.c.h.b16 %v6305
        %v6684 = vunpack.c.l.b16 %v6306
        %v6685 = vunpack.c.h.b16 %v6306
        %v6686 = vunpack.c.l.b16 %v6307
        %v6687 = vunpack.c.h.b16 %v6307
        %v6688 = vunpack.c.l.b16 %v6308
        %v6689 = vunpack.c.h.b16 %v6308
        %v6690 = vunpack.c.l.b16 %v6309
        %v6691 = vunpack.c.h.b16 %v6309
        %v6692 = vunpack.c.l.b16 %v6310
        %v6693 = vunpack.c.h.b16 %v6310
        %v6694 = vunpack.c.l.b16 %v6311
        %v6695 = vunpack.c.h.b16 %v6311
        %v6696 = vpack.c.b16 %v6444, %v6440
        %v6697 = vpack.c.b16 %v6445, %v6441
        %v6698 = vpack.c.b16 %v6446, %v6442
        %v6699 = vpack.c.b16 %v6447, %v6443
        %v6700 = vpack.c.b16 %v6452, %v6448
        %v6701 = vpack.c.b16 %v6453, %v6449
        %v6702 = vpack.c.b16 %v6454, %v6450
        %v6703 = vpack.c.b16 %v6455, %v6451
        %v6704 = vpack.c.b16 %v6460, %v6456
        %v6705 = vpack.c.b16 %v6461, %v6457
        %v6706 = vpack.c.b16 %v6462, %v6458
        %v6707 = vpack.c.b16 %v6463, %v6459
        %v6708 = vpack.c.b16 %v6468, %v6464
        %v6709 = vpack.c.b16 %v6469, %v6465
        %v6710 = vpack.c.b16 %v6470, %v6466
        %v6711 = vpack.c.b16 %v6471, %v6467
        %v6712 = vpack.c.b16 %v6476, %v6472
        %v6713 = vpack.c.b16 %v6477, %v6473
        %v6714 = vpack.c.b16 %v6478, %v6474
        %v6715 = vpack.c.b16 %v6479, %v6475
        %v6716 = vpack.c.b16 %v6484, %v6480
        %v6717 = vpack.c.b16 %v6485, %v6481
        %v6718 = vpack.c.b16 %v6486, %v6482
        %v6719 = vpack.c.b16 %v6487, %v6483
        %v6720 = vpack.c.b16 %v6492, %v6488
        %v6721 = vpack.c.b16 %v6493, %v6489
        %v6722 = vpack.c.b16 %v6494, %v6490
        %v6723 = vpack.c.b16 %v6495, %v6491
        %v6724 = vpack.c.b16 %v6500, %v6496
        %v6725 = vpack.c.b16 %v6501, %v6497
        %v6726 = vpack.c.b16 %v6502, %v6498
        %v6727 = vpack.c.b16 %v6503, %v6499
        %v6728 = vpack.c.b16 %v6508, %v6504
        %v6729 = vpack.c.b16 %v6509, %v6505
        %v6730 = vpack.c.b16 %v6510, %v6506
        %v6731 = vpack.c.b16 %v6511, %v6507
        %v6732 = vpack.c.b16 %v6516, %v6512
        %v6733 = vpack.c.b16 %v6517, %v6513
        %v6734 = vpack.c.b16 %v6518, %v6514
        %v6735 = vpack.c.b16 %v6519, %v6515
        %v6736 = vpack.c.b16 %v6524, %v6520
        %v6737 = vpack.c.b16 %v6525, %v6521
        %v6738 = vpack.c.b16 %v6526, %v6522
        %v6739 = vpack.c.b16 %v6527, %v6523
        %v6740 = vpack.c.b16 %v6532, %v6528
        %v6741 = vpack.c.b16 %v6533, %v6529
        %v6742 = vpack.c.b16 %v6534, %v6530
        %v6743 = vpack.c.b16 %v6535, %v6531
        %v6744 = vpack.c.b16 %v6540, %v6536
        %v6745 = vpack.c.b16 %v6541, %v6537
        %v6746 = vpack.c.b16 %v6542, %v6538
        %v6747 = vpack.c.b16 %v6543, %v6539
        %v6748 = vpack.c.b16 %v6548, %v6544
        %v6749 = vpack.c.b16 %v6549, %v6545
        %v6750 = vpack.c.b16 %v6550, %v6546
        %v6751 = vpack.c.b16 %v6551, %v6547
        %v6752 = vpack.c.b16 %v6556, %v6552
        %v6753 = vpack.c.b16 %v6557, %v6553
        %v6754 = vpack.c.b16 %v6558, %v6554
        %v6755 = vpack.c.b16 %v6559, %v6555
        %v6756 = vpack.c.b16 %v6564, %v6560
        %v6757 = vpack.c.b16 %v6565, %v6561
        %v6758 = vpack.c.b16 %v6566, %v6562
        %v6759 = vpack.c.b16 %v6567, %v6563
        %v6760 = vpack.c.b16 %v6572, %v6568
        %v6761 = vpack.c.b16 %v6573, %v6569
        %v6762 = vpack.c.b16 %v6574, %v6570
        %v6763 = vpack.c.b16 %v6575, %v6571
        %v6764 = vpack.c.b16 %v6580, %v6576
        %v6765 = vpack.c.b16 %v6581, %v6577
        %v6766 = vpack.c.b16 %v6582, %v6578
        %v6767 = vpack.c.b16 %v6583, %v6579
        %v6768 = vpack.c.b16 %v6588, %v6584
        %v6769 = vpack.c.b16 %v6589, %v6585
        %v6770 = vpack.c.b16 %v6590, %v6586
        %v6771 = vpack.c.b16 %v6591, %v6587
        %v6772 = vpack.c.b16 %v6596, %v6592
        %v6773 = vpack.c.b16 %v6597, %v6593
        %v6774 = vpack.c.b16 %v6598, %v6594
        %v6775 = vpack.c.b16 %v6599, %v6595
        %v6776 = vpack.c.b16 %v6604, %v6600
        %v6777 = vpack.c.b16 %v6605, %v6601
        %v6778 = vpack.c.b16 %v6606, %v6602
        %v6779 = vpack.c.b16 %v6607, %v6603
        %v6780 = vpack.c.b16 %v6612, %v6608
        %v6781 = vpack.c.b16 %v6613, %v6609
        %v6782 = vpack.c.b16 %v6614, %v6610
        %v6783 = vpack.c.b16 %v6615, %v6611
        %v6784 = vpack.c.b16 %v6620, %v6616
        %v6785 = vpack.c.b16 %v6621, %v6617
        %v6786 = vpack.c.b16 %v6622, %v6618
        %v6787 = vpack.c.b16 %v6623, %v6619
        %v6788 = vpack.c.b16 %v6628, %v6624
        %v6789 = vpack.c.b16 %v6629, %v6625
        %v6790 = vpack.c.b16 %v6630, %v6626
        %v6791 = vpack.c.b16 %v6631, %v6627
        %v6792 = vpack.c.b16 %v6636, %v6632
        %v6793 = vpack.c.b16 %v6637, %v6633
        %v6794 = vpack.c.b16 %v6638, %v6634
        %v6795 = vpack.c.b16 %v6639, %v6635
        %v6796 = vpack.c.b16 %v6644, %v6640
        %v6797 = vpack.c.b16 %v6645, %v6641
        %v6798 = vpack.c.b16 %v6646, %v6642
        %v6799 = vpack.c.b16 %v6647, %v6643
        %v6800 = vpack.c.b16 %v6652, %v6648
        %v6801 = vpack.c.b16 %v6653, %v6649
        %v6802 = vpack.c.b16 %v6654, %v6650
        %v6803 = vpack.c.b16 %v6655, %v6651
        %v6804 = vpack.c.b16 %v6660, %v6656
        %v6805 = vpack.c.b16 %v6661, %v6657
        %v6806 = vpack.c.b16 %v6662, %v6658
        %v6807 = vpack.c.b16 %v6663, %v6659
        %v6808 = vpack.c.b16 %v6668, %v6664
        %v6809 = vpack.c.b16 %v6669, %v6665
        %v6810 = vpack.c.b16 %v6670, %v6666
        %v6811 = vpack.c.b16 %v6671, %v6667
        %v6812 = vpack.c.b16 %v6676, %v6672
        %v6813 = vpack.c.b16 %v6677, %v6673
        %v6814 = vpack.c.b16 %v6678, %v6674
        %v6815 = vpack.c.b16 %v6679, %v6675
        %v6816 = vpack.c.b16 %v6684, %v6680
        %v6817 = vpack.c.b16 %v6685, %v6681
        %v6818 = vpack.c.b16 %v6686, %v6682
        %v6819 = vpack.c.b16 %v6687, %v6683
        %v6820 = vpack.c.b16 %v6692, %v6688
        %v6821 = vpack.c.b16 %v6693, %v6689
        %v6822 = vpack.c.b16 %v6694, %v6690
        %v6823 = vpack.c.b16 %v6695, %v6691
        %6952 = vmatpush.bf16.msra.mxu0 %v6724
        %6953 = vmatpush.bf16.msra.mxu0 %v6720
        %6954 = vmatpush.bf16.msra.mxu0 %v6716
        %6955 = vmatpush.bf16.msra.mxu0 %v6712
        %6956 = vmatpush.bf16.msra.mxu0 %v6708
        %6957 = vmatpush.bf16.msra.mxu0 %v6704
        %6958 = vmatpush.bf16.msra.mxu0 %v6700
        %6959 = vmatpush.bf16.msra.mxu0 %v6696
        %6960 = vmatmul.bf16.gmra.mxu0 %v6179
        %v6961 = vpop.f32.mrf.mxu0
        %v6962 = vadd.f32 0.0, %v6961
        %v6963 = vpop.f32.mrf.mxu0
        %v6964 = vadd.f32 0.0, %v6963
        %6965 = vdwg.mxu0
        %6966 = vmatpush.bf16.msra.mxu0 %v6756
        %6967 = vmatpush.bf16.msra.mxu0 %v6752
        %6968 = vmatpush.bf16.msra.mxu0 %v6748
        %6969 = vmatpush.bf16.msra.mxu0 %v6744
        %6970 = vmatpush.bf16.msra.mxu0 %v6740
        %6971 = vmatpush.bf16.msra.mxu0 %v6736
        %6972 = vmatpush.bf16.msra.mxu0 %v6732
        %6973 = vmatpush.bf16.msra.mxu0 %v6728
        %6974 = vmatmul.bf16.gmra.mxu0 %v6180
        %v6975 = vpop.f32.mrf.mxu0
        %v6976 = vadd.f32 %v6962, %v6975
        %v6977 = vpop.f32.mrf.mxu0
        %v6978 = vadd.f32 %v6964, %v6977
        %6979 = vdwg.mxu0
        %6980 = vmatpush.bf16.msra.mxu0 %v6788
        %6981 = vmatpush.bf16.msra.mxu0 %v6784
        %6982 = vmatpush.bf16.msra.mxu0 %v6780
        %6983 = vmatpush.bf16.msra.mxu0 %v6776
        %6984 = vmatpush.bf16.msra.mxu0 %v6772
        %6985 = vmatpush.bf16.msra.mxu0 %v6768
        %6986 = vmatpush.bf16.msra.mxu0 %v6764
        %6987 = vmatpush.bf16.msra.mxu0 %v6760
        %6988 = vmatmul.bf16.gmra.mxu0 %v6181
        %v6989 = vpop.f32.mrf.mxu0
        %v6990 = vadd.f32 %v6976, %v6989
        %v6991 = vpop.f32.mrf.mxu0
        %v6992 = vadd.f32 %v6978, %v6991
        %6993 = vdwg.mxu0
        %6994 = vmatpush.bf16.msra.mxu0 %v6820
        %6995 = vmatpush.bf16.msra.mxu0 %v6816
        %6996 = vmatpush.bf16.msra.mxu0 %v6812
        %6997 = vmatpush.bf16.msra.mxu0 %v6808
        %6998 = vmatpush.bf16.msra.mxu0 %v6804
        %6999 = vmatpush.bf16.msra.mxu0 %v6800
        %7000 = vmatpush.bf16.msra.mxu0 %v6796
        %7001 = vmatpush.bf16.msra.mxu0 %v6792
        %7002 = vmatmul.bf16.gmra.mxu0 %v6182
        %v7003 = vpop.f32.mrf.mxu0
        %v7004 = vadd.f32 %v6990, %v7003
        %v7005 = vpop.f32.mrf.mxu0
        %v7006 = vadd.f32 %v6992, %v7005
        %7007 = vdwg.mxu0
        %7008 = vmatpush.bf16.msra.mxu0 %v6725
        %7009 = vmatpush.bf16.msra.mxu0 %v6721
        %7010 = vmatpush.bf16.msra.mxu0 %v6717
        %7011 = vmatpush.bf16.msra.mxu0 %v6713
        %7012 = vmatpush.bf16.msra.mxu0 %v6709
        %7013 = vmatpush.bf16.msra.mxu0 %v6705
        %7014 = vmatpush.bf16.msra.mxu0 %v6701
        %7015 = vmatpush.bf16.msra.mxu0 %v6697
        %7016 = vmatmul.bf16.gmra.mxu0 %v6179
        %v7017 = vpop.f32.mrf.mxu0
        %v7018 = vadd.f32 0.0, %v7017
        %v7019 = vpop.f32.mrf.mxu0
        %v7020 = vadd.f32 0.0, %v7019
        %7021 = vdwg.mxu0
        %7022 = vmatpush.bf16.msra.mxu0 %v6757
        %7023 = vmatpush.bf16.msra.mxu0 %v6753
        %7024 = vmatpush.bf16.msra.mxu0 %v6749
        %7025 = vmatpush.bf16.msra.mxu0 %v6745
        %7026 = vmatpush.bf16.msra.mxu0 %v6741
        %7027 = vmatpush.bf16.msra.mxu0 %v6737
        %7028 = vmatpush.bf16.msra.mxu0 %v6733
        %7029 = vmatpush.bf16.msra.mxu0 %v6729
        %7030 = vmatmul.bf16.gmra.mxu0 %v6180
        %v7031 = vpop.f32.mrf.mxu0
        %v7032 = vadd.f32 %v7018, %v7031
        %v7033 = vpop.f32.mrf.mxu0
        %v7034 = vadd.f32 %v7020, %v7033
        %7035 = vdwg.mxu0
        %7036 = vmatpush.bf16.msra.mxu0 %v6789
        %7037 = vmatpush.bf16.msra.mxu0 %v6785
        %7038 = vmatpush.bf16.msra.mxu0 %v6781
        %7039 = vmatpush.bf16.msra.mxu0 %v6777
        %7040 = vmatpush.bf16.msra.mxu0 %v6773
        %7041 = vmatpush.bf16.msra.mxu0 %v6769
        %7042 = vmatpush.bf16.msra.mxu0 %v6765
        %7043 = vmatpush.bf16.msra.mxu0 %v6761
        %7044 = vmatmul.bf16.gmra.mxu0 %v6181
        %v7045 = vpop.f32.mrf.mxu0
        %v7046 = vadd.f32 %v7032, %v7045
        %v7047 = vpop.f32.mrf.mxu0
        %v7048 = vadd.f32 %v7034, %v7047
        %7049 = vdwg.mxu0
        %7050 = vmatpush.bf16.msra.mxu0 %v6821
        %7051 = vmatpush.bf16.msra.mxu0 %v6817
        %7052 = vmatpush.bf16.msra.mxu0 %v6813
        %7053 = vmatpush.bf16.msra.mxu0 %v6809
        %7054 = vmatpush.bf16.msra.mxu0 %v6805
        %7055 = vmatpush.bf16.msra.mxu0 %v6801
        %7056 = vmatpush.bf16.msra.mxu0 %v6797
        %7057 = vmatpush.bf16.msra.mxu0 %v6793
        %7058 = vmatmul.bf16.gmra.mxu0 %v6182
        %v7059 = vpop.f32.mrf.mxu0
        %v7060 = vadd.f32 %v7046, %v7059
        %v7061 = vpop.f32.mrf.mxu0
        %v7062 = vadd.f32 %v7048, %v7061
        %7063 = vdwg.mxu0
        %7064 = vmatpush.bf16.msra.mxu0 %v6726
        %7065 = vmatpush.bf16.msra.mxu0 %v6722
        %7066 = vmatpush.bf16.msra.mxu0 %v6718
        %7067 = vmatpush.bf16.msra.mxu0 %v6714
        %7068 = vmatpush.bf16.msra.mxu0 %v6710
        %7069 = vmatpush.bf16.msra.mxu0 %v6706
        %7070 = vmatpush.bf16.msra.mxu0 %v6702
        %7071 = vmatpush.bf16.msra.mxu0 %v6698
        %7072 = vmatmul.bf16.gmra.mxu0 %v6179
        %v7073 = vpop.f32.mrf.mxu0
        %v7074 = vadd.f32 0.0, %v7073
        %v7075 = vpop.f32.mrf.mxu0
        %v7076 = vadd.f32 0.0, %v7075
        %7077 = vdwg.mxu0
        %7078 = vmatpush.bf16.msra.mxu0 %v6758
        %7079 = vmatpush.bf16.msra.mxu0 %v6754
        %7080 = vmatpush.bf16.msra.mxu0 %v6750
        %7081 = vmatpush.bf16.msra.mxu0 %v6746
        %7082 = vmatpush.bf16.msra.mxu0 %v6742
        %7083 = vmatpush.bf16.msra.mxu0 %v6738
        %7084 = vmatpush.bf16.msra.mxu0 %v6734
        %7085 = vmatpush.bf16.msra.mxu0 %v6730
        %7086 = vmatmul.bf16.gmra.mxu0 %v6180
        %v7087 = vpop.f32.mrf.mxu0
        %v7088 = vadd.f32 %v7074, %v7087
        %v7089 = vpop.f32.mrf.mxu0
        %v7090 = vadd.f32 %v7076, %v7089
        %7091 = vdwg.mxu0
        %7092 = vmatpush.bf16.msra.mxu0 %v6790
        %7093 = vmatpush.bf16.msra.mxu0 %v6786
        %7094 = vmatpush.bf16.msra.mxu0 %v6782
        %7095 = vmatpush.bf16.msra.mxu0 %v6778
        %7096 = vmatpush.bf16.msra.mxu0 %v6774
        %7097 = vmatpush.bf16.msra.mxu0 %v6770
        %7098 = vmatpush.bf16.msra.mxu0 %v6766
        %7099 = vmatpush.bf16.msra.mxu0 %v6762
        %7100 = vmatmul.bf16.gmra.mxu0 %v6181
        %v7101 = vpop.f32.mrf.mxu0
        %v7102 = vadd.f32 %v7088, %v7101
        %v7103 = vpop.f32.mrf.mxu0
        %v7104 = vadd.f32 %v7090, %v7103
        %7105 = vdwg.mxu0
        %7106 = vmatpush.bf16.msra.mxu0 %v6822
        %7107 = vmatpush.bf16.msra.mxu0 %v6818
        %7108 = vmatpush.bf16.msra.mxu0 %v6814
        %7109 = vmatpush.bf16.msra.mxu0 %v6810
        %7110 = vmatpush.bf16.msra.mxu0 %v6806
        %7111 = vmatpush.bf16.msra.mxu0 %v6802
        %7112 = vmatpush.bf16.msra.mxu0 %v6798
        %7113 = vmatpush.bf16.msra.mxu0 %v6794
        %7114 = vmatmul.bf16.gmra.mxu0 %v6182
        %v7115 = vpop.f32.mrf.mxu0
        %v7116 = vadd.f32 %v7102, %v7115
        %v7117 = vpop.f32.mrf.mxu0
        %v7118 = vadd.f32 %v7104, %v7117
        %7119 = vdwg.mxu0
        %7120 = vmatpush.bf16.msra.mxu0 %v6727
        %7121 = vmatpush.bf16.msra.mxu0 %v6723
        %7122 = vmatpush.bf16.msra.mxu0 %v6719
        %7123 = vmatpush.bf16.msra.mxu0 %v6715
        %7124 = vmatpush.bf16.msra.mxu0 %v6711
        %7125 = vmatpush.bf16.msra.mxu0 %v6707
        %7126 = vmatpush.bf16.msra.mxu0 %v6703
        %7127 = vmatpush.bf16.msra.mxu0 %v6699
        %7128 = vmatmul.bf16.gmra.mxu0 %v6179
        %v7129 = vpop.f32.mrf.mxu0
        %v7130 = vadd.f32 0.0, %v7129
        %v7131 = vpop.f32.mrf.mxu0
        %v7132 = vadd.f32 0.0, %v7131
        %7133 = vdwg.mxu0
        %7134 = vmatpush.bf16.msra.mxu0 %v6759
        %7135 = vmatpush.bf16.msra.mxu0 %v6755
        %7136 = vmatpush.bf16.msra.mxu0 %v6751
        %7137 = vmatpush.bf16.msra.mxu0 %v6747
        %7138 = vmatpush.bf16.msra.mxu0 %v6743
        %7139 = vmatpush.bf16.msra.mxu0 %v6739
        %7140 = vmatpush.bf16.msra.mxu0 %v6735
        %7141 = vmatpush.bf16.msra.mxu0 %v6731
        %7142 = vmatmul.bf16.gmra.mxu0 %v6180
        %v7143 = vpop.f32.mrf.mxu0
        %v7144 = vadd.f32 %v7130, %v7143
        %v7145 = vpop.f32.mrf.mxu0
        %v7146 = vadd.f32 %v7132, %v7145
        %7147 = vdwg.mxu0
        %7148 = vmatpush.bf16.msra.mxu0 %v6791
        %7149 = vmatpush.bf16.msra.mxu0 %v6787
        %7150 = vmatpush.bf16.msra.mxu0 %v6783
        %7151 = vmatpush.bf16.msra.mxu0 %v6779
        %7152 = vmatpush.bf16.msra.mxu0 %v6775
        %7153 = vmatpush.bf16.msra.mxu0 %v6771
        %7154 = vmatpush.bf16.msra.mxu0 %v6767
        %7155 = vmatpush.bf16.msra.mxu0 %v6763
        %7156 = vmatmul.bf16.gmra.mxu0 %v6181
        %v7157 = vpop.f32.mrf.mxu0
        %v7158 = vadd.f32 %v7144, %v7157
        %v7159 = vpop.f32.mrf.mxu0
        %v7160 = vadd.f32 %v7146, %v7159
        %7161 = vdwg.mxu0
        %7162 = vmatpush.bf16.msra.mxu0 %v6823
        %7163 = vmatpush.bf16.msra.mxu0 %v6819
        %7164 = vmatpush.bf16.msra.mxu0 %v6815
        %7165 = vmatpush.bf16.msra.mxu0 %v6811
        %7166 = vmatpush.bf16.msra.mxu0 %v6807
        %7167 = vmatpush.bf16.msra.mxu0 %v6803
        %7168 = vmatpush.bf16.msra.mxu0 %v6799
        %7169 = vmatpush.bf16.msra.mxu0 %v6795
        %7170 = vmatmul.bf16.gmra.mxu0 %v6182
        %v7171 = vpop.f32.mrf.mxu0
        %v7172 = vadd.f32 %v7158, %v7171
        %v7173 = vpop.f32.mrf.mxu0
        %v7174 = vadd.f32 %v7160, %v7173
        %7175 = vdwg.mxu0
        %v7176 = vadd.f32 %v5983, %v7004
        %v7177 = vadd.f32 %v6039, %v7060
        %v7178 = vadd.f32 %v6095, %v7116
        %v7179 = vadd.f32 %v6151, %v7172
        %v7180 = vadd.f32 %v5985, %v7006
        %v7181 = vadd.f32 %v6041, %v7062
        %v7182 = vadd.f32 %v6097, %v7118
        %v7183 = vadd.f32 %v6153, %v7174
        %v7184 = vld [vmem:[#allocation13] sm:$0xf]
        %v7186 = vperm.slane %v7184, 0
        %v7187 = vperm.slane %v7184, 1
        %v7188 = vperm.slane %v7184, 2
        %v7189 = vperm.slane %v7184, 3
        %v7194 = vmul.f32 %v7176, %v7186
        %v7195 = vmul.f32 %v7177, %v7187
        %v7196 = vmul.f32 %v7178, %v7188
        %v7197 = vmul.f32 %v7179, %v7189
        %v7198 = vmul.f32 %v7180, %v7186
        %v7199 = vmul.f32 %v7181, %v7187
        %v7200 = vmul.f32 %v7182, %v7188
        %v7201 = vmul.f32 %v7183, %v7189
        %v7202 = vld [vmem:[#allocation15] sm:$0xf]
        %v7204 = vperm.slane %v7202, 0
        %v7205 = vperm.slane %v7202, 1
        %v7206 = vperm.slane %v7202, 2
        %v7207 = vperm.slane %v7202, 3
        %v7212 = vadd.f32 %v7194, %v7204
        %v7213 = vadd.f32 %v7195, %v7205
        %v7214 = vadd.f32 %v7196, %v7206
        %v7215 = vadd.f32 %v7197, %v7207
        %v7216 = vadd.f32 %v7198, %v7204
        %v7217 = vadd.f32 %v7199, %v7205
        %v7218 = vadd.f32 %v7200, %v7206
        %v7219 = vadd.f32 %v7201, %v7207
        %v7220 = vadd.f32 %v1040, %v7212
        %v7221 = vadd.f32 %v1041, %v7213
        %v7222 = vadd.f32 %v1042, %v7214
        %v7223 = vadd.f32 %v1043, %v7215
        %v7224 = vadd.f32 %v1044, %v7216
        %v7225 = vadd.f32 %v1045, %v7217
        %v7226 = vadd.f32 %v1046, %v7218
        %v7227 = vadd.f32 %v1047, %v7219
        %7228 = vst [vmem:[%s496] sm:$0xff] %v7220
        %7229 = vst [vmem:[%s496 + $0x8] sm:$0xff] %v7221
        %7230 = vst [vmem:[%s496 + $0x10] sm:$0xff] %v7222
        %7231 = vst [vmem:[%s496 + $0x18] sm:$0xff] %v7223
        %7232 = vst [vmem:[%s496 + $0x20] sm:$0xff] %v7224
        %7233 = vst [vmem:[%s496 + $0x28] sm:$0xff] %v7225
        %7234 = vst [vmem:[%s496 + $0x30] sm:$0xff] %v7226
        %7235 = vst [vmem:[%s496 + $0x38] sm:$0xff] %v7227
        %p7236 = scmp.lt.s32.totalorder %s26, 1
        %s7237 = scalar_select %p7236, %s26, 1
        %s7238 = smul.addr %s7237, 8
        %s7239 = smul.addr %s7238, 8
        %s7240 = scalar_lea.vmem %s10, %s7239
        // Predicated region
        $region97: #{residual_block_forward.1} parent=59 // pred_check
          %p7241 = pneg %p259
        $region98: #{residual_block_forward.1} parent=59 // pred_check_branch
          %7243 = sbr.rel (%p7241) target = $region100
        $region99: #{residual_block_forward.1} parent=59 // pred_region
          _
        $region100: #{residual_block_forward.1} parent=59 // pred_fallthru
          _
      $region60: #{residual_block_forward.1} parent=5 // pred_fallthru
        _
      %p7244 = scmp.le.s32.totalorder 2, %s21
      // Predicated region
      $region101: #{residual_block_forward.1} parent=5 // pred_check
        %p7245 = pneg %p7244
      $region102: #{residual_block_forward.1} parent=5 // pred_check_branch
        %7247 = sbr.rel (%p7245) target = $region104
      $region103: #{residual_block_forward.1} parent=5 // pred_region
        %s7248 = ssub.s32 %s21, 2
        // Predicated region
        $region105: #{residual_block_forward.1} parent=103 // pred_check
          %p7249 = pneg %p265
        $region106: #{residual_block_forward.1} parent=103 // pred_check_branch
          %7251 = sbr.rel (%p7249) target = $region108
        $region107: #{residual_block_forward.1} parent=103 // pred_region
          %p7252 = scmp.lt.s32.totalorder %s27, 1
          %s7253 = scalar_select %p7252, %s27, 1
          %s7254 = smul.addr %s7253, 8
          %s7255 = smul.addr %s7254, 8
          %s7256 = scalar_lea.vmem %s10, %s7255
        $region108: #{residual_block_forward.1} parent=103 // pred_fallthru
          _
      $region104: #{residual_block_forward.1} parent=5 // pred_fallthru
        _
    $region6: #{residual_block_forward.1} parent=1 // loop_footer
      %s25 = sadd.s32 1, %s21
    $region7: #{residual_block_forward.1} parent=1 // loop_footer_branch
      %20 = sbr.rel target = $region3
    $region8: #{residual_block_forward.1} parent=1 // loop_exit
      _
    %7257 = vsyncpa [#allocation3], 1
    %s7258 = scalar_lea.sflag [#allocation3], 1
    %7259 = vsyncpa %s7258, 1
    %7260 = vsyncpa [#allocation5], 1
    %7261 = vsyncpa [#allocation8], 1
    %7262 = vsyncpa [#allocation11], 1
    %7263 = vsyncpa [#allocation14], 1

</llo_original>
